<compile_context>
chip_gen: v7x
topology: tpu7x:2x2x1
jax: 0.10.0
libtpu: 0.0.40
codegen_flags: <defaults>
</compile_context>

<pallas_src>
import math
from functools import partial

import jax
import jax.numpy as jnp
from jax.experimental import pallas as pl
from jax.experimental.pallas import tpu as pltpu


_VMEM_LIMIT_CACHE = None


def _vmem_limit():
    """Generation-aware vmem_limit_bytes (~3/4 of physical VMEM, capped)."""
    global _VMEM_LIMIT_CACHE
    if _VMEM_LIMIT_CACHE is None:
        cap = 64 * 1024 * 1024
        try:
            info = pltpu.get_tpu_info()
            for name in ("vmem_capacity_bytes", "vmem_size_bytes", "vmem_bytes"):
                v = getattr(info, name, None)
                if v:
                    cap = int(v)
                    break
        except Exception:
            pass
        _VMEM_LIMIT_CACHE = max(32 * 1024 * 1024,
                                min(cap * 3 // 4, 100 * 1024 * 1024))
    return _VMEM_LIMIT_CACHE


# ----------------------------- in-kernel helpers ------------------------------


def _sigmoid(x):
    # EUP reciprocal + exp; divide stays off the VALU slots.
    return pl.reciprocal(1.0 + jnp.exp(-x), approx=True)


def _assemble_window(win_ref, centre, right, *, pad):
    """Window scratch layout: [left halo (pad) | centre (tile_t) | right halo (pad)].

    Left halo is carried over from the previous grid step (zeroed at i == 0);
    the caller must invoke _carry_left_halo at the end of each step.
    """
    i = pl.program_id(0)
    n_t = pl.num_programs(0)
    b, tile_t, c = centre.shape
    win_ref[:, pad:pad + tile_t, :] = centre
    if pad > 0:
        @pl.when(i == 0)
        def _():
            win_ref[:, :pad, :] = jnp.zeros((b, pad, c), win_ref.dtype)

        win_ref[:, pad + tile_t:, :] = jnp.where(i == n_t - 1,
                                                 jnp.zeros_like(right), right)


def _carry_left_halo(win_ref, *, pad, tile_t):
    if pad > 0:
        # Last `pad` rows of this centre tile become the next tile's left halo.
        win_ref[:, :pad, :] = win_ref[:, tile_t:tile_t + pad, :]


def _window_matmul_stats(win_ref, w_ref, y_ref, stats_ref, *, ksize, dilation,
                         use_im2col):
    """Complex conv (packed as one real matmul) + BN statistic accumulation.

    win_ref : (B, tile_t + 2*pad, 2*Cin) bf16, channels = [real Cin | imag Cin]
    w_ref   : (K*2*Cin, 2*Cout) bf16, per-tap blocks [[Wr, Wi], [-Wi, Wr]]
    y_ref   : (B, tile_t, 2*Cout) bf16 output, channels = [yr | yi]
    stats   : (8, 2*Cout) f32 accumulator:
              row0 = [sum_r | sum_i], row1 = [sum_rr | sum_ii], row2 = [sum_ri | 0]
    """
    i = pl.program_id(0)
    b, tile_t, cout2 = y_ref.shape
    cout = cout2 // 2
    cin2 = win_ref.shape[-1]

    if use_im2col or ksize == 1:
        taps = [win_ref[:, kk * dilation: kk * dilation + tile_t, :]
                for kk in range(ksize)]
        lhs = taps[0] if ksize == 1 else jnp.concatenate(taps, axis=-1)
        full = jnp.dot(lhs.reshape(b * tile_t, ksize * cin2), w_ref[...],
                       preferred_element_type=jnp.float32)
    else:
        # Large Cin: accumulate K shifted dots, no K-times lhs materialization.
        full = jnp.zeros((b * tile_t, cout2), jnp.float32)
        for kk in range(ksize):
            tap = win_ref[:, kk * dilation: kk * dilation + tile_t, :]
            full = full + jnp.dot(tap.reshape(b * tile_t, cin2),
                                  w_ref[kk * cin2:(kk + 1) * cin2, :],
                                  preferred_element_type=jnp.float32)

    y_ref[...] = full.reshape(b, tile_t, cout2).astype(y_ref.dtype)

    s1 = jnp.sum(full, axis=0, keepdims=True)                 # [sum_r | sum_i]
    s2 = jnp.sum(full * full, axis=0, keepdims=True)          # [sum_rr | sum_ii]
    sri = jnp.sum(full[:, :cout] * full[:, cout:], axis=0, keepdims=True)
    upd = jnp.concatenate(
        [s1, s2, jnp.concatenate([sri, jnp.zeros_like(sri)], axis=-1),
         jnp.zeros((5, cout2), jnp.float32)], axis=0)

    @pl.when(i == 0)
    def _():
        stats_ref[...] = jnp.zeros_like(stats_ref)

    stats_ref[...] = stats_ref[...] + upd


# ----------------------------- Pallas kernels ------------------------------


def _conv_stats_kernel(xc_ref, xn_ref, w_ref, y_ref, stats_ref, win_ref,
                       *, ksize, dilation, pad, use_im2col):
    """in_layer complex conv ('same', stride 1) tile + BN stat accumulation."""
    tile_t = xc_ref.shape[1]
    centre = xc_ref[...].astype(win_ref.dtype)
    right = xn_ref[:, :pad, :].astype(win_ref.dtype) if pad > 0 else None
    _assemble_window(win_ref, centre, right, pad=pad)
    _window_matmul_stats(win_ref, w_ref, y_ref, stats_ref,
                         ksize=ksize, dilation=dilation, use_im2col=use_im2col)
    _carry_left_halo(win_ref, pad=pad, tile_t=tile_t)


def _gate_conv_stats_kernel(yc_ref, yn_ref, coef_ref, w_ref, y_ref, stats_ref,
                            gwin_ref, *, ksize, pad, gate, use_im2col):
    """Fused: in-layer BN apply + tanh*sigmoid gate + (skip|res) complex conv + stats."""
    tile_t = yc_ref.shape[1]
    c = coef_ref[...]
    cbn = c.shape[-1] // 2          # in-layer complex BN channels (= 2*gate)

    def bn_gate(yv):
        yv = yv.astype(jnp.float32)
        yr, yi = yv[..., :cbn], yv[..., cbn:]
        ar = c[0:1, :cbn] * yr + c[1:2, :cbn] * yi + c[2:3, :cbn]
        ai = c[0:1, cbn:] * yr + c[1:2, cbn:] * yi + c[2:3, cbn:]
        gr = jnp.tanh(ar[..., :gate]) * _sigmoid(ar[..., gate:])
        gi = jnp.tanh(ai[..., :gate]) * _sigmoid(ai[..., gate:])
        return jnp.concatenate([gr, gi], axis=-1).astype(gwin_ref.dtype)

    centre = bn_gate(yc_ref[...])
    right = bn_gate(yn_ref[:, :pad, :]) if pad > 0 else None
    _assemble_window(gwin_ref, centre, right, pad=pad)
    _window_matmul_stats(gwin_ref, w_ref, y_ref, stats_ref,
                         ksize=ksize, dilation=1, use_im2col=use_im2col)
    _carry_left_halo(gwin_ref, pad=pad, tile_t=tile_t)


def _bn_skip_res_kernel(y_ref, coef_ref, x_ref, skip_ref, res_ref, *, skip_dim):
    """BN apply for fused skip|res channels, then residual (x + res) * sqrt(0.5)."""
    y = y_ref[...].astype(jnp.float32)
    csr = y.shape[-1] // 2
    c = coef_ref[...]
    yr, yi = y[..., :csr], y[..., csr:]
    ar = c[0:1, :csr] * yr + c[1:2, :csr] * yi + c[2:3, :csr]
    ai = c[0:1, csr:] * yr + c[1:2, csr:] * yi + c[2:3, csr:]

    skip_ref[:, :, :skip_dim] = ar[..., :skip_dim].astype(skip_ref.dtype)
    skip_ref[:, :, skip_dim:] = ai[..., :skip_dim].astype(skip_ref.dtype)

    xf = x_ref[...].astype(jnp.float32)
    cres = xf.shape[-1] // 2
    scale = math.sqrt(0.5)
    res_ref[:, :, :cres] = ((xf[..., :cres] + ar[..., skip_dim:]) * scale
                            ).astype(res_ref.dtype)
    res_ref[:, :, cres:] = ((xf[..., cres:] + ai[..., skip_dim:]) * scale
                            ).astype(res_ref.dtype)


# ------------------------------ call wrappers --------------------------------


def _halo_rows(pad, tile_t):
    """Smallest multiple of 8 >= pad that divides tile_t (right-halo block rows)."""
    if pad == 0:
        return 8
    h = ((pad + 7) // 8) * 8
    while tile_t % h:
        h += 8
    return h


def _conv_stats(x_ri, w, *, ksize, dilation, tile_t):
    """x_ri: (B, T, 2*Cin) -> pre-BN conv output (B, T, 2*Cout) bf16 + stats (8, 2*Cout)."""
    b, t, cin2 = x_ri.shape
    kcin2, cout2 = w.shape
    assert kcin2 == ksize * cin2
    pad = dilation * (ksize - 1) // 2
    assert t % tile_t == 0 and tile_t % 8 == 0
    assert pad <= tile_t, "time tile must cover the conv halo"
    n_t = t // tile_t
    halo = _halo_rows(pad, tile_t)
    r = tile_t // halo
    n_h = t // halo
    use_im2col = ksize * cin2 <= 1024

    kern = partial(_conv_stats_kernel, ksize=ksize, dilation=dilation, pad=pad,
                   use_im2col=use_im2col)
    return pl.pallas_call(
        kern,
        grid=(n_t,),
        in_specs=[
            pl.BlockSpec((b, tile_t, cin2), lambda i: (0, i, 0)),              # centre
            pl.BlockSpec((b, halo, cin2),
                         lambda i: (0, jnp.minimum((i + 1) * r, n_h - 1), 0)),  # right halo
            pl.BlockSpec((kcin2, cout2), lambda i: (0, 0)),                    # packed W
        ],
        out_specs=(
            pl.BlockSpec((b, tile_t, cout2), lambda i: (0, i, 0)),
            pl.BlockSpec((8, cout2), lambda i: (0, 0)),                        # accumulator
        ),
        out_shape=(jax.ShapeDtypeStruct((b, t, cout2), jnp.bfloat16),
                   jax.ShapeDtypeStruct((8, cout2), jnp.float32)),
        scratch_shapes=[pltpu.VMEM((b, tile_t + 2 * pad, cin2), jnp.bfloat16)],
        compiler_params=pltpu.CompilerParams(
            dimension_semantics=("arbitrary",),        # stats + halo carry are sequential
            vmem_limit_bytes=_vmem_limit()),
    )(x_ri, x_ri, w)


def _gate_conv_stats(y_in, coef, w, *, gate, ksize, tile_t):
    """Fused BN+gate (in_layer) + (skip|res) conv + stats.  y_in: (B, T, 4*gate) bf16."""
    b, t, cyin2 = y_in.shape
    kg2, cout2 = w.shape
    cgate2 = 2 * gate
    assert kg2 == ksize * cgate2
    pad = (ksize - 1) // 2
    assert t % tile_t == 0 and tile_t % 8 == 0 and pad <= tile_t
    n_t = t // tile_t
    halo = _halo_rows(pad, tile_t)
    r = tile_t // halo
    n_h = t // halo
    use_im2col = ksize * cgate2 <= 1024

    kern = partial(_gate_conv_stats_kernel, ksize=ksize, pad=pad, gate=gate,
                   use_im2col=use_im2col)
    return pl.pallas_call(
        kern,
        grid=(n_t,),
        in_specs=[
            pl.BlockSpec((b, tile_t, cyin2), lambda i: (0, i, 0)),             # y_in centre
            pl.BlockSpec((b, halo, cyin2),
                         lambda i: (0, jnp.minimum((i + 1) * r, n_h - 1), 0)),  # y_in right halo
            pl.BlockSpec((8, cyin2), lambda i: (0, 0)),                        # in-layer BN coefs
            pl.BlockSpec((kg2, cout2), lambda i: (0, 0)),                      # packed W (skip|res)
        ],
        out_specs=(
            pl.BlockSpec((b, tile_t, cout2), lambda i: (0, i, 0)),
            pl.BlockSpec((8, cout2), lambda i: (0, 0)),
        ),
        out_shape=(jax.ShapeDtypeStruct((b, t, cout2), jnp.bfloat16),
                   jax.ShapeDtypeStruct((8, cout2), jnp.float32)),
        scratch_shapes=[pltpu.VMEM((b, tile_t + 2 * pad, cgate2), jnp.bfloat16)],
        compiler_params=pltpu.CompilerParams(
            dimension_semantics=("arbitrary",),
            vmem_limit_bytes=_vmem_limit()),
    )(y_in, y_in, coef, w)


def _bn_skip_res(y_sr, coef, x_ri, *, skip_dim, tile_t):
    b, t, csr2 = y_sr.shape
    csr = csr2 // 2
    res_dim = csr - skip_dim
    cin2 = x_ri.shape[-1]
    n_t = t // tile_t
    kern = partial(_bn_skip_res_kernel, skip_dim=skip_dim)
    return pl.pallas_call(
        kern,
        grid=(n_t,),
        in_specs=[pl.BlockSpec((b, tile_t, csr2), lambda i: (0, i, 0)),
                  pl.BlockSpec((8, csr2), lambda i: (0, 0)),
                  pl.BlockSpec((b, tile_t, cin2), lambda i: (0, i, 0))],
        out_specs=(pl.BlockSpec((b, tile_t, 2 * skip_dim), lambda i: (0, i, 0)),
                   pl.BlockSpec((b, tile_t, 2 * res_dim), lambda i: (0, i, 0))),
        out_shape=(jax.ShapeDtypeStruct((b, t, 2 * skip_dim), x_ri.dtype),
                   jax.ShapeDtypeStruct((b, t, 2 * res_dim), x_ri.dtype)),
        compiler_params=pltpu.CompilerParams(
            dimension_semantics=("parallel",), vmem_limit_bytes=_vmem_limit()),
    )(y_sr, coef, x_ri)


# ------------------- glue: weight prep & BN finalize (tiny) -------------------


def _pack_complex_w(conv):
    """(K,Cin,Cout) real/imag weights -> (K*2*Cin, 2*Cout) bf16.

    Per-tap block [[Wr, Wi], [-Wi, Wr]] so that lhs [xr|xi] @ W -> [yr|yi].
    The conv bias is dropped: ComplexBatchNorm (batch stats) is exactly
    invariant to a per-channel constant shift of its input.
    """
    wr, wi = conv["wr"], conv["wi"]
    k, cin, cout = wr.shape
    top = jnp.concatenate([wr, wi], axis=2)        # real-input rows
    bot = jnp.concatenate([-wi, wr], axis=2)       # imag-input rows
    w = jnp.concatenate([top, bot], axis=1)        # (K, 2*Cin, 2*Cout)
    return w.reshape(k * 2 * cin, 2 * cout).astype(jnp.bfloat16)


def _fuse_convs(conv_a, conv_b):
    """Fuse two complex convs (same input) along Cout: [a | b]."""
    return dict(wr=jnp.concatenate([conv_a["wr"], conv_b["wr"]], axis=2),
                wi=jnp.concatenate([conv_a["wi"], conv_b["wi"]], axis=2))


def _fuse_bn(bn_a, bn_b):
    return {k: jnp.concatenate([bn_a[k], bn_b[k]], axis=0) for k in bn_a}


def _bn_coefs(stats, count, bn, eps=1e-5):
    """Whitening + affine from (8, 2C) stats, precombined into (8, 2C):
       row0=[Zrr|Zir], row1=[Zri|Zii], row2=[Cr|Ci]."""
    c = stats.shape[-1] // 2
    inv_n = 1.0 / count
    mr = stats[0, :c] * inv_n
    mi = stats[0, c:] * inv_n
    vrr = stats[1, :c] * inv_n - mr * mr + eps
    vii = stats[1, c:] * inv_n - mi * mi + eps
    vri = stats[2, :c] * inv_n - mr * mi
    tau = vrr + vii
    delta = jnp.maximum(vrr * vii - vri * vri, 1e-12)   # guard against cancellation
    s = jnp.sqrt(delta)
    tt = jnp.sqrt(tau + 2.0 * s)
    rst = 1.0 / (s * tt)
    urr = (s + vii) * rst
    uii = (s + vrr) * rst
    uri = -vri * rst
    zrr = bn["wrr"] * urr + bn["wri"] * uri
    zri = bn["wrr"] * uri + bn["wri"] * uii
    zir = bn["wri"] * urr + bn["wii"] * uri
    zii = bn["wri"] * uri + bn["wii"] * uii
    cr = bn["br"] - zrr * mr - zri * mi
    ci = bn["bi"] - zir * mr - zii * mi
    return jnp.concatenate(
        [jnp.concatenate([zrr, zir])[None],
         jnp.concatenate([zri, zii])[None],
         jnp.concatenate([cr, ci])[None],
         jnp.zeros((5, 2 * c), jnp.float32)], axis=0).astype(jnp.float32)


def _auto_time_tile(t, b, *, cin2, cyin2, cgate2, cysr2, ksize, budget):
    """Pick the largest time tile whose rough per-step VMEM footprint fits the budget."""
    row_a = b * (2 * cin2 * 4 + 2 * cyin2 * 2 + cin2 * 2 + (ksize + 1) * cin2 * 2
                 + 2 * cyin2 * 4)
    row_b = b * (2 * cyin2 * 2 + 2 * cysr2 * 2 + cgate2 * 2 + (ksize + 1) * cgate2 * 2
                 + 2 * cysr2 * 4 + 3 * cyin2 * 4)
    row_c = b * (2 * cysr2 * 2 + 2 * cin2 * 4 + 2 * (cysr2 + cin2) * 4 + 3 * cysr2 * 4)
    per_row = 2 * max(row_a, row_b, row_c, 1)      # 2x headroom for regalloc temps
    tile = min(t, 2048, max(8, (budget // per_row) // 8 * 8))
    while t % tile:
        tile -= 8
    return max(tile, 8)


# ------------------------------ ComplexWNCell --------------------------------


def _nct_to_ri(z):
    """(2B, C, T) with real/imag batch halves -> (B, T, 2C) with [real C | imag C]."""
    b = z.shape[0] // 2
    return jnp.concatenate([jnp.transpose(z[:b], (0, 2, 1)),
                            jnp.transpose(z[b:], (0, 2, 1))], axis=-1)


def _ri_to_nct(z, c):
    return jnp.concatenate([jnp.transpose(z[..., :c], (0, 2, 1)),
                            jnp.transpose(z[..., c:], (0, 2, 1))], axis=0)


def complex_wn_cell_ri(x_ri, params, *, dilation=1, time_tile=None):
    """x_ri: (B, T, 2*residual_dim) with channel halves [real | imag]."""
    b, t, cin2 = x_ri.shape
    ksize = params["in_layer"]["conv"]["wr"].shape[0]
    gate = params["skip_layer"]["conv"]["wr"].shape[1]          # gate_dim
    skip_dim = params["skip_layer"]["conv"]["wr"].shape[2]
    res_dim = params["res_layer"]["conv"]["wr"].shape[2]
    assert cin2 == 2 * res_dim
    assert params["in_layer"]["conv"]["wr"].shape[2] == 2 * gate
    assert t % 8 == 0, "sequence length must be a multiple of 8"
    assert ksize % 2 == 1, "'same' residual cell needs an odd kernel size"

    cyin2 = 4 * gate
    cysr2 = 2 * (skip_dim + res_dim)
    budget = _vmem_limit()
    if time_tile is None:
        time_tile = _auto_time_tile(t, b, cin2=cin2, cyin2=cyin2, cgate2=2 * gate,
                                    cysr2=cysr2, ksize=ksize, budget=budget)
    assert t % time_tile == 0 and time_tile % 8 == 0
    count = b * t

    # pass 1: in_layer complex conv + BN statistic accumulation (bf16 y_in)
    w_in = _pack_complex_w(params["in_layer"]["conv"])
    y_in, st_in = _conv_stats(x_ri, w_in, ksize=ksize, dilation=dilation,
                              tile_t=time_tile)
    in_coef = _bn_coefs(st_in, count, params["in_layer"]["bn"])

    # pass 2: BN apply + gate fused with the (skip|res) complex conv + stats
    w_sr = _pack_complex_w(_fuse_convs(params["skip_layer"]["conv"],
                                       params["res_layer"]["conv"]))
    y_sr, st_sr = _gate_conv_stats(y_in, in_coef, w_sr, gate=gate, ksize=ksize,
                                   tile_t=time_tile)
    sr_coef = _bn_coefs(st_sr, count, _fuse_bn(params["skip_layer"]["bn"],
                                               params["res_layer"]["bn"]))

    # pass 3: BN apply for skip|res + residual (x + res) * sqrt(0.5)
    skip, res_out = _bn_skip_res(y_sr, sr_coef, x_ri, skip_dim=skip_dim,
                                 tile_t=time_tile)
    return res_out, skip


def complex_wn_cell(x_nct, params, *, dilation=1, time_tile=None):
    # TODO(synk): when stacking cells keep activations in (B,T,2C) and hoist these transposes.
    cin = x_nct.shape[1]
    skip_dim = params["skip_layer"]["conv"]["wr"].shape[2]
    x_ri = _nct_to_ri(x_nct)
    res_ri, skip_ri = complex_wn_cell_ri(x_ri, params, dilation=dilation,
                                         time_tile=time_tile)
    return _ri_to_nct(res_ri, cin), _ri_to_nct(skip_ri, skip_dim)


# -------------------------------- parameters ---------------------------------


def _init_complex_conv(key, cin, cout, ksize):
    k1, k2 = jax.random.split(key)
    return dict(wr=0.05 * jax.random.normal(k1, (ksize, cin, cout), jnp.float32),
                wi=0.05 * jax.random.normal(k2, (ksize, cin, cout), jnp.float32),
                br=jnp.zeros((cout,), jnp.float32),
                bi=jnp.zeros((cout,), jnp.float32))


def _init_complex_bn(key, c):
    return dict(wrr=jnp.ones((c,), jnp.float32),
                wri=jax.random.uniform(key, (c,), jnp.float32, -0.9, 0.9),
                wii=jnp.ones((c,), jnp.float32),
                br=jnp.zeros((c,), jnp.float32),
                bi=jnp.zeros((c,), jnp.float32))


def init_wn_cell_params(key, residual_dim, gate_dim, skip_dim, kernel_size):
    ks = jax.random.split(key, 6)
    return dict(
        in_layer=dict(conv=_init_complex_conv(ks[0], residual_dim, 2 * gate_dim, kernel_size),
                      bn=_init_complex_bn(ks[1], 2 * gate_dim)),
        res_layer=dict(conv=_init_complex_conv(ks[2], gate_dim, residual_dim, kernel_size),
                       bn=_init_complex_bn(ks[3], residual_dim)),
        skip_layer=dict(conv=_init_complex_conv(ks[4], gate_dim, skip_dim, kernel_size),
                        bn=_init_complex_bn(ks[5], skip_dim)))


# ----------------------- pure-JAX reference (checking) ------------------------


def _ref_cell(x_nct, params, ksize, dilation):
    cin = x_nct.shape[1]
    x_ri = _nct_to_ri(x_nct)
    t = x_ri.shape[1]

    def cconv(z_ri, conv_p, dil):
        w = _pack_complex_w(conv_p)                 # bf16 MXU weights; bias cancels in BN
        pad = dil * (ksize - 1) // 2
        zp = jnp.pad(z_ri, ((0, 0), (pad, pad), (0, 0)))
        taps = [zp[:, k * dil:k * dil + t, :] for k in range(ksize)]
        lhs = jnp.concatenate(taps, axis=-1).astype(jnp.bfloat16)
        y = jnp.einsum("btk,kc->btc", lhs, w, preferred_element_type=jnp.float32)
        return y.astype(jnp.bfloat16).astype(jnp.float32)   # emulate bf16 pre-BN storage

    def cbn(y_ri, bn, eps=1e-5):
        c = y_ri.shape[-1] // 2
        yr, yi = y_ri[..., :c], y_ri[..., c:]
        mr = jnp.mean(yr, axis=(0, 1))
        mi = jnp.mean(yi, axis=(0, 1))
        xr, xi = yr - mr, yi - mi
        vrr = jnp.mean(xr * xr, axis=(0, 1)) + eps
        vri = jnp.mean(xr * xi, axis=(0, 1))
        vii = jnp.mean(xi * xi, axis=(0, 1)) + eps
        tau = vrr + vii
        delta = vrr * vii - vri * vri
        s = jnp.sqrt(delta)
        tt = jnp.sqrt(tau + 2.0 * s)
        rst = 1.0 / (s * tt)
        urr, uii, uri = (s + vii) * rst, (s + vrr) * rst, -vri * rst
        zrr = bn["wrr"] * urr + bn["wri"] * uri
        zri = bn["wrr"] * uri + bn["wri"] * uii
        zir = bn["wri"] * urr + bn["wii"] * uri
        zii = bn["wri"] * uri + bn["wii"] * uii
        outr = zrr * xr + zri * xi + bn["br"]
        outi = zir * xr + zii * xi + bn["bi"]
        return jnp.concatenate([outr, outi], axis=-1)

    acts = cbn(cconv(x_ri, params["in_layer"]["conv"], dilation),
               params["in_layer"]["bn"])
    c = acts.shape[-1] // 2
    g = c // 2
    ar, ai = acts[..., :c], acts[..., c:]
    gated = jnp.concatenate(
        [jnp.tanh(ar[..., :g]) * jax.nn.sigmoid(ar[..., g:]),
         jnp.tanh(ai[..., :g]) * jax.nn.sigmoid(ai[..., g:])], axis=-1)

    skip = cbn(cconv(gated, params["skip_layer"]["conv"], 1), params["skip_layer"]["bn"])
    res = cbn(cconv(gated, params["res_layer"]["conv"], 1), params["res_layer"]["bn"])
    res_out = (x_ri + res) * math.sqrt(0.5)
    skip_dim = params["skip_layer"]["conv"]["wr"].shape[2]
    return _ri_to_nct(res_out, cin), _ri_to_nct(skip, skip_dim)


# ----------------------------------- main -------------------------------------


if __name__ == "__main__":
    key = jax.random.PRNGKey(0)
    kx, kp = jax.random.split(key)

    residual_dim, gate_dim, skip_dim = 8, 8, 16
    kernel_size, dilation = 3, 1
    batch, T = 4, 16          # batch = 2 complex samples (real half + imag half)

    x = jax.random.normal(kx, (batch, residual_dim, T), jnp.float32)   # NCT
    params = init_wn_cell_params(kp, residual_dim, gate_dim, skip_dim, kernel_size)

    fwd = jax.jit(partial(complex_wn_cell, dilation=dilation, time_tile=8))
    res_out, skip_out = fwd(x, params)
    jax.block_until_ready((res_out, skip_out))

    assert res_out.shape == (batch, residual_dim, T)
    assert skip_out.shape == (batch, skip_dim, T)
    assert bool(jnp.all(jnp.isfinite(res_out))) and bool(jnp.all(jnp.isfinite(skip_out)))

    ref_res, ref_skip = _ref_cell(x, params, kernel_size, dilation)
    assert bool(jnp.allclose(res_out, ref_res, atol=3e-2, rtol=3e-2)), \
        float(jnp.max(jnp.abs(res_out - ref_res)))
    assert bool(jnp.allclose(skip_out, ref_skip, atol=3e-2, rtol=3e-2)), \
        float(jnp.max(jnp.abs(skip_out - ref_skip)))

    print("KERNEL_OK")
</pallas_src>

<mosaic_0001>
module attributes {stable_mosaic.version = 11 : i64} {
  func.func @_conv_stats_kernel(%arg0: i32, %arg1: memref<2x8x16xf32, #tpu.memory_space<vmem>>, %arg2: memref<2x8x16xf32, #tpu.memory_space<vmem>>, %arg3: memref<48x32xbf16, #tpu.memory_space<vmem>>, %arg4: memref<2x8x32xbf16, #tpu.memory_space<vmem>>, %arg5: memref<8x32xf32, #tpu.memory_space<vmem>>, %arg6: memref<2x10x16xbf16, #tpu.memory_space<vmem>>) attributes {dimension_semantics = [#tpu.dimension_semantics<arbitrary>], iteration_bounds = array<i64: 2>, scalar_prefetch = 0 : i64, scratch_operands = 1 : i64, tpu.core_type = #tpu.core_type<tc>, window_params = [{transform_indices = @transform_0, window_bounds = array<i64: 2, 8, 16>}, {transform_indices = @transform_1, window_bounds = array<i64: 2, 8, 16>}, {pipeline_mode = #tpu.pipeline_mode<synchronous>, transform_indices = @transform_2, window_bounds = array<i64: 48, 32>}, {transform_indices = @transform_3, window_bounds = array<i64: 2, 8, 32>}, {pipeline_mode = #tpu.pipeline_mode<synchronous>, transform_indices = @transform_4, window_bounds = array<i64: 8, 32>}]} {
    %c0 = arith.constant 0 : index
    %c0_0 = arith.constant 0 : index
    %c0_1 = arith.constant 0 : index
    %0 = vector.load %arg1[%c0, %c0_0, %c0_1] : memref<2x8x16xf32, #tpu.memory_space<vmem>>, vector<2x8x16xf32>
    %1 = arith.truncf %0 : vector<2x8x16xf32> to vector<2x8x16xbf16>
    %c0_2 = arith.constant 0 : index
    %c0_3 = arith.constant 0 : index
    %c0_4 = arith.constant 0 : index
    %2 = vector.load %arg2[%c0_2, %c0_3, %c0_4] : memref<2x8x16xf32, #tpu.memory_space<vmem>>, vector<2x1x16xf32>
    %3 = arith.truncf %2 : vector<2x1x16xf32> to vector<2x1x16xbf16>
    %c0_5 = arith.constant 0 : index
    %c1 = arith.constant 1 : index
    %c0_6 = arith.constant 0 : index
    %4 = vector.load %arg6[%c0_5, %c1, %c0_6] : memref<2x10x16xbf16, #tpu.memory_space<vmem>>, vector<2x8x16xbf16>
    tpu.vector_store %arg6[%c0_5, %c1, %c0_6], %1 {strides = array<i32>} : memref<2x10x16xbf16, #tpu.memory_space<vmem>>, vector<2x8x16xbf16>,
    %c0_i32 = arith.constant 0 : i32
    %5 = arith.cmpi eq, %arg0, %c0_i32 : i32
    %6 = arith.extui %5 : i1 to i32
    %c0_i32_7 = arith.constant 0 : i32
    %7 = arith.cmpi ne, %6, %c0_i32_7 : i32
    scf.if %7 {
      %cst_40 = arith.constant 0.000000e+00 : bf16
      %44 = vector.broadcast %cst_40 : bf16 to vector<2x1x16xbf16>
      %c0_41 = arith.constant 0 : index
      %c0_42 = arith.constant 0 : index
      %c0_43 = arith.constant 0 : index
      %45 = vector.load %arg6[%c0_41, %c0_42, %c0_43] : memref<2x10x16xbf16, #tpu.memory_space<vmem>>, vector<2x1x16xbf16>
      tpu.vector_store %arg6[%c0_41, %c0_42, %c0_43], %44 {strides = array<i32>} : memref<2x10x16xbf16, #tpu.memory_space<vmem>>, vector<2x1x16xbf16>,
    } else {
    }
    %c1_i32 = arith.constant 1 : i32
    %8 = arith.cmpi eq, %arg0, %c1_i32 : i32
    %cst = arith.constant 0.000000e+00 : bf16
    %9 = vector.broadcast %cst : bf16 to vector<2x1x16xbf16>
    %10 = arith.select %8, %9, %3 : vector<2x1x16xbf16>
    %c0_8 = arith.constant 0 : index
    %c9 = arith.constant 9 : index
    %c0_9 = arith.constant 0 : index
    %11 = vector.load %arg6[%c0_8, %c9, %c0_9] : memref<2x10x16xbf16, #tpu.memory_space<vmem>>, vector<2x1x16xbf16>
    tpu.vector_store %arg6[%c0_8, %c9, %c0_9], %10 {strides = array<i32>} : memref<2x10x16xbf16, #tpu.memory_space<vmem>>, vector<2x1x16xbf16>,
    %c0_10 = arith.constant 0 : index
    %c0_11 = arith.constant 0 : index
    %c0_12 = arith.constant 0 : index
    %12 = vector.load %arg6[%c0_10, %c0_11, %c0_12] : memref<2x10x16xbf16, #tpu.memory_space<vmem>>, vector<2x8x16xbf16>
    %c0_13 = arith.constant 0 : index
    %c1_14 = arith.constant 1 : index
    %c0_15 = arith.constant 0 : index
    %13 = vector.load %arg6[%c0_13, %c1_14, %c0_15] : memref<2x10x16xbf16, #tpu.memory_space<vmem>>, vector<2x8x16xbf16>
    %c0_16 = arith.constant 0 : index
    %c2 = arith.constant 2 : index
    %c0_17 = arith.constant 0 : index
    %14 = vector.load %arg6[%c0_16, %c2, %c0_17] : memref<2x10x16xbf16, #tpu.memory_space<vmem>>, vector<2x8x16xbf16>
    %15 = tpu.concatenate %12, %13, %14 in 2 : vector<2x8x16xbf16>, vector<2x8x16xbf16>, vector<2x8x16xbf16> -> vector<2x8x48xbf16>
    %16 = vector.shape_cast %15 : vector<2x8x48xbf16> to vector<16x48xbf16>
    %c0_18 = arith.constant 0 : index
    %c0_19 = arith.constant 0 : index
    %17 = vector.load %arg3[%c0_18, %c0_19] : memref<48x32xbf16, #tpu.memory_space<vmem>>, vector<48x32xbf16>
    %cst_20 = arith.constant dense<0.000000e+00> : vector<16x32xf32>
    %18 = tpu.matmul %16, %17, %cst_20 {dimension_numbers = #tpu.dot_dimension_numbers<[1], [0], [0], [1], [0, 0, 1, 1], [], []>} : vector<16x48xbf16>, vector<48x32xbf16>, vector<16x32xf32> -> vector<16x32xf32>
    %19 = vector.shape_cast %18 : vector<16x32xf32> to vector<2x8x32xf32>
    %20 = arith.truncf %19 : vector<2x8x32xf32> to vector<2x8x32xbf16>
    %c0_21 = arith.constant 0 : index
    %c0_22 = arith.constant 0 : index
    %c0_23 = arith.constant 0 : index
    %21 = vector.load %arg4[%c0_21, %c0_22, %c0_23] : memref<2x8x32xbf16, #tpu.memory_space<vmem>>, vector<2x8x32xbf16>
    tpu.vector_store %arg4[%c0_21, %c0_22, %c0_23], %20 {strides = array<i32>} : memref<2x8x32xbf16, #tpu.memory_space<vmem>>, vector<2x8x32xbf16>,
    %cst_24 = arith.constant dense<0.000000e+00> : vector<32xf32>
    %22 = vector.multi_reduction <add>, %18, %cst_24 [0] : vector<16x32xf32> to vector<32xf32>
    %23 = vector.shape_cast %22 : vector<32xf32> to vector<1x32xf32>
    %24 = arith.mulf %18, %18 : vector<16x32xf32>
    %cst_25 = arith.constant dense<0.000000e+00> : vector<32xf32>
    %25 = vector.multi_reduction <add>, %24, %cst_25 [0] : vector<16x32xf32> to vector<32xf32>
    %26 = vector.shape_cast %25 : vector<32xf32> to vector<1x32xf32>
    %27 = vector.extract_strided_slice %18 {offsets = [0, 0], sizes = [16, 16], strides = [1, 1]} : vector<16x32xf32> to vector<16x16xf32>
    %28 = vector.extract_strided_slice %18 {offsets = [0, 16], sizes = [16, 16], strides = [1, 1]} : vector<16x32xf32> to vector<16x16xf32>
    %29 = arith.mulf %27, %28 : vector<16x16xf32>
    %cst_26 = arith.constant dense<0.000000e+00> : vector<16xf32>
    %30 = vector.multi_reduction <add>, %29, %cst_26 [0] : vector<16x16xf32> to vector<16xf32>
    %31 = vector.shape_cast %30 : vector<16xf32> to vector<1x16xf32>
    %cst_27 = arith.constant 0.000000e+00 : f32
    %32 = vector.broadcast %cst_27 : f32 to vector<1x16xf32>
    %33 = tpu.concatenate %31, %32 in 1 : vector<1x16xf32>, vector<1x16xf32> -> vector<1x32xf32>
    %cst_28 = arith.constant 0.000000e+00 : f32
    %34 = vector.broadcast %cst_28 : f32 to vector<5x32xf32>
    %35 = tpu.concatenate %23, %26, %33, %34 in 0 : vector<1x32xf32>, vector<1x32xf32>, vector<1x32xf32>, vector<5x32xf32> -> vector<8x32xf32>
    %c0_i32_29 = arith.constant 0 : i32
    %36 = arith.cmpi eq, %arg0, %c0_i32_29 : i32
    %37 = arith.extui %36 : i1 to i32
    %c0_i32_30 = arith.constant 0 : i32
    %38 = arith.cmpi ne, %37, %c0_i32_30 : i32
    scf.if %38 {
      %cst_40 = arith.constant 0.000000e+00 : f32
      %44 = vector.broadcast %cst_40 : f32 to vector<8x32xf32>
      %c0_41 = arith.constant 0 : index
      %c0_42 = arith.constant 0 : index
      %45 = vector.load %arg5[%c0_41, %c0_42] : memref<8x32xf32, #tpu.memory_space<vmem>>, vector<8x32xf32>
      tpu.vector_store %arg5[%c0_41, %c0_42], %44 {strides = array<i32>} : memref<8x32xf32, #tpu.memory_space<vmem>>, vector<8x32xf32>,
    } else {
    }
    %c0_31 = arith.constant 0 : index
    %c0_32 = arith.constant 0 : index
    %39 = vector.load %arg5[%c0_31, %c0_32] : memref<8x32xf32, #tpu.memory_space<vmem>>, vector<8x32xf32>
    %40 = arith.addf %39, %35 : vector<8x32xf32>
    %c0_33 = arith.constant 0 : index
    %c0_34 = arith.constant 0 : index
    %41 = vector.load %arg5[%c0_33, %c0_34] : memref<8x32xf32, #tpu.memory_space<vmem>>, vector<8x32xf32>
    tpu.vector_store %arg5[%c0_33, %c0_34], %40 {strides = array<i32>} : memref<8x32xf32, #tpu.memory_space<vmem>>, vector<8x32xf32>,
    %c0_35 = arith.constant 0 : index
    %c8 = arith.constant 8 : index
    %c0_36 = arith.constant 0 : index
    %42 = vector.load %arg6[%c0_35, %c8, %c0_36] : memref<2x10x16xbf16, #tpu.memory_space<vmem>>, vector<2x1x16xbf16>
    %c0_37 = arith.constant 0 : index
    %c0_38 = arith.constant 0 : index
    %c0_39 = arith.constant 0 : index
    %43 = vector.load %arg6[%c0_37, %c0_38, %c0_39] : memref<2x10x16xbf16, #tpu.memory_space<vmem>>, vector<2x1x16xbf16>
    tpu.vector_store %arg6[%c0_37, %c0_38, %c0_39], %42 {strides = array<i32>} : memref<2x10x16xbf16, #tpu.memory_space<vmem>>, vector<2x1x16xbf16>,
    return
  }
  func.func @transform_0(%arg0: i32) -> (i32, i32, i32) {
    %c0_i32 = arith.constant 0 : i32
    %c0_i32_0 = arith.constant 0 : i32
    %c0_i32_1 = arith.constant 0 : i32
    return %c0_i32, %arg0, %c0_i32_0 : i32, i32, i32
  }
  func.func @transform_1(%arg0: i32) -> (i32, i32, i32) {
    %c1_i32 = arith.constant 1 : i32
    %0 = arith.addi %arg0, %c1_i32 : i32
    %c1_i32_0 = arith.constant 1 : i32
    %1 = arith.muli %0, %c1_i32_0 : i32
    %c1_i32_1 = arith.constant 1 : i32
    %2 = arith.minsi %1, %c1_i32_1 : i32
    %c0_i32 = arith.constant 0 : i32
    %c0_i32_2 = arith.constant 0 : i32
    %c0_i32_3 = arith.constant 0 : i32
    return %c0_i32, %2, %c0_i32_2 : i32, i32, i32
  }
  func.func @transform_2(%arg0: i32) -> (i32, i32) {
    %c0_i32 = arith.constant 0 : i32
    %c0_i32_0 = arith.constant 0 : i32
    %c0_i32_1 = arith.constant 0 : i32
    return %c0_i32, %c0_i32_0 : i32, i32
  }
  func.func @transform_3(%arg0: i32) -> (i32, i32, i32) {
    %c0_i32 = arith.constant 0 : i32
    %c0_i32_0 = arith.constant 0 : i32
    %c0_i32_1 = arith.constant 0 : i32
    return %c0_i32, %arg0, %c0_i32_0 : i32, i32, i32
  }
  func.func @transform_4(%arg0: i32) -> (i32, i32) {
    %c0_i32 = arith.constant 0 : i32
    %c0_i32_0 = arith.constant 0 : i32
    %c0_i32_1 = arith.constant 0 : i32
    return %c0_i32, %c0_i32_0 : i32, i32
  }
}

module attributes {stable_mosaic.version = 11 : i64} {
  func.func @_gate_conv_stats_kernel(%arg0: i32, %arg1: memref<2x8x32xbf16, #tpu.memory_space<vmem>>, %arg2: memref<2x8x32xbf16, #tpu.memory_space<vmem>>, %arg3: memref<8x32xf32, #tpu.memory_space<vmem>>, %arg4: memref<48x48xbf16, #tpu.memory_space<vmem>>, %arg5: memref<2x8x48xbf16, #tpu.memory_space<vmem>>, %arg6: memref<8x48xf32, #tpu.memory_space<vmem>>, %arg7: memref<2x10x16xbf16, #tpu.memory_space<vmem>>) attributes {dimension_semantics = [#tpu.dimension_semantics<arbitrary>], iteration_bounds = array<i64: 2>, scalar_prefetch = 0 : i64, scratch_operands = 1 : i64, tpu.core_type = #tpu.core_type<tc>, window_params = [{transform_indices = @transform_0, window_bounds = array<i64: 2, 8, 32>}, {transform_indices = @transform_1, window_bounds = array<i64: 2, 8, 32>}, {pipeline_mode = #tpu.pipeline_mode<synchronous>, transform_indices = @transform_2, window_bounds = array<i64: 8, 32>}, {pipeline_mode = #tpu.pipeline_mode<synchronous>, transform_indices = @transform_3, window_bounds = array<i64: 48, 48>}, {transform_indices = @transform_4, window_bounds = array<i64: 2, 8, 48>}, {pipeline_mode = #tpu.pipeline_mode<synchronous>, transform_indices = @transform_5, window_bounds = array<i64: 8, 48>}]} {
    %c0 = arith.constant 0 : index
    %c0_0 = arith.constant 0 : index
    %0 = vector.load %arg3[%c0, %c0_0] : memref<8x32xf32, #tpu.memory_space<vmem>>, vector<8x32xf32>
    %c0_1 = arith.constant 0 : index
    %c0_2 = arith.constant 0 : index
    %c0_3 = arith.constant 0 : index
    %1 = vector.load %arg1[%c0_1, %c0_2, %c0_3] : memref<2x8x32xbf16, #tpu.memory_space<vmem>>, vector<2x8x32xbf16>
    %2 = arith.extf %1 : vector<2x8x32xbf16> to vector<2x8x32xf32>
    %3 = vector.extract_strided_slice %2 {offsets = [0, 0, 0], sizes = [2, 8, 16], strides = [1, 1, 1]} : vector<2x8x32xf32> to vector<2x8x16xf32>
    %4 = vector.extract_strided_slice %2 {offsets = [0, 0, 16], sizes = [2, 8, 16], strides = [1, 1, 1]} : vector<2x8x32xf32> to vector<2x8x16xf32>
    %5 = vector.extract_strided_slice %0 {offsets = [0, 0], sizes = [1, 16], strides = [1, 1]} : vector<8x32xf32> to vector<1x16xf32>
    %6 = vector.shape_cast %5 : vector<1x16xf32> to vector<1x1x16xf32>
    %7 = vector.broadcast %6 : vector<1x1x16xf32> to vector<2x8x16xf32>
    %8 = arith.mulf %7, %3 : vector<2x8x16xf32>
    %9 = vector.extract_strided_slice %0 {offsets = [1, 0], sizes = [1, 16], strides = [1, 1]} : vector<8x32xf32> to vector<1x16xf32>
    %10 = vector.shape_cast %9 : vector<1x16xf32> to vector<1x1x16xf32>
    %11 = vector.broadcast %10 : vector<1x1x16xf32> to vector<2x8x16xf32>
    %12 = arith.mulf %11, %4 : vector<2x8x16xf32>
    %13 = arith.addf %8, %12 : vector<2x8x16xf32>
    %14 = vector.extract_strided_slice %0 {offsets = [2, 0], sizes = [1, 16], strides = [1, 1]} : vector<8x32xf32> to vector<1x16xf32>
    %15 = vector.shape_cast %14 : vector<1x16xf32> to vector<1x1x16xf32>
    %16 = vector.broadcast %15 : vector<1x1x16xf32> to vector<2x8x16xf32>
    %17 = arith.addf %13, %16 : vector<2x8x16xf32>
    %18 = vector.extract_strided_slice %0 {offsets = [0, 16], sizes = [1, 16], strides = [1, 1]} : vector<8x32xf32> to vector<1x16xf32>
    %19 = vector.shape_cast %18 : vector<1x16xf32> to vector<1x1x16xf32>
    %20 = vector.broadcast %19 : vector<1x1x16xf32> to vector<2x8x16xf32>
    %21 = arith.mulf %20, %3 : vector<2x8x16xf32>
    %22 = vector.extract_strided_slice %0 {offsets = [1, 16], sizes = [1, 16], strides = [1, 1]} : vector<8x32xf32> to vector<1x16xf32>
    %23 = vector.shape_cast %22 : vector<1x16xf32> to vector<1x1x16xf32>
    %24 = vector.broadcast %23 : vector<1x1x16xf32> to vector<2x8x16xf32>
    %25 = arith.mulf %24, %4 : vector<2x8x16xf32>
    %26 = arith.addf %21, %25 : vector<2x8x16xf32>
    %27 = vector.extract_strided_slice %0 {offsets = [2, 16], sizes = [1, 16], strides = [1, 1]} : vector<8x32xf32> to vector<1x16xf32>
    %28 = vector.shape_cast %27 : vector<1x16xf32> to vector<1x1x16xf32>
    %29 = vector.broadcast %28 : vector<1x1x16xf32> to vector<2x8x16xf32>
    %30 = arith.addf %26, %29 : vector<2x8x16xf32>
    %31 = vector.extract_strided_slice %17 {offsets = [0, 0, 0], sizes = [2, 8, 8], strides = [1, 1, 1]} : vector<2x8x16xf32> to vector<2x8x8xf32>
    %32 = math.tanh %31 : vector<2x8x8xf32>
    %33 = vector.extract_strided_slice %17 {offsets = [0, 0, 8], sizes = [2, 8, 8], strides = [1, 1, 1]} : vector<2x8x16xf32> to vector<2x8x8xf32>
    %cst = arith.constant 0.000000e+00 : f32
    %34 = vector.broadcast %cst : f32 to vector<2x8x8xf32>
    %35 = arith.subf %34, %33 : vector<2x8x8xf32>
    %36 = math.exp %35 : vector<2x8x8xf32>
    %cst_4 = arith.constant 1.000000e+00 : f32
    %37 = vector.broadcast %cst_4 : f32 to vector<2x8x8xf32>
    %38 = arith.addf %37, %36 : vector<2x8x8xf32>
    %39 = tpu.reciprocal %38 {approx = true} : vector<2x8x8xf32> -> vector<2x8x8xf32>
    %40 = arith.mulf %32, %39 : vector<2x8x8xf32>
    %41 = vector.extract_strided_slice %30 {offsets = [0, 0, 0], sizes = [2, 8, 8], strides = [1, 1, 1]} : vector<2x8x16xf32> to vector<2x8x8xf32>
    %42 = math.tanh %41 : vector<2x8x8xf32>
    %43 = vector.extract_strided_slice %30 {offsets = [0, 0, 8], sizes = [2, 8, 8], strides = [1, 1, 1]} : vector<2x8x16xf32> to vector<2x8x8xf32>
    %cst_5 = arith.constant 0.000000e+00 : f32
    %44 = vector.broadcast %cst_5 : f32 to vector<2x8x8xf32>
    %45 = arith.subf %44, %43 : vector<2x8x8xf32>
    %46 = math.exp %45 : vector<2x8x8xf32>
    %cst_6 = arith.constant 1.000000e+00 : f32
    %47 = vector.broadcast %cst_6 : f32 to vector<2x8x8xf32>
    %48 = arith.addf %47, %46 : vector<2x8x8xf32>
    %49 = tpu.reciprocal %48 {approx = true} : vector<2x8x8xf32> -> vector<2x8x8xf32>
    %50 = arith.mulf %42, %49 : vector<2x8x8xf32>
    %51 = tpu.concatenate %40, %50 in 2 : vector<2x8x8xf32>, vector<2x8x8xf32> -> vector<2x8x16xf32>
    %52 = arith.truncf %51 : vector<2x8x16xf32> to vector<2x8x16xbf16>
    %c0_7 = arith.constant 0 : index
    %c0_8 = arith.constant 0 : index
    %c0_9 = arith.constant 0 : index
    %53 = vector.load %arg2[%c0_7, %c0_8, %c0_9] : memref<2x8x32xbf16, #tpu.memory_space<vmem>>, vector<2x1x32xbf16>
    %54 = arith.extf %53 : vector<2x1x32xbf16> to vector<2x1x32xf32>
    %55 = vector.extract_strided_slice %54 {offsets = [0, 0, 0], sizes = [2, 1, 16], strides = [1, 1, 1]} : vector<2x1x32xf32> to vector<2x1x16xf32>
    %56 = vector.extract_strided_slice %54 {offsets = [0, 0, 16], sizes = [2, 1, 16], strides = [1, 1, 1]} : vector<2x1x32xf32> to vector<2x1x16xf32>
    %57 = vector.extract_strided_slice %0 {offsets = [0, 0], sizes = [1, 16], strides = [1, 1]} : vector<8x32xf32> to vector<1x16xf32>
    %58 = vector.shape_cast %57 : vector<1x16xf32> to vector<1x1x16xf32>
    %59 = vector.broadcast %58 : vector<1x1x16xf32> to vector<2x1x16xf32>
    %60 = arith.mulf %59, %55 : vector<2x1x16xf32>
    %61 = vector.extract_strided_slice %0 {offsets = [1, 0], sizes = [1, 16], strides = [1, 1]} : vector<8x32xf32> to vector<1x16xf32>
    %62 = vector.shape_cast %61 : vector<1x16xf32> to vector<1x1x16xf32>
    %63 = vector.broadcast %62 : vector<1x1x16xf32> to vector<2x1x16xf32>
    %64 = arith.mulf %63, %56 : vector<2x1x16xf32>
    %65 = arith.addf %60, %64 : vector<2x1x16xf32>
    %66 = vector.extract_strided_slice %0 {offsets = [2, 0], sizes = [1, 16], strides = [1, 1]} : vector<8x32xf32> to vector<1x16xf32>
    %67 = vector.shape_cast %66 : vector<1x16xf32> to vector<1x1x16xf32>
    %68 = vector.broadcast %67 : vector<1x1x16xf32> to vector<2x1x16xf32>
    %69 = arith.addf %65, %68 : vector<2x1x16xf32>
    %70 = vector.extract_strided_slice %0 {offsets = [0, 16], sizes = [1, 16], strides = [1, 1]} : vector<8x32xf32> to vector<1x16xf32>
    %71 = vector.shape_cast %70 : vector<1x16xf32> to vector<1x1x16xf32>
    %72 = vector.broadcast %71 : vector<1x1x16xf32> to vector<2x1x16xf32>
    %73 = arith.mulf %72, %55 : vector<2x1x16xf32>
    %74 = vector.extract_strided_slice %0 {offsets = [1, 16], sizes = [1, 16], strides = [1, 1]} : vector<8x32xf32> to vector<1x16xf32>
    %75 = vector.shape_cast %74 : vector<1x16xf32> to vector<1x1x16xf32>
    %76 = vector.broadcast %75 : vector<1x1x16xf32> to vector<2x1x16xf32>
    %77 = arith.mulf %76, %56 : vector<2x1x16xf32>
    %78 = arith.addf %73, %77 : vector<2x1x16xf32>
    %79 = vector.extract_strided_slice %0 {offsets = [2, 16], sizes = [1, 16], strides = [1, 1]} : vector<8x32xf32> to vector<1x16xf32>
    %80 = vector.shape_cast %79 : vector<1x16xf32> to vector<1x1x16xf32>
    %81 = vector.broadcast %80 : vector<1x1x16xf32> to vector<2x1x16xf32>
    %82 = arith.addf %78, %81 : vector<2x1x16xf32>
    %83 = vector.extract_strided_slice %69 {offsets = [0, 0, 0], sizes = [2, 1, 8], strides = [1, 1, 1]} : vector<2x1x16xf32> to vector<2x1x8xf32>
    %84 = math.tanh %83 : vector<2x1x8xf32>
    %85 = vector.extract_strided_slice %69 {offsets = [0, 0, 8], sizes = [2, 1, 8], strides = [1, 1, 1]} : vector<2x1x16xf32> to vector<2x1x8xf32>
    %cst_10 = arith.constant 0.000000e+00 : f32
    %86 = vector.broadcast %cst_10 : f32 to vector<2x1x8xf32>
    %87 = arith.subf %86, %85 : vector<2x1x8xf32>
    %88 = math.exp %87 : vector<2x1x8xf32>
    %cst_11 = arith.constant 1.000000e+00 : f32
    %89 = vector.broadcast %cst_11 : f32 to vector<2x1x8xf32>
    %90 = arith.addf %89, %88 : vector<2x1x8xf32>
    %91 = tpu.reciprocal %90 {approx = true} : vector<2x1x8xf32> -> vector<2x1x8xf32>
    %92 = arith.mulf %84, %91 : vector<2x1x8xf32>
    %93 = vector.extract_strided_slice %82 {offsets = [0, 0, 0], sizes = [2, 1, 8], strides = [1, 1, 1]} : vector<2x1x16xf32> to vector<2x1x8xf32>
    %94 = math.tanh %93 : vector<2x1x8xf32>
    %95 = vector.extract_strided_slice %82 {offsets = [0, 0, 8], sizes = [2, 1, 8], strides = [1, 1, 1]} : vector<2x1x16xf32> to vector<2x1x8xf32>
    %cst_12 = arith.constant 0.000000e+00 : f32
    %96 = vector.broadcast %cst_12 : f32 to vector<2x1x8xf32>
    %97 = arith.subf %96, %95 : vector<2x1x8xf32>
    %98 = math.exp %97 : vector<2x1x8xf32>
    %cst_13 = arith.constant 1.000000e+00 : f32
    %99 = vector.broadcast %cst_13 : f32 to vector<2x1x8xf32>
    %100 = arith.addf %99, %98 : vector<2x1x8xf32>
    %101 = tpu.reciprocal %100 {approx = true} : vector<2x1x8xf32> -> vector<2x1x8xf32>
    %102 = arith.mulf %94, %101 : vector<2x1x8xf32>
    %103 = tpu.concatenate %92, %102 in 2 : vector<2x1x8xf32>, vector<2x1x8xf32> -> vector<2x1x16xf32>
    %104 = arith.truncf %103 : vector<2x1x16xf32> to vector<2x1x16xbf16>
    %c0_14 = arith.constant 0 : index
    %c1 = arith.constant 1 : index
    %c0_15 = arith.constant 0 : index
    %105 = vector.load %arg7[%c0_14, %c1, %c0_15] : memref<2x10x16xbf16, #tpu.memory_space<vmem>>, vector<2x8x16xbf16>
    tpu.vector_store %arg7[%c0_14, %c1, %c0_15], %52 {strides = array<i32>} : memref<2x10x16xbf16, #tpu.memory_space<vmem>>, vector<2x8x16xbf16>,
    %c0_i32 = arith.constant 0 : i32
    %106 = arith.cmpi eq, %arg0, %c0_i32 : i32
    %107 = arith.extui %106 : i1 to i32
    %c0_i32_16 = arith.constant 0 : i32
    %108 = arith.cmpi ne, %107, %c0_i32_16 : i32
    scf.if %108 {
      %cst_50 = arith.constant 0.000000e+00 : bf16
      %145 = vector.broadcast %cst_50 : bf16 to vector<2x1x16xbf16>
      %c0_51 = arith.constant 0 : index
      %c0_52 = arith.constant 0 : index
      %c0_53 = arith.constant 0 : index
      %146 = vector.load %arg7[%c0_51, %c0_52, %c0_53] : memref<2x10x16xbf16, #tpu.memory_space<vmem>>, vector<2x1x16xbf16>
      tpu.vector_store %arg7[%c0_51, %c0_52, %c0_53], %145 {strides = array<i32>} : memref<2x10x16xbf16, #tpu.memory_space<vmem>>, vector<2x1x16xbf16>,
    } else {
    }
    %c1_i32 = arith.constant 1 : i32
    %109 = arith.cmpi eq, %arg0, %c1_i32 : i32
    %cst_17 = arith.constant 0.000000e+00 : bf16
    %110 = vector.broadcast %cst_17 : bf16 to vector<2x1x16xbf16>
    %111 = arith.select %109, %110, %104 : vector<2x1x16xbf16>
    %c0_18 = arith.constant 0 : index
    %c9 = arith.constant 9 : index
    %c0_19 = arith.constant 0 : index
    %112 = vector.load %arg7[%c0_18, %c9, %c0_19] : memref<2x10x16xbf16, #tpu.memory_space<vmem>>, vector<2x1x16xbf16>
    tpu.vector_store %arg7[%c0_18, %c9, %c0_19], %111 {strides = array<i32>} : memref<2x10x16xbf16, #tpu.memory_space<vmem>>, vector<2x1x16xbf16>,
    %c0_20 = arith.constant 0 : index
    %c0_21 = arith.constant 0 : index
    %c0_22 = arith.constant 0 : index
    %113 = vector.load %arg7[%c0_20, %c0_21, %c0_22] : memref<2x10x16xbf16, #tpu.memory_space<vmem>>, vector<2x8x16xbf16>
    %c0_23 = arith.constant 0 : index
    %c1_24 = arith.constant 1 : index
    %c0_25 = arith.constant 0 : index
    %114 = vector.load %arg7[%c0_23, %c1_24, %c0_25] : memref<2x10x16xbf16, #tpu.memory_space<vmem>>, vector<2x8x16xbf16>
    %c0_26 = arith.constant 0 : index
    %c2 = arith.constant 2 : index
    %c0_27 = arith.constant 0 : index
    %115 = vector.load %arg7[%c0_26, %c2, %c0_27] : memref<2x10x16xbf16, #tpu.memory_space<vmem>>, vector<2x8x16xbf16>
    %116 = tpu.concatenate %113, %114, %115 in 2 : vector<2x8x16xbf16>, vector<2x8x16xbf16>, vector<2x8x16xbf16> -> vector<2x8x48xbf16>
    %117 = vector.shape_cast %116 : vector<2x8x48xbf16> to vector<16x48xbf16>
    %c0_28 = arith.constant 0 : index
    %c0_29 = arith.constant 0 : index
    %118 = vector.load %arg4[%c0_28, %c0_29] : memref<48x48xbf16, #tpu.memory_space<vmem>>, vector<48x48xbf16>
    %cst_30 = arith.constant dense<0.000000e+00> : vector<16x48xf32>
    %119 = tpu.matmul %117, %118, %cst_30 {dimension_numbers = #tpu.dot_dimension_numbers<[1], [0], [0], [1], [0, 0, 1, 1], [], []>} : vector<16x48xbf16>, vector<48x48xbf16>, vector<16x48xf32> -> vector<16x48xf32>
    %120 = vector.shape_cast %119 : vector<16x48xf32> to vector<2x8x48xf32>
    %121 = arith.truncf %120 : vector<2x8x48xf32> to vector<2x8x48xbf16>
    %c0_31 = arith.constant 0 : index
    %c0_32 = arith.constant 0 : index
    %c0_33 = arith.constant 0 : index
    %122 = vector.load %arg5[%c0_31, %c0_32, %c0_33] : memref<2x8x48xbf16, #tpu.memory_space<vmem>>, vector<2x8x48xbf16>
    tpu.vector_store %arg5[%c0_31, %c0_32, %c0_33], %121 {strides = array<i32>} : memref<2x8x48xbf16, #tpu.memory_space<vmem>>, vector<2x8x48xbf16>,
    %cst_34 = arith.constant dense<0.000000e+00> : vector<48xf32>
    %123 = vector.multi_reduction <add>, %119, %cst_34 [0] : vector<16x48xf32> to vector<48xf32>
    %124 = vector.shape_cast %123 : vector<48xf32> to vector<1x48xf32>
    %125 = arith.mulf %119, %119 : vector<16x48xf32>
    %cst_35 = arith.constant dense<0.000000e+00> : vector<48xf32>
    %126 = vector.multi_reduction <add>, %125, %cst_35 [0] : vector<16x48xf32> to vector<48xf32>
    %127 = vector.shape_cast %126 : vector<48xf32> to vector<1x48xf32>
    %128 = vector.extract_strided_slice %119 {offsets = [0, 0], sizes = [16, 24], strides = [1, 1]} : vector<16x48xf32> to vector<16x24xf32>
    %129 = vector.extract_strided_slice %119 {offsets = [0, 24], sizes = [16, 24], strides = [1, 1]} : vector<16x48xf32> to vector<16x24xf32>
    %130 = arith.mulf %128, %129 : vector<16x24xf32>
    %cst_36 = arith.constant dense<0.000000e+00> : vector<24xf32>
    %131 = vector.multi_reduction <add>, %130, %cst_36 [0] : vector<16x24xf32> to vector<24xf32>
    %132 = vector.shape_cast %131 : vector<24xf32> to vector<1x24xf32>
    %cst_37 = arith.constant 0.000000e+00 : f32
    %133 = vector.broadcast %cst_37 : f32 to vector<1x24xf32>
    %134 = tpu.concatenate %132, %133 in 1 : vector<1x24xf32>, vector<1x24xf32> -> vector<1x48xf32>
    %cst_38 = arith.constant 0.000000e+00 : f32
    %135 = vector.broadcast %cst_38 : f32 to vector<5x48xf32>
    %136 = tpu.concatenate %124, %127, %134, %135 in 0 : vector<1x48xf32>, vector<1x48xf32>, vector<1x48xf32>, vector<5x48xf32> -> vector<8x48xf32>
    %c0_i32_39 = arith.constant 0 : i32
    %137 = arith.cmpi eq, %arg0, %c0_i32_39 : i32
    %138 = arith.extui %137 : i1 to i32
    %c0_i32_40 = arith.constant 0 : i32
    %139 = arith.cmpi ne, %138, %c0_i32_40 : i32
    scf.if %139 {
      %cst_50 = arith.constant 0.000000e+00 : f32
      %145 = vector.broadcast %cst_50 : f32 to vector<8x48xf32>
      %c0_51 = arith.constant 0 : index
      %c0_52 = arith.constant 0 : index
      %146 = vector.load %arg6[%c0_51, %c0_52] : memref<8x48xf32, #tpu.memory_space<vmem>>, vector<8x48xf32>
      tpu.vector_store %arg6[%c0_51, %c0_52], %145 {strides = array<i32>} : memref<8x48xf32, #tpu.memory_space<vmem>>, vector<8x48xf32>,
    } else {
    }
    %c0_41 = arith.constant 0 : index
    %c0_42 = arith.constant 0 : index
    %140 = vector.load %arg6[%c0_41, %c0_42] : memref<8x48xf32, #tpu.memory_space<vmem>>, vector<8x48xf32>
    %141 = arith.addf %140, %136 : vector<8x48xf32>
    %c0_43 = arith.constant 0 : index
    %c0_44 = arith.constant 0 : index
    %142 = vector.load %arg6[%c0_43, %c0_44] : memref<8x48xf32, #tpu.memory_space<vmem>>, vector<8x48xf32>
    tpu.vector_store %arg6[%c0_43, %c0_44], %141 {strides = array<i32>} : memref<8x48xf32, #tpu.memory_space<vmem>>, vector<8x48xf32>,
    %c0_45 = arith.constant 0 : index
    %c8 = arith.constant 8 : index
    %c0_46 = arith.constant 0 : index
    %143 = vector.load %arg7[%c0_45, %c8, %c0_46] : memref<2x10x16xbf16, #tpu.memory_space<vmem>>, vector<2x1x16xbf16>
    %c0_47 = arith.constant 0 : index
    %c0_48 = arith.constant 0 : index
    %c0_49 = arith.constant 0 : index
    %144 = vector.load %arg7[%c0_47, %c0_48, %c0_49] : memref<2x10x16xbf16, #tpu.memory_space<vmem>>, vector<2x1x16xbf16>
    tpu.vector_store %arg7[%c0_47, %c0_48, %c0_49], %143 {strides = array<i32>} : memref<2x10x16xbf16, #tpu.memory_space<vmem>>, vector<2x1x16xbf16>,
    return
  }
  func.func @transform_0(%arg0: i32) -> (i32, i32, i32) {
    %c0_i32 = arith.constant 0 : i32
    %c0_i32_0 = arith.constant 0 : i32
    %c0_i32_1 = arith.constant 0 : i32
    return %c0_i32, %arg0, %c0_i32_0 : i32, i32, i32
  }
  func.func @transform_1(%arg0: i32) -> (i32, i32, i32) {
    %c1_i32 = arith.constant 1 : i32
    %0 = arith.addi %arg0, %c1_i32 : i32
    %c1_i32_0 = arith.constant 1 : i32
    %1 = arith.muli %0, %c1_i32_0 : i32
    %c1_i32_1 = arith.constant 1 : i32
    %2 = arith.minsi %1, %c1_i32_1 : i32
    %c0_i32 = arith.constant 0 : i32
    %c0_i32_2 = arith.constant 0 : i32
    %c0_i32_3 = arith.constant 0 : i32
    return %c0_i32, %2, %c0_i32_2 : i32, i32, i32
  }
  func.func @transform_2(%arg0: i32) -> (i32, i32) {
    %c0_i32 = arith.constant 0 : i32
    %c0_i32_0 = arith.constant 0 : i32
    %c0_i32_1 = arith.constant 0 : i32
    return %c0_i32, %c0_i32_0 : i32, i32
  }
  func.func @transform_3(%arg0: i32) -> (i32, i32) {
    %c0_i32 = arith.constant 0 : i32
    %c0_i32_0 = arith.constant 0 : i32
    %c0_i32_1 = arith.constant 0 : i32
    return %c0_i32, %c0_i32_0 : i32, i32
  }
  func.func @transform_4(%arg0: i32) -> (i32, i32, i32) {
    %c0_i32 = arith.constant 0 : i32
    %c0_i32_0 = arith.constant 0 : i32
    %c0_i32_1 = arith.constant 0 : i32
    return %c0_i32, %arg0, %c0_i32_0 : i32, i32, i32
  }
  func.func @transform_5(%arg0: i32) -> (i32, i32) {
    %c0_i32 = arith.constant 0 : i32
    %c0_i32_0 = arith.constant 0 : i32
    %c0_i32_1 = arith.constant 0 : i32
    return %c0_i32, %c0_i32_0 : i32, i32
  }
}

module attributes {stable_mosaic.version = 11 : i64} {
  func.func @_bn_skip_res_kernel(%arg0: i32, %arg1: memref<2x8x48xbf16, #tpu.memory_space<vmem>>, %arg2: memref<8x48xf32, #tpu.memory_space<vmem>>, %arg3: memref<2x8x16xf32, #tpu.memory_space<vmem>>, %arg4: memref<2x8x32xf32, #tpu.memory_space<vmem>>, %arg5: memref<2x8x16xf32, #tpu.memory_space<vmem>>) attributes {dimension_semantics = [#tpu.dimension_semantics<parallel>], iteration_bounds = array<i64: 2>, scalar_prefetch = 0 : i64, scratch_operands = 0 : i64, tpu.core_type = #tpu.core_type<tc>, window_params = [{transform_indices = @transform_0, window_bounds = array<i64: 2, 8, 48>}, {pipeline_mode = #tpu.pipeline_mode<synchronous>, transform_indices = @transform_1, window_bounds = array<i64: 8, 48>}, {transform_indices = @transform_2, window_bounds = array<i64: 2, 8, 16>}, {transform_indices = @transform_3, window_bounds = array<i64: 2, 8, 32>}, {transform_indices = @transform_4, window_bounds = array<i64: 2, 8, 16>}]} {
    %c0 = arith.constant 0 : index
    %c0_0 = arith.constant 0 : index
    %c0_1 = arith.constant 0 : index
    %0 = vector.load %arg1[%c0, %c0_0, %c0_1] : memref<2x8x48xbf16, #tpu.memory_space<vmem>>, vector<2x8x48xbf16>
    %1 = arith.extf %0 : vector<2x8x48xbf16> to vector<2x8x48xf32>
    %c0_2 = arith.constant 0 : index
    %c0_3 = arith.constant 0 : index
    %2 = vector.load %arg2[%c0_2, %c0_3] : memref<8x48xf32, #tpu.memory_space<vmem>>, vector<8x48xf32>
    %3 = vector.extract_strided_slice %1 {offsets = [0, 0, 0], sizes = [2, 8, 24], strides = [1, 1, 1]} : vector<2x8x48xf32> to vector<2x8x24xf32>
    %4 = vector.extract_strided_slice %1 {offsets = [0, 0, 24], sizes = [2, 8, 24], strides = [1, 1, 1]} : vector<2x8x48xf32> to vector<2x8x24xf32>
    %5 = vector.extract_strided_slice %2 {offsets = [0, 0], sizes = [1, 24], strides = [1, 1]} : vector<8x48xf32> to vector<1x24xf32>
    %6 = vector.shape_cast %5 : vector<1x24xf32> to vector<1x1x24xf32>
    %7 = vector.broadcast %6 : vector<1x1x24xf32> to vector<2x8x24xf32>
    %8 = arith.mulf %7, %3 : vector<2x8x24xf32>
    %9 = vector.extract_strided_slice %2 {offsets = [1, 0], sizes = [1, 24], strides = [1, 1]} : vector<8x48xf32> to vector<1x24xf32>
    %10 = vector.shape_cast %9 : vector<1x24xf32> to vector<1x1x24xf32>
    %11 = vector.broadcast %10 : vector<1x1x24xf32> to vector<2x8x24xf32>
    %12 = arith.mulf %11, %4 : vector<2x8x24xf32>
    %13 = arith.addf %8, %12 : vector<2x8x24xf32>
    %14 = vector.extract_strided_slice %2 {offsets = [2, 0], sizes = [1, 24], strides = [1, 1]} : vector<8x48xf32> to vector<1x24xf32>
    %15 = vector.shape_cast %14 : vector<1x24xf32> to vector<1x1x24xf32>
    %16 = vector.broadcast %15 : vector<1x1x24xf32> to vector<2x8x24xf32>
    %17 = arith.addf %13, %16 : vector<2x8x24xf32>
    %18 = vector.extract_strided_slice %2 {offsets = [0, 24], sizes = [1, 24], strides = [1, 1]} : vector<8x48xf32> to vector<1x24xf32>
    %19 = vector.shape_cast %18 : vector<1x24xf32> to vector<1x1x24xf32>
    %20 = vector.broadcast %19 : vector<1x1x24xf32> to vector<2x8x24xf32>
    %21 = arith.mulf %20, %3 : vector<2x8x24xf32>
    %22 = vector.extract_strided_slice %2 {offsets = [1, 24], sizes = [1, 24], strides = [1, 1]} : vector<8x48xf32> to vector<1x24xf32>
    %23 = vector.shape_cast %22 : vector<1x24xf32> to vector<1x1x24xf32>
    %24 = vector.broadcast %23 : vector<1x1x24xf32> to vector<2x8x24xf32>
    %25 = arith.mulf %24, %4 : vector<2x8x24xf32>
    %26 = arith.addf %21, %25 : vector<2x8x24xf32>
    %27 = vector.extract_strided_slice %2 {offsets = [2, 24], sizes = [1, 24], strides = [1, 1]} : vector<8x48xf32> to vector<1x24xf32>
    %28 = vector.shape_cast %27 : vector<1x24xf32> to vector<1x1x24xf32>
    %29 = vector.broadcast %28 : vector<1x1x24xf32> to vector<2x8x24xf32>
    %30 = arith.addf %26, %29 : vector<2x8x24xf32>
    %31 = vector.extract_strided_slice %17 {offsets = [0, 0, 0], sizes = [2, 8, 16], strides = [1, 1, 1]} : vector<2x8x24xf32> to vector<2x8x16xf32>
    %c0_4 = arith.constant 0 : index
    %c0_5 = arith.constant 0 : index
    %c0_6 = arith.constant 0 : index
    %32 = vector.load %arg4[%c0_4, %c0_5, %c0_6] : memref<2x8x32xf32, #tpu.memory_space<vmem>>, vector<2x8x16xf32>
    tpu.vector_store %arg4[%c0_4, %c0_5, %c0_6], %31 {strides = array<i32>} : memref<2x8x32xf32, #tpu.memory_space<vmem>>, vector<2x8x16xf32>,
    %33 = vector.extract_strided_slice %30 {offsets = [0, 0, 0], sizes = [2, 8, 16], strides = [1, 1, 1]} : vector<2x8x24xf32> to vector<2x8x16xf32>
    %c0_7 = arith.constant 0 : index
    %c0_8 = arith.constant 0 : index
    %c16 = arith.constant 16 : index
    %34 = vector.load %arg4[%c0_7, %c0_8, %c16] : memref<2x8x32xf32, #tpu.memory_space<vmem>>, vector<2x8x16xf32>
    tpu.vector_store %arg4[%c0_7, %c0_8, %c16], %33 {strides = array<i32>} : memref<2x8x32xf32, #tpu.memory_space<vmem>>, vector<2x8x16xf32>,
    %c0_9 = arith.constant 0 : index
    %c0_10 = arith.constant 0 : index
    %c0_11 = arith.constant 0 : index
    %35 = vector.load %arg3[%c0_9, %c0_10, %c0_11] : memref<2x8x16xf32, #tpu.memory_space<vmem>>, vector<2x8x16xf32>
    %36 = vector.extract_strided_slice %35 {offsets = [0, 0, 0], sizes = [2, 8, 8], strides = [1, 1, 1]} : vector<2x8x16xf32> to vector<2x8x8xf32>
    %37 = vector.extract_strided_slice %17 {offsets = [0, 0, 16], sizes = [2, 8, 8], strides = [1, 1, 1]} : vector<2x8x24xf32> to vector<2x8x8xf32>
    %38 = arith.addf %36, %37 : vector<2x8x8xf32>
    %cst = arith.constant 0.707106769 : f32
    %39 = vector.broadcast %cst : f32 to vector<2x8x8xf32>
    %40 = arith.mulf %38, %39 : vector<2x8x8xf32>
    %c0_12 = arith.constant 0 : index
    %c0_13 = arith.constant 0 : index
    %c0_14 = arith.constant 0 : index
    %41 = vector.load %arg5[%c0_12, %c0_13, %c0_14] : memref<2x8x16xf32, #tpu.memory_space<vmem>>, vector<2x8x8xf32>
    tpu.vector_store %arg5[%c0_12, %c0_13, %c0_14], %40 {strides = array<i32>} : memref<2x8x16xf32, #tpu.memory_space<vmem>>, vector<2x8x8xf32>,
    %42 = vector.extract_strided_slice %35 {offsets = [0, 0, 8], sizes = [2, 8, 8], strides = [1, 1, 1]} : vector<2x8x16xf32> to vector<2x8x8xf32>
    %43 = vector.extract_strided_slice %30 {offsets = [0, 0, 16], sizes = [2, 8, 8], strides = [1, 1, 1]} : vector<2x8x24xf32> to vector<2x8x8xf32>
    %44 = arith.addf %42, %43 : vector<2x8x8xf32>
    %cst_15 = arith.constant 0.707106769 : f32
    %45 = vector.broadcast %cst_15 : f32 to vector<2x8x8xf32>
    %46 = arith.mulf %44, %45 : vector<2x8x8xf32>
    %c0_16 = arith.constant 0 : index
    %c0_17 = arith.constant 0 : index
    %c8 = arith.constant 8 : index
    %47 = vector.load %arg5[%c0_16, %c0_17, %c8] : memref<2x8x16xf32, #tpu.memory_space<vmem>>, vector<2x8x8xf32>
    tpu.vector_store %arg5[%c0_16, %c0_17, %c8], %46 {strides = array<i32>} : memref<2x8x16xf32, #tpu.memory_space<vmem>>, vector<2x8x8xf32>,
    return
  }
  func.func @transform_0(%arg0: i32) -> (i32, i32, i32) {
    %c0_i32 = arith.constant 0 : i32
    %c0_i32_0 = arith.constant 0 : i32
    %c0_i32_1 = arith.constant 0 : i32
    return %c0_i32, %arg0, %c0_i32_0 : i32, i32, i32
  }
  func.func @transform_1(%arg0: i32) -> (i32, i32) {
    %c0_i32 = arith.constant 0 : i32
    %c0_i32_0 = arith.constant 0 : i32
    %c0_i32_1 = arith.constant 0 : i32
    return %c0_i32, %c0_i32_0 : i32, i32
  }
  func.func @transform_2(%arg0: i32) -> (i32, i32, i32) {
    %c0_i32 = arith.constant 0 : i32
    %c0_i32_0 = arith.constant 0 : i32
    %c0_i32_1 = arith.constant 0 : i32
    return %c0_i32, %arg0, %c0_i32_0 : i32, i32, i32
  }
  func.func @transform_3(%arg0: i32) -> (i32, i32, i32) {
    %c0_i32 = arith.constant 0 : i32
    %c0_i32_0 = arith.constant 0 : i32
    %c0_i32_1 = arith.constant 0 : i32
    return %c0_i32, %arg0, %c0_i32_0 : i32, i32, i32
  }
  func.func @transform_4(%arg0: i32) -> (i32, i32, i32) {
    %c0_i32 = arith.constant 0 : i32
    %c0_i32_0 = arith.constant 0 : i32
    %c0_i32_1 = arith.constant 0 : i32
    return %c0_i32, %arg0, %c0_i32_0 : i32, i32, i32
  }
}

</mosaic_0001>

<llo_original>
// kernel: complex_wn_cell.5
$region0: #{complex_wn_cell.5}
  #allocation0 [shape = 'u32[]', space=smem, size = 0x4, offset = 0x4, fixed_abs, tag = 'smem constant byte address 0x4 - core index']
  #allocation1 [shape = 'u32[144,128]{1,0:T(1,128)}', space=vmem, size = 0x12000, scoped, tag = 'internal scratch']
  %s0 = inlined_call_operand.vmem [shape: bf16[2,16,48], index: 0, kind: input, shape index: {}]
  %s1 = inlined_call_operand.vmem [shape: f32[8,48], index: 1, kind: input, shape index: {}]
  %s2 = inlined_call_operand.vmem [shape: f32[2,16,16], index: 2, kind: input, shape index: {}]
  %s3 = inlined_call_operand.vmem [shape: f32[2,16,32], index: 3, kind: output, shape index: {0}]
  %s4 = inlined_call_operand.vmem [shape: f32[2,16,16], index: 4, kind: output, shape index: {1}]
  %5 = xla_tuple %s3, %s4
  %s6 = sld [smem:[#allocation0]]
  $region200: #{complex_wn_cell.5} parent=0
    _
  %s8 = ssub.s32 1, %s6
  %s9 = scalar_select 0, %s8, %s6
  $region1: #{complex_wn_cell.5} parent=0
    #allocation2 [shape = 'u8[8192]{0}', space=vmem, size = 0x2000, scoped, tag = 'input window, operand 0']
    #allocation3 [shape = 'u8[16384]{0}', space=vmem, size = 0x4000, scoped, tag = 'input window, operand 2']
    #allocation4 [shape = 'u8[16384]{0}', space=vmem, size = 0x4000, scoped, tag = 'output window, operand 0']
    #allocation5 [shape = 'u8[16384]{0}', space=vmem, size = 0x4000, scoped, tag = 'output window, operand 1']
    loop: start=0, step=1, limit=4
    $region2: #{complex_wn_cell.5} parent=1 // loop_pre_header
      _
    $region3: #{complex_wn_cell.5} parent=1 // loop_header
      %s11 = sphi 0, %s15
      %p12 = scmp.ge.s32.totalorder %s11, 4
      %s21 = sphi 0, %s23
      %s24 = sphi 0, %s21
      %s25 = sphi 0, %s24
      %s41 = sphi 0, %s25
      %s45 = sphi 0, %s45
      %s47 = sphi 0, %s45
      %s48 = sphi 0, %s47
      %s62 = sphi 0, %s48
      %s68 = sphi 0, %s70
      %s71 = sphi 0, %s68
      %s72 = sphi 0, %s71
      %s88 = sphi 0, %s72
      %s94 = sphi 0, %s96
      %s97 = sphi 0, %s94
      %s98 = sphi 0, %s97
      %s114 = sphi 0, %s98
      %s120 = sphi 0, %s122
      %s123 = sphi 0, %s120
      %s124 = sphi 0, %s123
      %s140 = sphi 0, %s124
    $region4: #{complex_wn_cell.5} parent=1 // loop_header_branch
      %14 = sbr.rel (%p12) target = $region8
    $region5: #{complex_wn_cell.5} parent=1 // loop_body
      %s16 = ssub.s32 %s11, 1
      %s17 = ssub.s32 %s11, 2
      %s18 = sadd.s32 %s11, 1
      %s19 = ssub.s32 %s11, %s18
      %p20 = scmp.eq.s32.totalorder %s19, 0
      %s22 = sadd.s32 %s21, 1
      %s23 = scalar_select %p20, %s21, %s22
      %p26 = pneg %p20
      %p27 = scmp.eq.s32.totalorder %s11, 1
      %p28 = por %p26, %p27
      %p29 = scmp.ne.s32.totalorder %s21, %s24
      %p30 = scmp.eq.s32.totalorder %s11, 0
      %p31 = por %p29, %p30
      %p32 = scmp.ne.s32.totalorder %s21, %s24
      %p33 = scmp.eq.s32.totalorder %s16, 1
      %p34 = por %p32, %p33
      %p35 = scmp.ne.s32.totalorder %s24, %s25
      %p36 = scmp.eq.s32.totalorder %s16, 0
      %p37 = por %p35, %p36
      %p38 = scmp.ne.s32.totalorder %s24, %s25
      %p39 = scmp.eq.s32.totalorder %s17, 1
      %p40 = por %p38, %p39
      %p42 = scmp.ne.s32.totalorder %s25, %s41
      %p43 = scmp.eq.s32.totalorder %s17, 0
      %p44 = por %p42, %p43
      %s46 = sadd.s32 %s45, 1
      %p49 = scmp.eq.s32.totalorder %s11, 1
      %p50 = scmp.ne.s32.totalorder %s45, %s47
      %p51 = scmp.eq.s32.totalorder %s11, 0
      %p52 = por %p50, %p51
      %p53 = scmp.ne.s32.totalorder %s45, %s47
      %p54 = scmp.eq.s32.totalorder %s16, 1
      %p55 = por %p53, %p54
      %p56 = scmp.ne.s32.totalorder %s47, %s48
      %p57 = scmp.eq.s32.totalorder %s16, 0
      %p58 = por %p56, %p57
      %p59 = scmp.ne.s32.totalorder %s47, %s48
      %p60 = scmp.eq.s32.totalorder %s17, 1
      %p61 = por %p59, %p60
      %p63 = scmp.ne.s32.totalorder %s48, %s62
      %p64 = scmp.eq.s32.totalorder %s17, 0
      %p65 = por %p63, %p64
      %s66 = ssub.s32 %s11, %s18
      %p67 = scmp.eq.s32.totalorder %s66, 0
      %s69 = sadd.s32 %s68, 1
      %s70 = scalar_select %p67, %s68, %s69
      %p73 = pneg %p67
      %p74 = scmp.eq.s32.totalorder %s11, 1
      %p75 = por %p73, %p74
      %p76 = scmp.ne.s32.totalorder %s68, %s71
      %p77 = scmp.eq.s32.totalorder %s11, 0
      %p78 = por %p76, %p77
      %p79 = scmp.ne.s32.totalorder %s68, %s71
      %p80 = scmp.eq.s32.totalorder %s16, 1
      %p81 = por %p79, %p80
      %p82 = scmp.ne.s32.totalorder %s71, %s72
      %p83 = scmp.eq.s32.totalorder %s16, 0
      %p84 = por %p82, %p83
      %p85 = scmp.ne.s32.totalorder %s71, %s72
      %p86 = scmp.eq.s32.totalorder %s17, 1
      %p87 = por %p85, %p86
      %p89 = scmp.ne.s32.totalorder %s72, %s88
      %p90 = scmp.eq.s32.totalorder %s17, 0
      %p91 = por %p89, %p90
      %s92 = ssub.s32 %s11, %s18
      %p93 = scmp.eq.s32.totalorder %s92, 0
      %s95 = sadd.s32 %s94, 1
      %s96 = scalar_select %p93, %s94, %s95
      %p99 = pneg %p93
      %p100 = scmp.eq.s32.totalorder %s11, 1
      %p101 = por %p99, %p100
      %p102 = scmp.ne.s32.totalorder %s94, %s97
      %p103 = scmp.eq.s32.totalorder %s11, 0
      %p104 = por %p102, %p103
      %p105 = scmp.ne.s32.totalorder %s94, %s97
      %p106 = scmp.eq.s32.totalorder %s16, 1
      %p107 = por %p105, %p106
      %p108 = scmp.ne.s32.totalorder %s97, %s98
      %p109 = scmp.eq.s32.totalorder %s16, 0
      %p110 = por %p108, %p109
      %p111 = scmp.ne.s32.totalorder %s97, %s98
      %p112 = scmp.eq.s32.totalorder %s17, 1
      %p113 = por %p111, %p112
      %p115 = scmp.ne.s32.totalorder %s98, %s114
      %p116 = scmp.eq.s32.totalorder %s17, 0
      %p117 = por %p115, %p116
      %s118 = ssub.s32 %s11, %s18
      %p119 = scmp.eq.s32.totalorder %s118, 0
      %s121 = sadd.s32 %s120, 1
      %s122 = scalar_select %p119, %s120, %s121
      %p125 = pneg %p119
      %p126 = scmp.eq.s32.totalorder %s11, 1
      %p127 = por %p125, %p126
      %p128 = scmp.ne.s32.totalorder %s120, %s123
      %p129 = scmp.eq.s32.totalorder %s11, 0
      %p130 = por %p128, %p129
      %p131 = scmp.ne.s32.totalorder %s120, %s123
      %p132 = scmp.eq.s32.totalorder %s16, 1
      %p133 = por %p131, %p132
      %p134 = scmp.ne.s32.totalorder %s123, %s124
      %p135 = scmp.eq.s32.totalorder %s16, 0
      %p136 = por %p134, %p135
      %p137 = scmp.ne.s32.totalorder %s123, %s124
      %p138 = scmp.eq.s32.totalorder %s17, 1
      %p139 = por %p137, %p138
      %p141 = scmp.ne.s32.totalorder %s124, %s140
      %p142 = scmp.eq.s32.totalorder %s17, 0
      %p143 = por %p141, %p142
      %p144 = scmp.le.s32.totalorder 1, %s11
      %p145 = scmp.lt.s32.totalorder %s11, 3
      %p146 = pnand %p144, %p145
      %p147 = pneg %p146
      // Predicated region
      $region9: #{complex_wn_cell.5} parent=5 // pred_check
        _
      $region10: #{complex_wn_cell.5} parent=5 // pred_check_branch
        %149 = sbr.rel (%p146) target = $region12
      $region11: #{complex_wn_cell.5} parent=5 // pred_region
        %s150 = ssub.s32 %s11, 1
        // Predicated region
        $region13: #{complex_wn_cell.5} parent=11 // pred_check
          %p151 = pneg %p58
        $region14: #{complex_wn_cell.5} parent=11 // pred_check_branch
          %153 = sbr.rel (%p151) target = $region16
        $region15: #{complex_wn_cell.5} parent=11 // pred_region
          _
        $region16: #{complex_wn_cell.5} parent=11 // pred_fallthru
          _
      $region12: #{complex_wn_cell.5} parent=5 // pred_fallthru
        _
      %p154 = scmp.lt.s32.totalorder %s11, 2
      // Predicated region
      $region17: #{complex_wn_cell.5} parent=5 // pred_check
        %p155 = pneg %p154
      $region18: #{complex_wn_cell.5} parent=5 // pred_check_branch
        %157 = sbr.rel (%p155) target = $region20
      $region19: #{complex_wn_cell.5} parent=5 // pred_region
        // Predicated region
        $region21: #{complex_wn_cell.5} parent=19 // pred_check
          %p158 = pneg %p31
        $region22: #{complex_wn_cell.5} parent=19 // pred_check_branch
          %160 = sbr.rel (%p158) target = $region24
        $region23: #{complex_wn_cell.5} parent=19 // pred_region
          %s161 = sand.u32 %s21, 1
          %s162 = sand.u32 %s21, 1
          %s163 = smul.addr %s162, 8
          %s164 = scalar_lea.vmem [#allocation2], %s163
          %s165 = smul.addr %s11, 4
          %s166 = scalar_lea.vmem %s0, %s165
          // Predicated region
          $region25: #{complex_wn_cell.5} parent=23 // pred_check
            _
          $region26: #{complex_wn_cell.5} parent=23 // pred_check_branch
            %168 = sbr.rel (0) target = $region28
          $region27: #{complex_wn_cell.5} parent=23 // pred_region
            // Predicated region
            $region29: #{complex_wn_cell.5} parent=27 // pred_check
              _
            $region30: #{complex_wn_cell.5} parent=27 // pred_check_branch
              %170 = sbr.rel target = $region32
            $region31: #{complex_wn_cell.5} parent=27 // pred_region
              // Predicated region
              $region44: #{complex_wn_cell.5} parent=31 // pred_check
                _
              $region45: #{complex_wn_cell.5} parent=31 // pred_check_branch
                %187 = sbr.rel (0) target = $region47
              $region46: #{complex_wn_cell.5} parent=31 // pred_region
                loop: start=0, step=1, limit=1
                $region48: #{complex_wn_cell.5} parent=46 // loop_pre_header
                  _
                $region49: #{complex_wn_cell.5} parent=46 // loop_header
                  %s189 = sphi 0, %s193
                  %p190 = scmp.ge.s32.totalorder %s189, 1
                  %s194 = sphi %s166, %s166
                  %s195 = sphi %s164, %s164
                $region50: #{complex_wn_cell.5} parent=46 // loop_header_branch
                  %192 = sbr.rel (%p190) target = $region54
                $region51: #{complex_wn_cell.5} parent=46 // loop_body
                  _
                $region52: #{complex_wn_cell.5} parent=46 // loop_footer
                  %s193 = sadd.s32 1, %s189
                $region53: #{complex_wn_cell.5} parent=46 // loop_footer_branch
                  %188 = sbr.rel target = $region49
                $region54: #{complex_wn_cell.5} parent=46 // loop_exit
                  _
                loop: start=0, step=1, limit=1
                $region55: #{complex_wn_cell.5} parent=46 // loop_pre_header
                  _
                $region56: #{complex_wn_cell.5} parent=46 // loop_header
                  %s198 = sphi 0, %s202
                  %p199 = scmp.ge.s32.totalorder %s198, 1
                  %s203 = sphi %s166, %s166
                  %s204 = sphi %s164, %s164
                $region57: #{complex_wn_cell.5} parent=46 // loop_header_branch
                  %201 = sbr.rel (%p199) target = $region61
                $region58: #{complex_wn_cell.5} parent=46 // loop_body
                  %v205 = vld [vmem:[%s203] sm:$0xf]
                  %206 = vst [vmem:[%s204] sm:$0xf] %v205
                  %v207 = vld [vmem:[%s203 + $0x8] sm:$0xf]
                  %208 = vst [vmem:[%s204 + $0x4] sm:$0xf] %v207
                $region59: #{complex_wn_cell.5} parent=46 // loop_footer
                  %s202 = sadd.s32 1, %s198
                $region60: #{complex_wn_cell.5} parent=46 // loop_footer_branch
                  %197 = sbr.rel target = $region56
                $region61: #{complex_wn_cell.5} parent=46 // loop_exit
                  _
              $region47: #{complex_wn_cell.5} parent=31 // pred_fallthru
                _
            $region32: #{complex_wn_cell.5} parent=27 // pred_fallthru
              _
            // Predicated region
            $region33: #{complex_wn_cell.5} parent=27 // pred_check
              _
            $region34: #{complex_wn_cell.5} parent=27 // pred_check_branch
              %172 = sbr.rel (0) target = $region36
            $region35: #{complex_wn_cell.5} parent=27 // pred_region
              loop: start=0, step=1, limit=1
              $region37: #{complex_wn_cell.5} parent=35 // loop_pre_header
                _
              $region38: #{complex_wn_cell.5} parent=35 // loop_header
                %s175 = sphi 0, %s179
                %p176 = scmp.ge.s32.totalorder %s175, 1
                %s180 = sphi %s166, %s166
                %s181 = sphi %s164, %s164
              $region39: #{complex_wn_cell.5} parent=35 // loop_header_branch
                %178 = sbr.rel (%p176) target = $region43
              $region40: #{complex_wn_cell.5} parent=35 // loop_body
                %v182 = vld [vmem:[%s180] sm:$0xf]
                %183 = vst [vmem:[%s181] sm:$0xf] %v182
                %v184 = vld [vmem:[%s180 + $0x8] sm:$0xf]
                %185 = vst [vmem:[%s181 + $0x4] sm:$0xf] %v184
              $region41: #{complex_wn_cell.5} parent=35 // loop_footer
                %s179 = sadd.s32 1, %s175
              $region42: #{complex_wn_cell.5} parent=35 // loop_footer_branch
                %174 = sbr.rel target = $region38
              $region43: #{complex_wn_cell.5} parent=35 // loop_exit
                _
            $region36: #{complex_wn_cell.5} parent=27 // pred_fallthru
              _
          $region28: #{complex_wn_cell.5} parent=23 // pred_fallthru
            _
          %209 = vnop
        $region24: #{complex_wn_cell.5} parent=19 // pred_fallthru
          _
        // Predicated region
        $region62: #{complex_wn_cell.5} parent=19 // pred_check
          %p210 = pneg %p78
        $region63: #{complex_wn_cell.5} parent=19 // pred_check_branch
          %212 = sbr.rel (%p210) target = $region65
        $region64: #{complex_wn_cell.5} parent=19 // pred_region
          %s213 = sand.u32 %s68, 1
          %s214 = sand.u32 %s68, 1
          %s215 = smul.addr %s214, 16
          %s216 = scalar_lea.vmem [#allocation3], %s215
          %s217 = smul.addr %s11, 8
          %s218 = scalar_lea.vmem %s2, %s217
          // Predicated region
          $region66: #{complex_wn_cell.5} parent=64 // pred_check
            _
          $region67: #{complex_wn_cell.5} parent=64 // pred_check_branch
            %220 = sbr.rel (0) target = $region69
          $region68: #{complex_wn_cell.5} parent=64 // pred_region
            // Predicated region
            $region70: #{complex_wn_cell.5} parent=68 // pred_check
              _
            $region71: #{complex_wn_cell.5} parent=68 // pred_check_branch
              %222 = sbr.rel (0) target = $region73
            $region72: #{complex_wn_cell.5} parent=68 // pred_region
              // Predicated region
              $region85: #{complex_wn_cell.5} parent=72 // pred_check
                _
              $region86: #{complex_wn_cell.5} parent=72 // pred_check_branch
                %239 = sbr.rel (0) target = $region88
              $region87: #{complex_wn_cell.5} parent=72 // pred_region
                loop: start=0, step=1, limit=1
                $region89: #{complex_wn_cell.5} parent=87 // loop_pre_header
                  _
                $region90: #{complex_wn_cell.5} parent=87 // loop_header
                  %s241 = sphi 0, %s245
                  %p242 = scmp.ge.s32.totalorder %s241, 1
                  %s246 = sphi %s218, %s218
                  %s247 = sphi %s216, %s216
                $region91: #{complex_wn_cell.5} parent=87 // loop_header_branch
                  %244 = sbr.rel (%p242) target = $region95
                $region92: #{complex_wn_cell.5} parent=87 // loop_body
                  %v248 = vld [vmem:[%s246] sm:$0xff]
                  %249 = vst [vmem:[%s247] sm:$0xff] %v248
                  %v250 = vld [vmem:[%s246 + $0x10] sm:$0xff]
                  %251 = vst [vmem:[%s247 + $0x8] sm:$0xff] %v250
                $region93: #{complex_wn_cell.5} parent=87 // loop_footer
                  %s245 = sadd.s32 1, %s241
                $region94: #{complex_wn_cell.5} parent=87 // loop_footer_branch
                  %240 = sbr.rel target = $region90
                $region95: #{complex_wn_cell.5} parent=87 // loop_exit
                  _
              $region88: #{complex_wn_cell.5} parent=72 // pred_fallthru
                _
              // Predicated region
              $region96: #{complex_wn_cell.5} parent=72 // pred_check
                _
              $region97: #{complex_wn_cell.5} parent=72 // pred_check_branch
                %253 = sbr.rel target = $region99
              $region98: #{complex_wn_cell.5} parent=72 // pred_region
                _
              $region99: #{complex_wn_cell.5} parent=72 // pred_fallthru
                _
            $region73: #{complex_wn_cell.5} parent=68 // pred_fallthru
              _
            // Predicated region
            $region74: #{complex_wn_cell.5} parent=68 // pred_check
              _
            $region75: #{complex_wn_cell.5} parent=68 // pred_check_branch
              %224 = sbr.rel target = $region77
            $region76: #{complex_wn_cell.5} parent=68 // pred_region
              loop: start=0, step=1, limit=1
              $region78: #{complex_wn_cell.5} parent=76 // loop_pre_header
                _
              $region79: #{complex_wn_cell.5} parent=76 // loop_header
                %s227 = sphi 0, %s231
                %p228 = scmp.ge.s32.totalorder %s227, 1
                %s232 = sphi %s218, %s218
                %s233 = sphi %s216, %s216
              $region80: #{complex_wn_cell.5} parent=76 // loop_header_branch
                %230 = sbr.rel (%p228) target = $region84
              $region81: #{complex_wn_cell.5} parent=76 // loop_body
                %v234 = vld [vmem:[%s232] sm:$0xff]
                %235 = vst [vmem:[%s233] sm:$0xff] %v234
                %v236 = vld [vmem:[%s232 + $0x10] sm:$0xff]
                %237 = vst [vmem:[%s233 + $0x8] sm:$0xff] %v236
              $region82: #{complex_wn_cell.5} parent=76 // loop_footer
                %s231 = sadd.s32 1, %s227
              $region83: #{complex_wn_cell.5} parent=76 // loop_footer_branch
                %226 = sbr.rel target = $region79
              $region84: #{complex_wn_cell.5} parent=76 // loop_exit
                _
            $region77: #{complex_wn_cell.5} parent=68 // pred_fallthru
              _
          $region69: #{complex_wn_cell.5} parent=64 // pred_fallthru
            _
          %254 = vnop
        $region65: #{complex_wn_cell.5} parent=19 // pred_fallthru
          _
      $region20: #{complex_wn_cell.5} parent=5 // pred_fallthru
        _
      %p255 = scmp.le.s32.totalorder 1, %s11
      %p256 = scmp.lt.s32.totalorder %s11, 3
      %p257 = pnand %p255, %p256
      %p258 = pneg %p257
      // Predicated region
      $region100: #{complex_wn_cell.5} parent=5 // pred_check
        _
      $region101: #{complex_wn_cell.5} parent=5 // pred_check_branch
        %260 = sbr.rel (%p257) target = $region103
      $region102: #{complex_wn_cell.5} parent=5 // pred_region
        %s261 = ssub.s32 %s11, 1
        %s262 = sand.u32 %s24, 1
        %s263 = sand.u32 %s24, 1
        %s264 = smul.addr %s263, 8
        %s265 = scalar_lea.vmem [#allocation2], %s264
        // Predicated region
        $region104: #{complex_wn_cell.5} parent=102 // pred_check
          %p266 = pneg %p37
        $region105: #{complex_wn_cell.5} parent=102 // pred_check_branch
          %268 = sbr.rel (%p266) target = $region107
        $region106: #{complex_wn_cell.5} parent=102 // pred_region
          _
        $region107: #{complex_wn_cell.5} parent=102 // pred_fallthru
          _
        %s269 = sand.u32 %s71, 1
        %s270 = sand.u32 %s71, 1
        %s271 = smul.addr %s270, 16
        %s272 = scalar_lea.vmem [#allocation3], %s271
        // Predicated region
        $region108: #{complex_wn_cell.5} parent=102 // pred_check
          %p273 = pneg %p84
        $region109: #{complex_wn_cell.5} parent=102 // pred_check_branch
          %275 = sbr.rel (%p273) target = $region111
        $region110: #{complex_wn_cell.5} parent=102 // pred_region
          _
        $region111: #{complex_wn_cell.5} parent=102 // pred_fallthru
          _
        %s276 = sand.u32 %s24, 1
        %s277 = sand.u32 %s24, 1
        %s278 = smul.addr %s277, 8
        %s279 = scalar_lea.vmem [#allocation2], %s278
        %p280 = pneg %p37
        %p281 = pneg %p34
        %p282 = pneg %p58
        %p283 = pneg %p55
        %s284 = sand.u32 %s71, 1
        %s285 = sand.u32 %s71, 1
        %s286 = smul.addr %s285, 16
        %s287 = scalar_lea.vmem [#allocation3], %s286
        %p288 = pneg %p84
        %p289 = pneg %p81
        %p290 = pneg %p110
        %p291 = pneg %p107
        %s292 = sand.u32 %s97, 1
        %s293 = sand.u32 %s97, 1
        %s294 = smul.addr %s293, 16
        %s295 = scalar_lea.vmem [#allocation4], %s294
        %p296 = pneg %p136
        %p297 = pneg %p133
        %s298 = sand.u32 %s123, 1
        %s299 = sand.u32 %s123, 1
        %s300 = smul.addr %s299, 16
        %s301 = scalar_lea.vmem [#allocation5], %s300
        %v302 = vld [vmem:[%s265] sm:$0xf]
        %v303 = vld [vmem:[%s265 + $0x4] sm:$0xf]
        %v304 = vunpack.c.l.bf16 %v302
        %v305 = vunpack.c.l.bf16 %v303
        %v306 = vld [vmem:[%s1] sm:$0xff]
        %v307 = vlaneseq
        %v308 = vshrl.u32 %v307, 7
        %v309 = vsub.s32 0, %v308
        %v310 = vrot.slane %v306, %v309
        %v311 = vmul.f32 %v310, %v304
        %v312 = vmul.f32 %v310, %v305
        %v313 = vlaneseq
        %v314 = vshrl.u32 %v313, 7
        %v315 = vsub.s32 1, %v314
        %v316 = vrot.slane %v306, %v315
        %319 = vrot.lane.b32.xlu0 %v304, 104
        %v320 = vpop.permute.xlu0 %319
        %321 = vrot.lane.b32.xlu0 %v305, 104
        %v322 = vpop.permute.xlu0 %321
        %v325 = vmul.f32 %v316, %v320
        %v326 = vmul.f32 %v316, %v322
        %v327 = vadd.f32 %v311, %v325
        %v328 = vadd.f32 %v312, %v326
        %v329 = vlaneseq
        %v330 = vshrl.u32 %v329, 7
        %v331 = vsub.s32 2, %v330
        %v332 = vrot.slane %v306, %v331
        %v333 = vadd.f32 %v327, %v332
        %v334 = vadd.f32 %v328, %v332
        %335 = vrot.lane.b32.xlu0 %v304, 24
        %v336 = vpop.permute.xlu0 %335
        %337 = vrot.lane.b32.xlu0 %v305, 24
        %v338 = vpop.permute.xlu0 %337
        %v341 = vmul.f32 %v310, %v336
        %v342 = vmul.f32 %v310, %v338
        %v343 = vmul.f32 %v316, %v304
        %v344 = vmul.f32 %v316, %v305
        %v345 = vadd.f32 %v341, %v343
        %v346 = vadd.f32 %v342, %v344
        %v347 = vadd.f32 %v345, %v332
        %v348 = vadd.f32 %v346, %v332
        %vm349 = vcmask 130048
        %350 = vst.msk [vmem:[%s295] sm:$0xff] %vm349, %v333
        %351 = vst.msk [vmem:[%s295 + $0x8] sm:$0xff] %vm349, %v334
        %354 = vrot.lane.b32.xlu0 %v347, 120
        %v355 = vpop.permute.xlu0 %354
        %356 = vrot.lane.b32.xlu0 %v348, 120
        %v357 = vpop.permute.xlu0 %356
        %vm360 = vcmask 261248
        %361 = vst.msk [vmem:[%s295] sm:$0xff] %vm360, %v355
        %362 = vst.msk [vmem:[%s295 + $0x8] sm:$0xff] %vm360, %v357
        %v363 = vld [vmem:[%s272] sm:$0xff]
        %v364 = vld [vmem:[%s272 + $0x8] sm:$0xff]
        %367 = vrot.lane.b32.xlu0 %v333, 112
        %v368 = vpop.permute.xlu0 %367
        %369 = vrot.lane.b32.xlu0 %v334, 112
        %v370 = vpop.permute.xlu0 %369
        %v373 = vadd.f32 %v363, %v368
        %v374 = vadd.f32 %v364, %v370
        %v375 = vmul.f32 %v373, 0.70710677
        %v376 = vmul.f32 %v374, 0.70710677
        %vm377 = vcmask 64512
        %378 = vst.msk [vmem:[%s301] sm:$0xff] %vm377, %v375
        %379 = vst.msk [vmem:[%s301 + $0x8] sm:$0xff] %vm377, %v376
        %380 = vrot.lane.b32.xlu0 %v347, 96
        %v381 = vpop.permute.xlu0 %380
        %382 = vrot.lane.b32.xlu0 %v348, 96
        %v383 = vpop.permute.xlu0 %382
        %v386 = vadd.f32 %v363, %v381
        %v387 = vadd.f32 %v364, %v383
        %v388 = vmul.f32 %v386, 0.70710677
        %v389 = vmul.f32 %v387, 0.70710677
        %vm390 = vcmask 130112
        %391 = vst.msk [vmem:[%s301] sm:$0xff] %vm390, %v388
        %392 = vst.msk [vmem:[%s301 + $0x8] sm:$0xff] %vm390, %v389
        %s393 = sand.u32 %s97, 1
        %s394 = sand.u32 %s97, 1
        %s395 = smul.addr %s394, 16
        %s396 = scalar_lea.vmem [#allocation4], %s395
        %s397 = sand.u32 %s123, 1
        %s398 = sand.u32 %s123, 1
        %s399 = smul.addr %s398, 16
        %s400 = scalar_lea.vmem [#allocation5], %s399
        // Predicated region
        $region112: #{complex_wn_cell.5} parent=102 // pred_check
          %p401 = pneg %p107
        $region113: #{complex_wn_cell.5} parent=102 // pred_check_branch
          %403 = sbr.rel (%p401) target = $region115
        $region114: #{complex_wn_cell.5} parent=102 // pred_region
          %s404 = smul.addr %s16, 8
          %s405 = scalar_lea.vmem %s3, %s404
          // Predicated region
          $region116: #{complex_wn_cell.5} parent=114 // pred_check
            _
          $region117: #{complex_wn_cell.5} parent=114 // pred_check_branch
            %407 = sbr.rel (0) target = $region119
          $region118: #{complex_wn_cell.5} parent=114 // pred_region
            // Predicated region
            $region120: #{complex_wn_cell.5} parent=118 // pred_check
              _
            $region121: #{complex_wn_cell.5} parent=118 // pred_check_branch
              %409 = sbr.rel (0) target = $region123
            $region122: #{complex_wn_cell.5} parent=118 // pred_region
              // Predicated region
              $region135: #{complex_wn_cell.5} parent=122 // pred_check
                _
              $region136: #{complex_wn_cell.5} parent=122 // pred_check_branch
                %426 = sbr.rel (0) target = $region138
              $region137: #{complex_wn_cell.5} parent=122 // pred_region
                loop: start=0, step=1, limit=1
                $region139: #{complex_wn_cell.5} parent=137 // loop_pre_header
                  _
                $region140: #{complex_wn_cell.5} parent=137 // loop_header
                  %s428 = sphi 0, %s432
                  %p429 = scmp.ge.s32.totalorder %s428, 1
                  %s433 = sphi %s396, %s396
                  %s434 = sphi %s405, %s405
                $region141: #{complex_wn_cell.5} parent=137 // loop_header_branch
                  %431 = sbr.rel (%p429) target = $region145
                $region142: #{complex_wn_cell.5} parent=137 // loop_body
                  %v435 = vld [vmem:[%s433] sm:$0xff]
                  %436 = vst [vmem:[%s434] sm:$0xff] %v435
                  %v437 = vld [vmem:[%s433 + $0x8] sm:$0xff]
                  %438 = vst [vmem:[%s434 + $0x10] sm:$0xff] %v437
                $region143: #{complex_wn_cell.5} parent=137 // loop_footer
                  %s432 = sadd.s32 1, %s428
                $region144: #{complex_wn_cell.5} parent=137 // loop_footer_branch
                  %427 = sbr.rel target = $region140
                $region145: #{complex_wn_cell.5} parent=137 // loop_exit
                  _
              $region138: #{complex_wn_cell.5} parent=122 // pred_fallthru
                _
              // Predicated region
              $region146: #{complex_wn_cell.5} parent=122 // pred_check
                _
              $region147: #{complex_wn_cell.5} parent=122 // pred_check_branch
                %440 = sbr.rel target = $region149
              $region148: #{complex_wn_cell.5} parent=122 // pred_region
                _
              $region149: #{complex_wn_cell.5} parent=122 // pred_fallthru
                _
            $region123: #{complex_wn_cell.5} parent=118 // pred_fallthru
              _
            // Predicated region
            $region124: #{complex_wn_cell.5} parent=118 // pred_check
              _
            $region125: #{complex_wn_cell.5} parent=118 // pred_check_branch
              %411 = sbr.rel target = $region127
            $region126: #{complex_wn_cell.5} parent=118 // pred_region
              loop: start=0, step=1, limit=1
              $region128: #{complex_wn_cell.5} parent=126 // loop_pre_header
                _
              $region129: #{complex_wn_cell.5} parent=126 // loop_header
                %s414 = sphi 0, %s418
                %p415 = scmp.ge.s32.totalorder %s414, 1
                %s419 = sphi %s396, %s396
                %s420 = sphi %s405, %s405
              $region130: #{complex_wn_cell.5} parent=126 // loop_header_branch
                %417 = sbr.rel (%p415) target = $region134
              $region131: #{complex_wn_cell.5} parent=126 // loop_body
                %v421 = vld [vmem:[%s419] sm:$0xff]
                %422 = vst [vmem:[%s420] sm:$0xff] %v421
                %v423 = vld [vmem:[%s419 + $0x8] sm:$0xff]
                %424 = vst [vmem:[%s420 + $0x10] sm:$0xff] %v423
              $region132: #{complex_wn_cell.5} parent=126 // loop_footer
                %s418 = sadd.s32 1, %s414
              $region133: #{complex_wn_cell.5} parent=126 // loop_footer_branch
                %413 = sbr.rel target = $region129
              $region134: #{complex_wn_cell.5} parent=126 // loop_exit
                _
            $region127: #{complex_wn_cell.5} parent=118 // pred_fallthru
              _
          $region119: #{complex_wn_cell.5} parent=114 // pred_fallthru
            _
          %441 = vnop
        $region115: #{complex_wn_cell.5} parent=102 // pred_fallthru
          _
        // Predicated region
        $region150: #{complex_wn_cell.5} parent=102 // pred_check
          %p442 = pneg %p133
        $region151: #{complex_wn_cell.5} parent=102 // pred_check_branch
          %444 = sbr.rel (%p442) target = $region153
        $region152: #{complex_wn_cell.5} parent=102 // pred_region
          %s445 = smul.addr %s16, 8
          %s446 = scalar_lea.vmem %s4, %s445
          // Predicated region
          $region154: #{complex_wn_cell.5} parent=152 // pred_check
            _
          $region155: #{complex_wn_cell.5} parent=152 // pred_check_branch
            %448 = sbr.rel (0) target = $region157
          $region156: #{complex_wn_cell.5} parent=152 // pred_region
            // Predicated region
            $region158: #{complex_wn_cell.5} parent=156 // pred_check
              _
            $region159: #{complex_wn_cell.5} parent=156 // pred_check_branch
              %450 = sbr.rel (0) target = $region161
            $region160: #{complex_wn_cell.5} parent=156 // pred_region
              // Predicated region
              $region173: #{complex_wn_cell.5} parent=160 // pred_check
                _
              $region174: #{complex_wn_cell.5} parent=160 // pred_check_branch
                %467 = sbr.rel (0) target = $region176
              $region175: #{complex_wn_cell.5} parent=160 // pred_region
                loop: start=0, step=1, limit=1
                $region177: #{complex_wn_cell.5} parent=175 // loop_pre_header
                  _
                $region178: #{complex_wn_cell.5} parent=175 // loop_header
                  %s469 = sphi 0, %s473
                  %p470 = scmp.ge.s32.totalorder %s469, 1
                  %s474 = sphi %s400, %s400
                  %s475 = sphi %s446, %s446
                $region179: #{complex_wn_cell.5} parent=175 // loop_header_branch
                  %472 = sbr.rel (%p470) target = $region183
                $region180: #{complex_wn_cell.5} parent=175 // loop_body
                  %v476 = vld [vmem:[%s474] sm:$0xff]
                  %477 = vst [vmem:[%s475] sm:$0xff] %v476
                  %v478 = vld [vmem:[%s474 + $0x8] sm:$0xff]
                  %479 = vst [vmem:[%s475 + $0x10] sm:$0xff] %v478
                $region181: #{complex_wn_cell.5} parent=175 // loop_footer
                  %s473 = sadd.s32 1, %s469
                $region182: #{complex_wn_cell.5} parent=175 // loop_footer_branch
                  %468 = sbr.rel target = $region178
                $region183: #{complex_wn_cell.5} parent=175 // loop_exit
                  _
              $region176: #{complex_wn_cell.5} parent=160 // pred_fallthru
                _
              // Predicated region
              $region184: #{complex_wn_cell.5} parent=160 // pred_check
                _
              $region185: #{complex_wn_cell.5} parent=160 // pred_check_branch
                %481 = sbr.rel target = $region187
              $region186: #{complex_wn_cell.5} parent=160 // pred_region
                _
              $region187: #{complex_wn_cell.5} parent=160 // pred_fallthru
                _
            $region161: #{complex_wn_cell.5} parent=156 // pred_fallthru
              _
            // Predicated region
            $region162: #{complex_wn_cell.5} parent=156 // pred_check
              _
            $region163: #{complex_wn_cell.5} parent=156 // pred_check_branch
              %452 = sbr.rel target = $region165
            $region164: #{complex_wn_cell.5} parent=156 // pred_region
              loop: start=0, step=1, limit=1
              $region166: #{complex_wn_cell.5} parent=164 // loop_pre_header
                _
              $region167: #{complex_wn_cell.5} parent=164 // loop_header
                %s455 = sphi 0, %s459
                %p456 = scmp.ge.s32.totalorder %s455, 1
                %s460 = sphi %s400, %s400
                %s461 = sphi %s446, %s446
              $region168: #{complex_wn_cell.5} parent=164 // loop_header_branch
                %458 = sbr.rel (%p456) target = $region172
              $region169: #{complex_wn_cell.5} parent=164 // loop_body
                %v462 = vld [vmem:[%s460] sm:$0xff]
                %463 = vst [vmem:[%s461] sm:$0xff] %v462
                %v464 = vld [vmem:[%s460 + $0x8] sm:$0xff]
                %465 = vst [vmem:[%s461 + $0x10] sm:$0xff] %v464
              $region170: #{complex_wn_cell.5} parent=164 // loop_footer
                %s459 = sadd.s32 1, %s455
              $region171: #{complex_wn_cell.5} parent=164 // loop_footer_branch
                %454 = sbr.rel target = $region167
              $region172: #{complex_wn_cell.5} parent=164 // loop_exit
                _
            $region165: #{complex_wn_cell.5} parent=156 // pred_fallthru
              _
          $region157: #{complex_wn_cell.5} parent=152 // pred_fallthru
            _
          %482 = vnop
        $region153: #{complex_wn_cell.5} parent=102 // pred_fallthru
          _
      $region103: #{complex_wn_cell.5} parent=5 // pred_fallthru
        _
      %p483 = scmp.le.s32.totalorder 2, %s11
      // Predicated region
      $region188: #{complex_wn_cell.5} parent=5 // pred_check
        %p484 = pneg %p483
      $region189: #{complex_wn_cell.5} parent=5 // pred_check_branch
        %486 = sbr.rel (%p484) target = $region191
      $region190: #{complex_wn_cell.5} parent=5 // pred_region
        %s487 = ssub.s32 %s11, 2
        // Predicated region
        $region192: #{complex_wn_cell.5} parent=190 // pred_check
          %p488 = pneg %p113
        $region193: #{complex_wn_cell.5} parent=190 // pred_check_branch
          %490 = sbr.rel (%p488) target = $region195
        $region194: #{complex_wn_cell.5} parent=190 // pred_region
          %s491 = sand.u32 %s98, 1
          %s492 = sand.u32 %s98, 1
          %s493 = smul.addr %s492, 16
          %s494 = scalar_lea.vmem [#allocation4], %s493
        $region195: #{complex_wn_cell.5} parent=190 // pred_fallthru
          _
        // Predicated region
        $region196: #{complex_wn_cell.5} parent=190 // pred_check
          %p495 = pneg %p139
        $region197: #{complex_wn_cell.5} parent=190 // pred_check_branch
          %497 = sbr.rel (%p495) target = $region199
        $region198: #{complex_wn_cell.5} parent=190 // pred_region
          %s498 = sand.u32 %s124, 1
          %s499 = sand.u32 %s124, 1
          %s500 = smul.addr %s499, 16
          %s501 = scalar_lea.vmem [#allocation5], %s500
        $region199: #{complex_wn_cell.5} parent=190 // pred_fallthru
          _
      $region191: #{complex_wn_cell.5} parent=5 // pred_fallthru
        _
    $region6: #{complex_wn_cell.5} parent=1 // loop_footer
      %s15 = sadd.s32 1, %s11
    $region7: #{complex_wn_cell.5} parent=1 // loop_footer_branch
      %10 = sbr.rel target = $region3
    $region8: #{complex_wn_cell.5} parent=1 // loop_exit
      _

// kernel: complex_wn_cell.4
$region0: #{complex_wn_cell.4}
  #allocation0 [shape = 'u32[]', space=smem, size = 0x4, offset = 0x4, fixed_abs, tag = 'smem constant byte address 0x4 - core index']
  #allocation1 [shape = 'u32[144,128]{1,0:T(1,128)}', space=vmem, size = 0x12000, scoped, tag = 'internal scratch']
  #allocation2 [shape = 'bf16[2,10,16]{2,1,0:T(8,128)(2,1)}', space=vmem, size = 0x2000, scoped, tag = 'scratch operand']
  %s0 = inlined_call_operand.vmem [shape: bf16[2,16,32], index: 0, kind: input, shape index: {}, may-alias: {0,1}]
  %s1 = inlined_call_operand.vmem [shape: bf16[2,16,32], index: 1, kind: input, shape index: {}, may-alias: {0,1}]
  %s2 = inlined_call_operand.vmem [shape: f32[8,32], index: 2, kind: input, shape index: {}]
  %s3 = inlined_call_operand.vmem [shape: bf16[48,48], index: 3, kind: input, shape index: {}]
  %s4 = inlined_call_operand.vmem [shape: bf16[2,16,48], index: 4, kind: output, shape index: {0}]
  %s5 = inlined_call_operand.vmem [shape: f32[8,48], index: 5, kind: output, shape index: {1}]
  %6 = xla_tuple %s4, %s5
  %s7 = sld [smem:[#allocation0]]
  $region184: #{complex_wn_cell.4} parent=0
    _
  %s9 = ssub.s32 1, %s7
  %s10 = scalar_select 0, %s9, %s7
  $region1: #{complex_wn_cell.4} parent=0
    #allocation3 [shape = 'u8[8192]{0}', space=vmem, size = 0x2000, scoped, tag = 'input window, operand 0']
    #allocation4 [shape = 'u8[8192]{0}', space=vmem, size = 0x2000, scoped, tag = 'input window, operand 1']
    #allocation5 [shape = 'u8[8192]{0}', space=vmem, size = 0x2000, scoped, tag = 'output window, operand 0']
    loop: start=0, step=1, limit=4
    $region2: #{complex_wn_cell.4} parent=1 // loop_pre_header
      _
    $region3: #{complex_wn_cell.4} parent=1 // loop_header
      %s12 = sphi 0, %s16
      %p13 = scmp.ge.s32.totalorder %s12, 4
      %s22 = sphi 0, %s24
      %s25 = sphi 0, %s22
      %s26 = sphi 0, %s25
      %s42 = sphi 0, %s26
      %s54 = sphi 0, %s56
      %s57 = sphi 0, %s54
      %s58 = sphi 0, %s57
      %s74 = sphi 0, %s58
      %s78 = sphi 0, %s78
      %s80 = sphi 0, %s78
      %s81 = sphi 0, %s80
      %s95 = sphi 0, %s81
      %s99 = sphi 0, %s99
      %s101 = sphi 0, %s99
      %s102 = sphi 0, %s101
      %s116 = sphi 0, %s102
      %s122 = sphi 0, %s124
      %s125 = sphi 0, %s122
      %s126 = sphi 0, %s125
      %s142 = sphi 0, %s126
      %s146 = sphi 0, %s146
      %s148 = sphi 0, %s146
      %s149 = sphi 0, %s148
      %s163 = sphi 0, %s149
    $region4: #{complex_wn_cell.4} parent=1 // loop_header_branch
      %15 = sbr.rel (%p13) target = $region8
    $region5: #{complex_wn_cell.4} parent=1 // loop_body
      %s17 = ssub.s32 %s12, 1
      %s18 = ssub.s32 %s12, 2
      %s19 = sadd.s32 %s12, 1
      %s20 = ssub.s32 %s12, %s19
      %p21 = scmp.eq.s32.totalorder %s20, 0
      %s23 = sadd.s32 %s22, 1
      %s24 = scalar_select %p21, %s22, %s23
      %p27 = pneg %p21
      %p28 = scmp.eq.s32.totalorder %s12, 1
      %p29 = por %p27, %p28
      %p30 = scmp.ne.s32.totalorder %s22, %s25
      %p31 = scmp.eq.s32.totalorder %s12, 0
      %p32 = por %p30, %p31
      %p33 = scmp.ne.s32.totalorder %s22, %s25
      %p34 = scmp.eq.s32.totalorder %s17, 1
      %p35 = por %p33, %p34
      %p36 = scmp.ne.s32.totalorder %s25, %s26
      %p37 = scmp.eq.s32.totalorder %s17, 0
      %p38 = por %p36, %p37
      %p39 = scmp.ne.s32.totalorder %s25, %s26
      %p40 = scmp.eq.s32.totalorder %s18, 1
      %p41 = por %p39, %p40
      %p43 = scmp.ne.s32.totalorder %s26, %s42
      %p44 = scmp.eq.s32.totalorder %s18, 0
      %p45 = por %p43, %p44
      %s46 = sadd.s32 %s12, 1
      %p47 = scmp.lt.s32.totalorder %s46, 1
      %s48 = scalar_select %p47, %s46, 1
      %s49 = sadd.s32 %s19, 1
      %p50 = scmp.lt.s32.totalorder %s49, 1
      %s51 = scalar_select %p50, %s49, 1
      %s52 = ssub.s32 %s48, %s51
      %p53 = scmp.eq.s32.totalorder %s52, 0
      %s55 = sadd.s32 %s54, 1
      %s56 = scalar_select %p53, %s54, %s55
      %p59 = pneg %p53
      %p60 = scmp.eq.s32.totalorder %s12, 1
      %p61 = por %p59, %p60
      %p62 = scmp.ne.s32.totalorder %s54, %s57
      %p63 = scmp.eq.s32.totalorder %s12, 0
      %p64 = por %p62, %p63
      %p65 = scmp.ne.s32.totalorder %s54, %s57
      %p66 = scmp.eq.s32.totalorder %s17, 1
      %p67 = por %p65, %p66
      %p68 = scmp.ne.s32.totalorder %s57, %s58
      %p69 = scmp.eq.s32.totalorder %s17, 0
      %p70 = por %p68, %p69
      %p71 = scmp.ne.s32.totalorder %s57, %s58
      %p72 = scmp.eq.s32.totalorder %s18, 1
      %p73 = por %p71, %p72
      %p75 = scmp.ne.s32.totalorder %s58, %s74
      %p76 = scmp.eq.s32.totalorder %s18, 0
      %p77 = por %p75, %p76
      %s79 = sadd.s32 %s78, 1
      %p82 = scmp.eq.s32.totalorder %s12, 1
      %p83 = scmp.ne.s32.totalorder %s78, %s80
      %p84 = scmp.eq.s32.totalorder %s12, 0
      %p85 = por %p83, %p84
      %p86 = scmp.ne.s32.totalorder %s78, %s80
      %p87 = scmp.eq.s32.totalorder %s17, 1
      %p88 = por %p86, %p87
      %p89 = scmp.ne.s32.totalorder %s80, %s81
      %p90 = scmp.eq.s32.totalorder %s17, 0
      %p91 = por %p89, %p90
      %p92 = scmp.ne.s32.totalorder %s80, %s81
      %p93 = scmp.eq.s32.totalorder %s18, 1
      %p94 = por %p92, %p93
      %p96 = scmp.ne.s32.totalorder %s81, %s95
      %p97 = scmp.eq.s32.totalorder %s18, 0
      %p98 = por %p96, %p97
      %s100 = sadd.s32 %s99, 1
      %p103 = scmp.eq.s32.totalorder %s12, 1
      %p104 = scmp.ne.s32.totalorder %s99, %s101
      %p105 = scmp.eq.s32.totalorder %s12, 0
      %p106 = por %p104, %p105
      %p107 = scmp.ne.s32.totalorder %s99, %s101
      %p108 = scmp.eq.s32.totalorder %s17, 1
      %p109 = por %p107, %p108
      %p110 = scmp.ne.s32.totalorder %s101, %s102
      %p111 = scmp.eq.s32.totalorder %s17, 0
      %p112 = por %p110, %p111
      %p113 = scmp.ne.s32.totalorder %s101, %s102
      %p114 = scmp.eq.s32.totalorder %s18, 1
      %p115 = por %p113, %p114
      %p117 = scmp.ne.s32.totalorder %s102, %s116
      %p118 = scmp.eq.s32.totalorder %s18, 0
      %p119 = por %p117, %p118
      %s120 = ssub.s32 %s12, %s19
      %p121 = scmp.eq.s32.totalorder %s120, 0
      %s123 = sadd.s32 %s122, 1
      %s124 = scalar_select %p121, %s122, %s123
      %p127 = pneg %p121
      %p128 = scmp.eq.s32.totalorder %s12, 1
      %p129 = por %p127, %p128
      %p130 = scmp.ne.s32.totalorder %s122, %s125
      %p131 = scmp.eq.s32.totalorder %s12, 0
      %p132 = por %p130, %p131
      %p133 = scmp.ne.s32.totalorder %s122, %s125
      %p134 = scmp.eq.s32.totalorder %s17, 1
      %p135 = por %p133, %p134
      %p136 = scmp.ne.s32.totalorder %s125, %s126
      %p137 = scmp.eq.s32.totalorder %s17, 0
      %p138 = por %p136, %p137
      %p139 = scmp.ne.s32.totalorder %s125, %s126
      %p140 = scmp.eq.s32.totalorder %s18, 1
      %p141 = por %p139, %p140
      %p143 = scmp.ne.s32.totalorder %s126, %s142
      %p144 = scmp.eq.s32.totalorder %s18, 0
      %p145 = por %p143, %p144
      %s147 = sadd.s32 %s146, 1
      %p150 = scmp.eq.s32.totalorder %s12, 1
      %p151 = scmp.ne.s32.totalorder %s146, %s148
      %p152 = scmp.eq.s32.totalorder %s12, 0
      %p153 = por %p151, %p152
      %p154 = scmp.ne.s32.totalorder %s146, %s148
      %p155 = scmp.eq.s32.totalorder %s17, 1
      %p156 = por %p154, %p155
      %p157 = scmp.ne.s32.totalorder %s148, %s149
      %p158 = scmp.eq.s32.totalorder %s17, 0
      %p159 = por %p157, %p158
      %p160 = scmp.ne.s32.totalorder %s148, %s149
      %p161 = scmp.eq.s32.totalorder %s18, 1
      %p162 = por %p160, %p161
      %p164 = scmp.ne.s32.totalorder %s149, %s163
      %p165 = scmp.eq.s32.totalorder %s18, 0
      %p166 = por %p164, %p165
      %p167 = scmp.le.s32.totalorder 1, %s12
      %p168 = scmp.lt.s32.totalorder %s12, 3
      %p169 = pnand %p167, %p168
      %p170 = pneg %p169
      // Predicated region
      $region9: #{complex_wn_cell.4} parent=5 // pred_check
        _
      $region10: #{complex_wn_cell.4} parent=5 // pred_check_branch
        %172 = sbr.rel (%p169) target = $region12
      $region11: #{complex_wn_cell.4} parent=5 // pred_region
        %s173 = ssub.s32 %s12, 1
        // Predicated region
        $region13: #{complex_wn_cell.4} parent=11 // pred_check
          %p174 = pneg %p91
        $region14: #{complex_wn_cell.4} parent=11 // pred_check_branch
          %176 = sbr.rel (%p174) target = $region16
        $region15: #{complex_wn_cell.4} parent=11 // pred_region
          _
        $region16: #{complex_wn_cell.4} parent=11 // pred_fallthru
          _
        // Predicated region
        $region17: #{complex_wn_cell.4} parent=11 // pred_check
          %p177 = pneg %p112
        $region18: #{complex_wn_cell.4} parent=11 // pred_check_branch
          %179 = sbr.rel (%p177) target = $region20
        $region19: #{complex_wn_cell.4} parent=11 // pred_region
          _
        $region20: #{complex_wn_cell.4} parent=11 // pred_fallthru
          _
      $region12: #{complex_wn_cell.4} parent=5 // pred_fallthru
        _
      %p180 = scmp.lt.s32.totalorder %s12, 2
      // Predicated region
      $region21: #{complex_wn_cell.4} parent=5 // pred_check
        %p181 = pneg %p180
      $region22: #{complex_wn_cell.4} parent=5 // pred_check_branch
        %183 = sbr.rel (%p181) target = $region24
      $region23: #{complex_wn_cell.4} parent=5 // pred_region
        // Predicated region
        $region25: #{complex_wn_cell.4} parent=23 // pred_check
          %p184 = pneg %p32
        $region26: #{complex_wn_cell.4} parent=23 // pred_check_branch
          %186 = sbr.rel (%p184) target = $region28
        $region27: #{complex_wn_cell.4} parent=23 // pred_region
          %s187 = sand.u32 %s22, 1
          %s188 = sand.u32 %s22, 1
          %s189 = smul.addr %s188, 8
          %s190 = scalar_lea.vmem [#allocation3], %s189
          %s191 = smul.addr %s12, 4
          %s192 = scalar_lea.vmem %s0, %s191
          // Predicated region
          $region29: #{complex_wn_cell.4} parent=27 // pred_check
            _
          $region30: #{complex_wn_cell.4} parent=27 // pred_check_branch
            %194 = sbr.rel (0) target = $region32
          $region31: #{complex_wn_cell.4} parent=27 // pred_region
            // Predicated region
            $region33: #{complex_wn_cell.4} parent=31 // pred_check
              _
            $region34: #{complex_wn_cell.4} parent=31 // pred_check_branch
              %196 = sbr.rel target = $region36
            $region35: #{complex_wn_cell.4} parent=31 // pred_region
              // Predicated region
              $region48: #{complex_wn_cell.4} parent=35 // pred_check
                _
              $region49: #{complex_wn_cell.4} parent=35 // pred_check_branch
                %213 = sbr.rel (0) target = $region51
              $region50: #{complex_wn_cell.4} parent=35 // pred_region
                loop: start=0, step=1, limit=1
                $region52: #{complex_wn_cell.4} parent=50 // loop_pre_header
                  _
                $region53: #{complex_wn_cell.4} parent=50 // loop_header
                  %s215 = sphi 0, %s219
                  %p216 = scmp.ge.s32.totalorder %s215, 1
                  %s220 = sphi %s192, %s192
                  %s221 = sphi %s190, %s190
                $region54: #{complex_wn_cell.4} parent=50 // loop_header_branch
                  %218 = sbr.rel (%p216) target = $region58
                $region55: #{complex_wn_cell.4} parent=50 // loop_body
                  _
                $region56: #{complex_wn_cell.4} parent=50 // loop_footer
                  %s219 = sadd.s32 1, %s215
                $region57: #{complex_wn_cell.4} parent=50 // loop_footer_branch
                  %214 = sbr.rel target = $region53
                $region58: #{complex_wn_cell.4} parent=50 // loop_exit
                  _
                loop: start=0, step=1, limit=1
                $region59: #{complex_wn_cell.4} parent=50 // loop_pre_header
                  _
                $region60: #{complex_wn_cell.4} parent=50 // loop_header
                  %s224 = sphi 0, %s228
                  %p225 = scmp.ge.s32.totalorder %s224, 1
                  %s229 = sphi %s192, %s192
                  %s230 = sphi %s190, %s190
                $region61: #{complex_wn_cell.4} parent=50 // loop_header_branch
                  %227 = sbr.rel (%p225) target = $region65
                $region62: #{complex_wn_cell.4} parent=50 // loop_body
                  %v231 = vld [vmem:[%s229] sm:$0xf]
                  %232 = vst [vmem:[%s230] sm:$0xf] %v231
                  %v233 = vld [vmem:[%s229 + $0x8] sm:$0xf]
                  %234 = vst [vmem:[%s230 + $0x4] sm:$0xf] %v233
                $region63: #{complex_wn_cell.4} parent=50 // loop_footer
                  %s228 = sadd.s32 1, %s224
                $region64: #{complex_wn_cell.4} parent=50 // loop_footer_branch
                  %223 = sbr.rel target = $region60
                $region65: #{complex_wn_cell.4} parent=50 // loop_exit
                  _
              $region51: #{complex_wn_cell.4} parent=35 // pred_fallthru
                _
            $region36: #{complex_wn_cell.4} parent=31 // pred_fallthru
              _
            // Predicated region
            $region37: #{complex_wn_cell.4} parent=31 // pred_check
              _
            $region38: #{complex_wn_cell.4} parent=31 // pred_check_branch
              %198 = sbr.rel (0) target = $region40
            $region39: #{complex_wn_cell.4} parent=31 // pred_region
              loop: start=0, step=1, limit=1
              $region41: #{complex_wn_cell.4} parent=39 // loop_pre_header
                _
              $region42: #{complex_wn_cell.4} parent=39 // loop_header
                %s201 = sphi 0, %s205
                %p202 = scmp.ge.s32.totalorder %s201, 1
                %s206 = sphi %s192, %s192
                %s207 = sphi %s190, %s190
              $region43: #{complex_wn_cell.4} parent=39 // loop_header_branch
                %204 = sbr.rel (%p202) target = $region47
              $region44: #{complex_wn_cell.4} parent=39 // loop_body
                %v208 = vld [vmem:[%s206] sm:$0xf]
                %209 = vst [vmem:[%s207] sm:$0xf] %v208
                %v210 = vld [vmem:[%s206 + $0x8] sm:$0xf]
                %211 = vst [vmem:[%s207 + $0x4] sm:$0xf] %v210
              $region45: #{complex_wn_cell.4} parent=39 // loop_footer
                %s205 = sadd.s32 1, %s201
              $region46: #{complex_wn_cell.4} parent=39 // loop_footer_branch
                %200 = sbr.rel target = $region42
              $region47: #{complex_wn_cell.4} parent=39 // loop_exit
                _
            $region40: #{complex_wn_cell.4} parent=31 // pred_fallthru
              _
          $region32: #{complex_wn_cell.4} parent=27 // pred_fallthru
            _
          %235 = vnop
        $region28: #{complex_wn_cell.4} parent=23 // pred_fallthru
          _
        // Predicated region
        $region66: #{complex_wn_cell.4} parent=23 // pred_check
          %p236 = pneg %p64
        $region67: #{complex_wn_cell.4} parent=23 // pred_check_branch
          %238 = sbr.rel (%p236) target = $region69
        $region68: #{complex_wn_cell.4} parent=23 // pred_region
          %s239 = sand.u32 %s54, 1
          %s240 = sand.u32 %s54, 1
          %s241 = smul.addr %s240, 8
          %s242 = scalar_lea.vmem [#allocation4], %s241
          %s243 = sadd.s32 %s12, 1
          %p244 = scmp.lt.s32.totalorder %s243, 1
          %s245 = scalar_select %p244, %s243, 1
          %s246 = smul.addr %s245, 4
          %s247 = scalar_lea.vmem %s1, %s246
          // Predicated region
          $region70: #{complex_wn_cell.4} parent=68 // pred_check
            _
          $region71: #{complex_wn_cell.4} parent=68 // pred_check_branch
            %249 = sbr.rel (0) target = $region73
          $region72: #{complex_wn_cell.4} parent=68 // pred_region
            // Predicated region
            $region74: #{complex_wn_cell.4} parent=72 // pred_check
              _
            $region75: #{complex_wn_cell.4} parent=72 // pred_check_branch
              %251 = sbr.rel target = $region77
            $region76: #{complex_wn_cell.4} parent=72 // pred_region
              // Predicated region
              $region89: #{complex_wn_cell.4} parent=76 // pred_check
                _
              $region90: #{complex_wn_cell.4} parent=76 // pred_check_branch
                %268 = sbr.rel (0) target = $region92
              $region91: #{complex_wn_cell.4} parent=76 // pred_region
                loop: start=0, step=1, limit=1
                $region93: #{complex_wn_cell.4} parent=91 // loop_pre_header
                  _
                $region94: #{complex_wn_cell.4} parent=91 // loop_header
                  %s270 = sphi 0, %s274
                  %p271 = scmp.ge.s32.totalorder %s270, 1
                  %s275 = sphi %s247, %s247
                  %s276 = sphi %s242, %s242
                $region95: #{complex_wn_cell.4} parent=91 // loop_header_branch
                  %273 = sbr.rel (%p271) target = $region99
                $region96: #{complex_wn_cell.4} parent=91 // loop_body
                  _
                $region97: #{complex_wn_cell.4} parent=91 // loop_footer
                  %s274 = sadd.s32 1, %s270
                $region98: #{complex_wn_cell.4} parent=91 // loop_footer_branch
                  %269 = sbr.rel target = $region94
                $region99: #{complex_wn_cell.4} parent=91 // loop_exit
                  _
                loop: start=0, step=1, limit=1
                $region100: #{complex_wn_cell.4} parent=91 // loop_pre_header
                  _
                $region101: #{complex_wn_cell.4} parent=91 // loop_header
                  %s279 = sphi 0, %s283
                  %p280 = scmp.ge.s32.totalorder %s279, 1
                  %s284 = sphi %s247, %s247
                  %s285 = sphi %s242, %s242
                $region102: #{complex_wn_cell.4} parent=91 // loop_header_branch
                  %282 = sbr.rel (%p280) target = $region106
                $region103: #{complex_wn_cell.4} parent=91 // loop_body
                  %v286 = vld [vmem:[%s284] sm:$0xf]
                  %287 = vst [vmem:[%s285] sm:$0xf] %v286
                  %v288 = vld [vmem:[%s284 + $0x8] sm:$0xf]
                  %289 = vst [vmem:[%s285 + $0x4] sm:$0xf] %v288
                $region104: #{complex_wn_cell.4} parent=91 // loop_footer
                  %s283 = sadd.s32 1, %s279
                $region105: #{complex_wn_cell.4} parent=91 // loop_footer_branch
                  %278 = sbr.rel target = $region101
                $region106: #{complex_wn_cell.4} parent=91 // loop_exit
                  _
              $region92: #{complex_wn_cell.4} parent=76 // pred_fallthru
                _
            $region77: #{complex_wn_cell.4} parent=72 // pred_fallthru
              _
            // Predicated region
            $region78: #{complex_wn_cell.4} parent=72 // pred_check
              _
            $region79: #{complex_wn_cell.4} parent=72 // pred_check_branch
              %253 = sbr.rel (0) target = $region81
            $region80: #{complex_wn_cell.4} parent=72 // pred_region
              loop: start=0, step=1, limit=1
              $region82: #{complex_wn_cell.4} parent=80 // loop_pre_header
                _
              $region83: #{complex_wn_cell.4} parent=80 // loop_header
                %s256 = sphi 0, %s260
                %p257 = scmp.ge.s32.totalorder %s256, 1
                %s261 = sphi %s247, %s247
                %s262 = sphi %s242, %s242
              $region84: #{complex_wn_cell.4} parent=80 // loop_header_branch
                %259 = sbr.rel (%p257) target = $region88
              $region85: #{complex_wn_cell.4} parent=80 // loop_body
                %v263 = vld [vmem:[%s261] sm:$0xf]
                %264 = vst [vmem:[%s262] sm:$0xf] %v263
                %v265 = vld [vmem:[%s261 + $0x8] sm:$0xf]
                %266 = vst [vmem:[%s262 + $0x4] sm:$0xf] %v265
              $region86: #{complex_wn_cell.4} parent=80 // loop_footer
                %s260 = sadd.s32 1, %s256
              $region87: #{complex_wn_cell.4} parent=80 // loop_footer_branch
                %255 = sbr.rel target = $region83
              $region88: #{complex_wn_cell.4} parent=80 // loop_exit
                _
            $region81: #{complex_wn_cell.4} parent=72 // pred_fallthru
              _
          $region73: #{complex_wn_cell.4} parent=68 // pred_fallthru
            _
          %290 = vnop
        $region69: #{complex_wn_cell.4} parent=23 // pred_fallthru
          _
      $region24: #{complex_wn_cell.4} parent=5 // pred_fallthru
        _
      %p291 = scmp.le.s32.totalorder 1, %s12
      %p292 = scmp.lt.s32.totalorder %s12, 3
      %p293 = pnand %p291, %p292
      %p294 = pneg %p293
      // Predicated region
      $region107: #{complex_wn_cell.4} parent=5 // pred_check
        _
      $region108: #{complex_wn_cell.4} parent=5 // pred_check_branch
        %296 = sbr.rel (%p293) target = $region110
      $region109: #{complex_wn_cell.4} parent=5 // pred_region
        %s297 = ssub.s32 %s12, 1
        %s298 = sand.u32 %s25, 1
        %s299 = sand.u32 %s25, 1
        %s300 = smul.addr %s299, 8
        %s301 = scalar_lea.vmem [#allocation3], %s300
        // Predicated region
        $region111: #{complex_wn_cell.4} parent=109 // pred_check
          %p302 = pneg %p38
        $region112: #{complex_wn_cell.4} parent=109 // pred_check_branch
          %304 = sbr.rel (%p302) target = $region114
        $region113: #{complex_wn_cell.4} parent=109 // pred_region
          _
        $region114: #{complex_wn_cell.4} parent=109 // pred_fallthru
          _
        %s305 = sand.u32 %s57, 1
        %s306 = sand.u32 %s57, 1
        %s307 = smul.addr %s306, 8
        %s308 = scalar_lea.vmem [#allocation4], %s307
        // Predicated region
        $region115: #{complex_wn_cell.4} parent=109 // pred_check
          %p309 = pneg %p70
        $region116: #{complex_wn_cell.4} parent=109 // pred_check_branch
          %311 = sbr.rel (%p309) target = $region118
        $region117: #{complex_wn_cell.4} parent=109 // pred_region
          _
        $region118: #{complex_wn_cell.4} parent=109 // pred_fallthru
          _
        %s312 = sand.u32 %s25, 1
        %s313 = sand.u32 %s25, 1
        %s314 = smul.addr %s313, 8
        %s315 = scalar_lea.vmem [#allocation3], %s314
        %p316 = pneg %p38
        %p317 = pneg %p35
        %s318 = sand.u32 %s57, 1
        %s319 = sand.u32 %s57, 1
        %s320 = smul.addr %s319, 8
        %s321 = scalar_lea.vmem [#allocation4], %s320
        %p322 = pneg %p70
        %p323 = pneg %p67
        %p324 = pneg %p91
        %p325 = pneg %p88
        %p326 = pneg %p112
        %p327 = pneg %p109
        %p328 = pneg %p138
        %p329 = pneg %p135
        %s330 = sand.u32 %s125, 1
        %s331 = sand.u32 %s125, 1
        %s332 = smul.addr %s331, 8
        %s333 = scalar_lea.vmem [#allocation5], %s332
        %p334 = pneg %p159
        %p335 = pneg %p156
        %s336 = sadd.s32 %s17, 1
        %p337 = scmp.lt.s32.totalorder %s336, 1
        %s338 = scalar_select %p337, %s336, 1
        %v340 = vld [vmem:[%s2] sm:$0xff]
        %v341 = vld [vmem:[%s301] sm:$0xf]
        %v342 = vld [vmem:[%s301 + $0x4] sm:$0xf]
        %v343 = vunpack.c.l.bf16 %v341
        %v344 = vunpack.c.l.bf16 %v342
        %v345 = vlaneseq
        %v346 = vshrl.u32 %v345, 7
        %v347 = vsub.s32 0, %v346
        %v348 = vrot.slane %v340, %v347
        %v349 = vmul.f32 %v348, %v343
        %v350 = vmul.f32 %v348, %v344
        %v351 = vlaneseq
        %v352 = vshrl.u32 %v351, 7
        %v353 = vsub.s32 1, %v352
        %v354 = vrot.slane %v340, %v353
        %357 = vrot.lane.b32.xlu0 %v343, 112
        %v358 = vpop.permute.xlu0 %357
        %359 = vrot.lane.b32.xlu0 %v344, 112
        %v360 = vpop.permute.xlu0 %359
        %v363 = vmul.f32 %v354, %v358
        %v364 = vmul.f32 %v354, %v360
        %v365 = vadd.f32 %v349, %v363
        %v366 = vadd.f32 %v350, %v364
        %v367 = vlaneseq
        %v368 = vshrl.u32 %v367, 7
        %v369 = vsub.s32 2, %v368
        %v370 = vrot.slane %v340, %v369
        %v371 = vadd.f32 %v365, %v370
        %v372 = vadd.f32 %v366, %v370
        %373 = vrot.lane.b32.xlu0 %v343, 16
        %v374 = vpop.permute.xlu0 %373
        %375 = vrot.lane.b32.xlu0 %v344, 16
        %v376 = vpop.permute.xlu0 %375
        %v379 = vmul.f32 %v348, %v374
        %v380 = vmul.f32 %v348, %v376
        %v381 = vmul.f32 %v354, %v343
        %v382 = vmul.f32 %v354, %v344
        %v383 = vadd.f32 %v379, %v381
        %v384 = vadd.f32 %v380, %v382
        %v385 = vadd.f32 %v383, %v370
        %v386 = vadd.f32 %v384, %v370
        %v387 = vtanh.pop %v371
        %v388 = vtanh.pop %v372
        %v389 = vsub.f32 0.0, %v371
        %v390 = vsub.f32 0.0, %v372
        %v391 = vmul.f32 %v389, 1.442695
        %v392 = vpow.pop %v391
        %v393 = vmul.f32 %v390, 1.442695
        %v394 = vpow.pop %v393
        %v395 = vadd.f32 %v392, 1.0
        %v396 = vadd.f32 %v394, 1.0
        %v397 = vrcp.pop %v395
        %v398 = vrcp.pop %v396
        %401 = vrot.lane.b32.xlu0 %v397, 120
        %v402 = vpop.permute.xlu0 %401
        %403 = vrot.lane.b32.xlu0 %v398, 120
        %v404 = vpop.permute.xlu0 %403
        %v407 = vmul.f32 %v387, %v402
        %v408 = vmul.f32 %v388, %v404
        %v409 = vtanh.pop %v385
        %v410 = vtanh.pop %v386
        %v411 = vsub.f32 0.0, %v385
        %v412 = vsub.f32 0.0, %v386
        %v413 = vmul.f32 %v411, 1.442695
        %v414 = vpow.pop %v413
        %v415 = vmul.f32 %v412, 1.442695
        %v416 = vpow.pop %v415
        %v417 = vadd.f32 %v414, 1.0
        %v418 = vadd.f32 %v416, 1.0
        %v419 = vrcp.pop %v417
        %v420 = vrcp.pop %v418
        %423 = vrot.lane.b32.xlu0 %v419, 120
        %v424 = vpop.permute.xlu0 %423
        %425 = vrot.lane.b32.xlu0 %v420, 120
        %v426 = vpop.permute.xlu0 %425
        %v429 = vmul.f32 %v409, %v424
        %v430 = vmul.f32 %v410, %v426
        %433 = vrot.lane.b32.xlu0 %v429, 120
        %v434 = vpop.permute.xlu0 %433
        %435 = vrot.lane.b32.xlu0 %v430, 120
        %v436 = vpop.permute.xlu0 %435
        %vm439 = vcmask 64512
        %v440 = vsel %vm439, %v407, %v434
        %v441 = vsel %vm439, %v408, %v436
        %v442 = vpack.c.bf16 %v440, %v440
        %v443 = vpack.c.bf16 %v441, %v441
        %v444 = vld [vmem:[%s308] sm:$0x1]
        %v445 = vld [vmem:[%s308 + $0x4] sm:$0x1]
        %v446 = vunpack.c.l.bf16 %v444
        %v447 = vunpack.c.l.bf16 %v445
        %v448 = vmul.f32 %v340, %v446
        %v449 = vmul.f32 %v340, %v447
        %v452 = vrot.slane %v446, 7
        %v453 = vrot.slane %v447, 7
        %454 = vrot.lane.b32.xlu0 %v452, 112
        %v455 = vpop.permute.xlu0 %454
        %456 = vrot.lane.b32.xlu0 %v453, 112
        %v457 = vpop.permute.xlu0 %456
        %v460 = vmul.f32 %v340, %v455
        %v461 = vmul.f32 %v340, %v457
        %v464 = vrot.slane %v460, 1
        %v465 = vrot.slane %v461, 1
        %v468 = vadd.f32 %v448, %v464
        %v469 = vadd.f32 %v449, %v465
        %v471 = vrot.slane %v340, 2
        %v473 = vadd.f32 %v468, %v471
        %v474 = vadd.f32 %v469, %v471
        %475 = vrot.lane.b32.xlu0 %v446, 16
        %v476 = vpop.permute.xlu0 %475
        %477 = vrot.lane.b32.xlu0 %v447, 16
        %v478 = vpop.permute.xlu0 %477
        %v481 = vmul.f32 %v340, %v476
        %v482 = vmul.f32 %v340, %v478
        %v485 = vmul.f32 %v340, %v452
        %v486 = vmul.f32 %v340, %v453
        %v489 = vrot.slane %v485, 1
        %v490 = vrot.slane %v486, 1
        %v493 = vadd.f32 %v481, %v489
        %v494 = vadd.f32 %v482, %v490
        %v495 = vadd.f32 %v493, %v471
        %v496 = vadd.f32 %v494, %v471
        %v497 = vtanh.pop %v473
        %v498 = vtanh.pop %v474
        %v499 = vsub.f32 0.0, %v473
        %v500 = vsub.f32 0.0, %v474
        %v501 = vmul.f32 %v499, 1.442695
        %v502 = vpow.pop %v501
        %v503 = vmul.f32 %v500, 1.442695
        %v504 = vpow.pop %v503
        %v505 = vadd.f32 %v502, 1.0
        %v506 = vadd.f32 %v504, 1.0
        %v507 = vrcp.pop %v505
        %v508 = vrcp.pop %v506
        %511 = vrot.lane.b32.xlu0 %v507, 120
        %v512 = vpop.permute.xlu0 %511
        %513 = vrot.lane.b32.xlu0 %v508, 120
        %v514 = vpop.permute.xlu0 %513
        %v517 = vmul.f32 %v497, %v512
        %v518 = vmul.f32 %v498, %v514
        %v519 = vtanh.pop %v495
        %v520 = vtanh.pop %v496
        %v521 = vsub.f32 0.0, %v495
        %v522 = vsub.f32 0.0, %v496
        %v523 = vmul.f32 %v521, 1.442695
        %v524 = vpow.pop %v523
        %v525 = vmul.f32 %v522, 1.442695
        %v526 = vpow.pop %v525
        %v527 = vadd.f32 %v524, 1.0
        %v528 = vadd.f32 %v526, 1.0
        %v529 = vrcp.pop %v527
        %v530 = vrcp.pop %v528
        %533 = vrot.lane.b32.xlu0 %v529, 120
        %v534 = vpop.permute.xlu0 %533
        %535 = vrot.lane.b32.xlu0 %v530, 120
        %v536 = vpop.permute.xlu0 %535
        %v539 = vmul.f32 %v519, %v534
        %v540 = vmul.f32 %v520, %v536
        %543 = vrot.lane.b32.xlu0 %v539, 120
        %v544 = vpop.permute.xlu0 %543
        %545 = vrot.lane.b32.xlu0 %v540, 120
        %v546 = vpop.permute.xlu0 %545
        %v549 = vsel %vm439, %v517, %v544
        %v550 = vsel %vm439, %v518, %v546
        %v551 = vpack.c.bf16 %v549, %v549
        %v552 = vpack.c.bf16 %v550, %v550
        %v555 = vunpack.c.l.b16 %v442
        %v556 = vunpack.c.l.b16 %v443
        %v557 = vpack.c.b16 %v555, %v555
        %v558 = vpack.c.b16 %v556, %v556
        %v560 = vshrl.u32 %v557, 16
        %v562 = vrot.slane %v560, 7
        %v563 = vshll.u32 %v557, 16
        %v565 = vor.u32 %v562, %v563
        %v566 = vrot.slane %v562, 4
        %v568 = vshrl.u32 %v558, 16
        %v570 = vrot.slane %v568, 7
        %v571 = vshll.u32 %v558, 16
        %v573 = vor.u32 %v570, %v571
        %v574 = vrot.slane %v570, 4
        %vm579 = vcmask 125952
        %vm580 = vsmask.f32 7938
        %vm581 = vmand %vm579, %vm580
        %v582 = vld [vmem:[#allocation2] sm:$0xf]
        %v583 = vsel %vm581, %v565, %v582
        %584 = vst [vmem:[#allocation2] sm:$0xf] %v583
        %vm585 = vcmask 122880
        %vm586 = vsmask.f32 256
        %vm587 = vmand %vm585, %vm586
        %v588 = vld [vmem:[#allocation2 + $0x4] sm:$0x1]
        %v589 = vsel %vm587, %v566, %v588
        %590 = vst [vmem:[#allocation2 + $0x4] sm:$0x1] %v589
        %v591 = vld [vmem:[#allocation2 + $0x8] sm:$0xf]
        %v592 = vsel %vm581, %v573, %v591
        %593 = vst [vmem:[#allocation2 + $0x8] sm:$0xf] %v592
        %v594 = vld [vmem:[#allocation2 + $0xc] sm:$0x1]
        %v595 = vsel %vm587, %v574, %v594
        %596 = vst [vmem:[#allocation2 + $0xc] sm:$0x1] %v595
        %p597 = scmp.eq.s32.totalorder %s17, 0
        // Predicated region
        $region119: #{complex_wn_cell.4} parent=109 // pred_check
          %p598 = pneg %p597
        $region120: #{complex_wn_cell.4} parent=109 // pred_check_branch
          %600 = sbr.rel (%p598) target = $region122
        $region121: #{complex_wn_cell.4} parent=109 // pred_region
          %v601 = vld [vmem:[#allocation2] sm:$0x1]
          %v602 = vsel %vm587, 0, %v601
          %603 = vst [vmem:[#allocation2] sm:$0x1] %v602
          %v604 = vld [vmem:[#allocation2 + $0x8] sm:$0x1]
          %v605 = vsel %vm587, 0, %v604
          %606 = vst [vmem:[#allocation2 + $0x8] sm:$0x1] %v605
        $region122: #{complex_wn_cell.4} parent=109 // pred_fallthru
          _
        %p607 = scmp.eq.s32.totalorder %s17, 1
        %s608 = scalar_select %p607, 1, 0
        %v609 = vstv %s608
        %vm610 = vcmp.eq.s32.totalorder %v609, 1
        %v611 = vsel %vm610, 0, %v551
        %v612 = vsel %vm610, 0, %v552
        %v615 = vunpack.c.l.b16 %v611
        %v616 = vunpack.c.l.b16 %v612
        %v617 = vpack.c.b16 %v615, %v615
        %v618 = vpack.c.b16 %v616, %v616
        %v620 = vshll.u32 %v617, 16
        %v623 = vshll.u32 %v618, 16
        %vm627 = vmand %vm585, %vm580
        %v628 = vld [vmem:[#allocation2 + $0x4] sm:$0x1]
        %v629 = vsel %vm627, %v620, %v628
        %630 = vst [vmem:[#allocation2 + $0x4] sm:$0x1] %v629
        %v631 = vld [vmem:[#allocation2 + $0xc] sm:$0x1]
        %v632 = vsel %vm627, %v623, %v631
        %633 = vst [vmem:[#allocation2 + $0xc] sm:$0x1] %v632
        %v634 = vld [vmem:[#allocation2] sm:$0xf]
        %v635 = vld [vmem:[#allocation2 + $0x8] sm:$0xf]
        %v636 = vld [vmem:[#allocation2 + $0x4] sm:$0x1]
        %v637 = vld [vmem:[#allocation2 + $0xc] sm:$0x1]
        %v638 = vld [vmem:[#allocation2] sm:$0xe]
        %v639 = vld [vmem:[#allocation2 + $0x8] sm:$0xe]
        %v644 = vunpack.c.l.b16 %v634
        %v645 = vunpack.c.l.b16 %v636
        %v646 = vunpack.c.l.b16 %v635
        %v647 = vunpack.c.l.b16 %v637
        %v648 = vpack.c.b16 %v645, %v644
        %v649 = vpack.c.b16 %v647, %v646
        %v651 = vshrl.u32 %v648, 16
        %v653 = vshll.u32 %v648, 16
        %v655 = vrot.slane %v653, 1
        %v656 = vor.u32 %v651, %v655
        %v658 = vshrl.u32 %v649, 16
        %v660 = vshll.u32 %v649, 16
        %v662 = vrot.slane %v660, 1
        %v663 = vor.u32 %v658, %v662
        %664 = vrot.lane.b32.xlu0 %v656, 16
        %v665 = vpop.permute.xlu0 %664
        %666 = vrot.lane.b32.xlu0 %v663, 16
        %v667 = vpop.permute.xlu0 %666
        %v670 = vunpack.c.l.b16 %v638
        %v671 = vunpack.c.l.b16 %v639
        %v672 = vpack.c.b16 %v645, %v670
        %v673 = vpack.c.b16 %v647, %v671
        %v674 = vrot.slane %v672, 1
        %v675 = vrot.slane %v673, 1
        %676 = vrot.lane.b32.xlu0 %v674, 32
        %v677 = vpop.permute.xlu0 %676
        %678 = vrot.lane.b32.xlu0 %v675, 32
        %v679 = vpop.permute.xlu0 %678
        %vm680 = vcmask 130048
        %v683 = vsel %vm680, %v634, %v665
        %v686 = vsel %vm680, %v635, %v667
        %vm687 = vcmask 261120
        %v689 = vsel %vm687, %v683, %v677
        %v691 = vsel %vm687, %v686, %v679
        %v692 = vld [vmem:[%s3] sm:$0xf]
        %v693 = vld [vmem:[%s3 + $0x4] sm:$0xf]
        %v694 = vld [vmem:[%s3 + $0x8] sm:$0xf]
        %v695 = vld [vmem:[%s3 + $0xc] sm:$0xf]
        %v696 = vld [vmem:[%s3 + $0x10] sm:$0xf]
        %v697 = vld [vmem:[%s3 + $0x14] sm:$0xf]
        %v700 = vunpack.c.l.b16 %v689
        %v701 = vunpack.c.l.b16 %v691
        %v702 = vpack.c.b16 %v701, %v700
        %v709 = vunpack.c.l.b16 %v692
        %v710 = vunpack.c.l.b16 %v693
        %v711 = vunpack.c.l.b16 %v694
        %v712 = vunpack.c.l.b16 %v695
        %v713 = vunpack.c.l.b16 %v696
        %v714 = vunpack.c.l.b16 %v697
        %v715 = vpack.c.b16 %v710, %v709
        %v716 = vpack.c.b16 %v712, %v711
        %v717 = vpack.c.b16 %v714, %v713
        %vm721 = vcmask 392192
        %v723 = vsel %vm721, %v702, 0
        %725 = vmatprep.subr.bf16.mxu0 0
        %726 = vmatpush1.bf16.msra.mxu0 %v715
        %727 = vmatprep.subr.bf16.mxu0 0
        %728 = vmatpush1.bf16.msra.mxu0 %v716
        %729 = vmatprep.subr.bf16.mxu0 0
        %730 = vmatpush1.bf16.msra.mxu0 %v717
        %731 = vmatprep.subr.bf16.mxu0 0
        %732 = vmatpush1.bf16.msra.mxu0 0
        %733 = vmatprep.subr.bf16.mxu0 0
        %734 = vmatpush1.bf16.msra.mxu0 0
        %735 = vmatprep.subr.bf16.mxu0 0
        %736 = vmatpush1.bf16.msra.mxu0 0
        %737 = vmatprep.subr.bf16.mxu0 0
        %738 = vmatpush1.bf16.msra.mxu0 0
        %739 = vmatprep.subr.bf16.mxu0 0
        %740 = vmatpush1.bf16.msra.mxu0 0
        %741 = vmatprep.subr.bf16.mxu0 0
        %742 = vmatpush1.bf16.msra.mxu0 0
        %743 = vmatprep.subr.bf16.mxu0 0
        %744 = vmatpush1.bf16.msra.mxu0 0
        %745 = vmatprep.subr.bf16.mxu0 0
        %746 = vmatpush1.bf16.msra.mxu0 0
        %747 = vmatprep.subr.bf16.mxu0 0
        %748 = vmatpush1.bf16.msra.mxu0 0
        %749 = vmatprep.subr.bf16.mxu0 0
        %750 = vmatpush1.bf16.msra.mxu0 0
        %751 = vmatprep.subr.bf16.mxu0 0
        %752 = vmatpush1.bf16.msra.mxu0 0
        %753 = vmatprep.subr.bf16.mxu0 0
        %754 = vmatpush1.bf16.msra.mxu0 0
        %755 = vmatprep.subr.bf16.mxu0 0
        %756 = vmatpush1.bf16.msra.mxu0 0
        %757 = vmatprep.mubr.bf16.mxu0 0
        %758 = vmatmul.mubr.bf16.gmra.mrb[0].mxu0 %v723
        %v759 = vpop.f32.mrb[0].mxu0
        %v760 = vadd.f32 0.0, %v759
        %v761 = vpop.f32.mrb[0].mxu0
        %v762 = vpop.f32.mrb[0].mxu0
        %v763 = vadd.f32 0.0, %v762
        %v764 = vpop.f32.mrb[0].mxu0
        %765 = vdwg.mxu0
        %v766 = vpack.c.bf16 %v760, %v760
        %v767 = vpack.c.bf16 %v763, %v763
        %vm768 = vcmask 388096
        %769 = vst.msk [vmem:[%s333] sm:$0xf] %vm768, %v766
        %770 = vst.msk [vmem:[%s333 + $0x4] sm:$0xf] %vm768, %v767
        %v771 = vsel %vm721, %v760, 0.0
        %v772 = vsel %vm721, %v763, 0.0
        %v773 = vadd.f32 %v771, %v772
        %v774 = vrot.slane %v773, 4
        %v775 = vadd.f32 %v773, %v774
        %v776 = vrot.slane %v775, 2
        %v777 = vadd.f32 %v775, %v776
        %v778 = vrot.slane %v777, 1
        %v779 = vadd.f32 %v777, %v778
        %v780 = vmul.f32 %v760, %v760
        %v781 = vmul.f32 %v763, %v763
        %v782 = vsel %vm721, %v780, 0.0
        %v783 = vsel %vm721, %v781, 0.0
        %v784 = vadd.f32 %v782, %v783
        %v785 = vrot.slane %v784, 4
        %v786 = vadd.f32 %v784, %v785
        %v787 = vrot.slane %v786, 2
        %v788 = vadd.f32 %v786, %v787
        %v789 = vrot.slane %v788, 1
        %v790 = vadd.f32 %v788, %v789
        %793 = vrot.lane.b32.xlu0 %v760, 104
        %v794 = vpop.permute.xlu0 %793
        %795 = vrot.lane.b32.xlu0 %v763, 104
        %v796 = vpop.permute.xlu0 %795
        %v799 = vmul.f32 %v760, %v794
        %v800 = vmul.f32 %v763, %v796
        %vm801 = vcmask 195584
        %v802 = vsel %vm801, %v799, 0.0
        %v803 = vsel %vm801, %v800, 0.0
        %v804 = vadd.f32 %v802, %v803
        %v805 = vrot.slane %v804, 4
        %v806 = vadd.f32 %v804, %v805
        %v807 = vrot.slane %v806, 2
        %v808 = vadd.f32 %v806, %v807
        %v809 = vrot.slane %v808, 1
        %v810 = vadd.f32 %v808, %v809
        %v811 = vsel %vm801, %v810, 0.0
        %v813 = vrot.slane %v811, 6
        %vm815 = vcmask 1040384
        %v816 = vsel %vm815, %v779, %v790
        %vm817 = vcmask 1041408
        %v818 = vsel %vm817, %v816, %v813
        %vm819 = vcmask 1042432
        %v820 = vsel %vm819, %v818, 0.0
        // Predicated region
        $region123: #{complex_wn_cell.4} parent=109 // pred_check
          %p821 = pneg %p597
        $region124: #{complex_wn_cell.4} parent=109 // pred_check_branch
          %823 = sbr.rel (%p821) target = $region126
        $region125: #{complex_wn_cell.4} parent=109 // pred_region
          %824 = vst.msk [vmem:[%s5] sm:$0xff] %vm721, 0.0
        $region126: #{complex_wn_cell.4} parent=109 // pred_fallthru
          _
        %v825 = vld [vmem:[%s5] sm:$0xff]
        %v826 = vadd.f32 %v825, %v820
        %827 = vst.msk [vmem:[%s5] sm:$0xff] %vm721, %v826
        %v828 = vld [vmem:[#allocation2 + $0x4] sm:$0x1]
        %v829 = vld [vmem:[#allocation2 + $0xc] sm:$0x1]
        %v830 = vld [vmem:[#allocation2] sm:$0x1]
        %v831 = vsel %vm587, %v828, %v830
        %832 = vst [vmem:[#allocation2] sm:$0x1] %v831
        %v833 = vld [vmem:[#allocation2 + $0x8] sm:$0x1]
        %v834 = vsel %vm587, %v829, %v833
        %835 = vst [vmem:[#allocation2 + $0x8] sm:$0x1] %v834
        %s836 = sand.u32 %s125, 1
        %s837 = sand.u32 %s125, 1
        %s838 = smul.addr %s837, 8
        %s839 = scalar_lea.vmem [#allocation5], %s838
        // Predicated region
        $region127: #{complex_wn_cell.4} parent=109 // pred_check
          %p840 = pneg %p135
        $region128: #{complex_wn_cell.4} parent=109 // pred_check_branch
          %842 = sbr.rel (%p840) target = $region130
        $region129: #{complex_wn_cell.4} parent=109 // pred_region
          %s843 = smul.addr %s17, 4
          %s844 = scalar_lea.vmem %s4, %s843
          // Predicated region
          $region131: #{complex_wn_cell.4} parent=129 // pred_check
            _
          $region132: #{complex_wn_cell.4} parent=129 // pred_check_branch
            %846 = sbr.rel (0) target = $region134
          $region133: #{complex_wn_cell.4} parent=129 // pred_region
            // Predicated region
            $region135: #{complex_wn_cell.4} parent=133 // pred_check
              _
            $region136: #{complex_wn_cell.4} parent=133 // pred_check_branch
              %848 = sbr.rel target = $region138
            $region137: #{complex_wn_cell.4} parent=133 // pred_region
              // Predicated region
              $region150: #{complex_wn_cell.4} parent=137 // pred_check
                _
              $region151: #{complex_wn_cell.4} parent=137 // pred_check_branch
                %865 = sbr.rel (0) target = $region153
              $region152: #{complex_wn_cell.4} parent=137 // pred_region
                loop: start=0, step=1, limit=1
                $region154: #{complex_wn_cell.4} parent=152 // loop_pre_header
                  _
                $region155: #{complex_wn_cell.4} parent=152 // loop_header
                  %s867 = sphi 0, %s871
                  %p868 = scmp.ge.s32.totalorder %s867, 1
                  %s872 = sphi %s839, %s839
                  %s873 = sphi %s844, %s844
                $region156: #{complex_wn_cell.4} parent=152 // loop_header_branch
                  %870 = sbr.rel (%p868) target = $region160
                $region157: #{complex_wn_cell.4} parent=152 // loop_body
                  _
                $region158: #{complex_wn_cell.4} parent=152 // loop_footer
                  %s871 = sadd.s32 1, %s867
                $region159: #{complex_wn_cell.4} parent=152 // loop_footer_branch
                  %866 = sbr.rel target = $region155
                $region160: #{complex_wn_cell.4} parent=152 // loop_exit
                  _
                loop: start=0, step=1, limit=1
                $region161: #{complex_wn_cell.4} parent=152 // loop_pre_header
                  _
                $region162: #{complex_wn_cell.4} parent=152 // loop_header
                  %s876 = sphi 0, %s880
                  %p877 = scmp.ge.s32.totalorder %s876, 1
                  %s881 = sphi %s839, %s839
                  %s882 = sphi %s844, %s844
                $region163: #{complex_wn_cell.4} parent=152 // loop_header_branch
                  %879 = sbr.rel (%p877) target = $region167
                $region164: #{complex_wn_cell.4} parent=152 // loop_body
                  %v883 = vld [vmem:[%s881] sm:$0xf]
                  %884 = vst [vmem:[%s882] sm:$0xf] %v883
                  %v885 = vld [vmem:[%s881 + $0x4] sm:$0xf]
                  %886 = vst [vmem:[%s882 + $0x8] sm:$0xf] %v885
                $region165: #{complex_wn_cell.4} parent=152 // loop_footer
                  %s880 = sadd.s32 1, %s876
                $region166: #{complex_wn_cell.4} parent=152 // loop_footer_branch
                  %875 = sbr.rel target = $region162
                $region167: #{complex_wn_cell.4} parent=152 // loop_exit
                  _
              $region153: #{complex_wn_cell.4} parent=137 // pred_fallthru
                _
            $region138: #{complex_wn_cell.4} parent=133 // pred_fallthru
              _
            // Predicated region
            $region139: #{complex_wn_cell.4} parent=133 // pred_check
              _
            $region140: #{complex_wn_cell.4} parent=133 // pred_check_branch
              %850 = sbr.rel (0) target = $region142
            $region141: #{complex_wn_cell.4} parent=133 // pred_region
              loop: start=0, step=1, limit=1
              $region143: #{complex_wn_cell.4} parent=141 // loop_pre_header
                _
              $region144: #{complex_wn_cell.4} parent=141 // loop_header
                %s853 = sphi 0, %s857
                %p854 = scmp.ge.s32.totalorder %s853, 1
                %s858 = sphi %s839, %s839
                %s859 = sphi %s844, %s844
              $region145: #{complex_wn_cell.4} parent=141 // loop_header_branch
                %856 = sbr.rel (%p854) target = $region149
              $region146: #{complex_wn_cell.4} parent=141 // loop_body
                %v860 = vld [vmem:[%s858] sm:$0xf]
                %861 = vst [vmem:[%s859] sm:$0xf] %v860
                %v862 = vld [vmem:[%s858 + $0x4] sm:$0xf]
                %863 = vst [vmem:[%s859 + $0x8] sm:$0xf] %v862
              $region147: #{complex_wn_cell.4} parent=141 // loop_footer
                %s857 = sadd.s32 1, %s853
              $region148: #{complex_wn_cell.4} parent=141 // loop_footer_branch
                %852 = sbr.rel target = $region144
              $region149: #{complex_wn_cell.4} parent=141 // loop_exit
                _
            $region142: #{complex_wn_cell.4} parent=133 // pred_fallthru
              _
          $region134: #{complex_wn_cell.4} parent=129 // pred_fallthru
            _
          %887 = vnop
        $region130: #{complex_wn_cell.4} parent=109 // pred_fallthru
          _
        // Predicated region
        $region168: #{complex_wn_cell.4} parent=109 // pred_check
          %p888 = pneg %p156
        $region169: #{complex_wn_cell.4} parent=109 // pred_check_branch
          %890 = sbr.rel (%p888) target = $region171
        $region170: #{complex_wn_cell.4} parent=109 // pred_region
          _
        $region171: #{complex_wn_cell.4} parent=109 // pred_fallthru
          _
        // Predicated region
        $region172: #{complex_wn_cell.4} parent=109 // pred_check
          %p891 = pneg %p156
        $region173: #{complex_wn_cell.4} parent=109 // pred_check_branch
          %893 = sbr.rel (%p891) target = $region175
        $region174: #{complex_wn_cell.4} parent=109 // pred_region
          _
        $region175: #{complex_wn_cell.4} parent=109 // pred_fallthru
          _
      $region110: #{complex_wn_cell.4} parent=5 // pred_fallthru
        _
      %p894 = scmp.le.s32.totalorder 2, %s12
      // Predicated region
      $region176: #{complex_wn_cell.4} parent=5 // pred_check
        %p895 = pneg %p894
      $region177: #{complex_wn_cell.4} parent=5 // pred_check_branch
        %897 = sbr.rel (%p895) target = $region179
      $region178: #{complex_wn_cell.4} parent=5 // pred_region
        %s898 = ssub.s32 %s12, 2
        // Predicated region
        $region180: #{complex_wn_cell.4} parent=178 // pred_check
          %p899 = pneg %p141
        $region181: #{complex_wn_cell.4} parent=178 // pred_check_branch
          %901 = sbr.rel (%p899) target = $region183
        $region182: #{complex_wn_cell.4} parent=178 // pred_region
          %s902 = sand.u32 %s126, 1
          %s903 = sand.u32 %s126, 1
          %s904 = smul.addr %s903, 8
          %s905 = scalar_lea.vmem [#allocation5], %s904
        $region183: #{complex_wn_cell.4} parent=178 // pred_fallthru
          _
      $region179: #{complex_wn_cell.4} parent=5 // pred_fallthru
        _
    $region6: #{complex_wn_cell.4} parent=1 // loop_footer
      %s16 = sadd.s32 1, %s12
    $region7: #{complex_wn_cell.4} parent=1 // loop_footer_branch
      %11 = sbr.rel target = $region3
    $region8: #{complex_wn_cell.4} parent=1 // loop_exit
      _

// kernel: complex_wn_cell.3
$region0: #{complex_wn_cell.3}
  #allocation0 [shape = 'u32[]', space=smem, size = 0x4, offset = 0x4, fixed_abs, tag = 'smem constant byte address 0x4 - core index']
  #allocation1 [shape = 'u32[144,128]{1,0:T(1,128)}', space=vmem, size = 0x12000, scoped, tag = 'internal scratch']
  #allocation2 [shape = 'bf16[2,10,16]{2,1,0:T(8,128)(2,1)}', space=vmem, size = 0x2000, scoped, tag = 'scratch operand']
  %s0 = inlined_call_operand.vmem [shape: f32[2,16,16], index: 0, kind: input, shape index: {}, may-alias: {0,1}]
  %s1 = inlined_call_operand.vmem [shape: f32[2,16,16], index: 1, kind: input, shape index: {}, may-alias: {0,1}]
  %s2 = inlined_call_operand.vmem [shape: bf16[48,32], index: 2, kind: input, shape index: {}]
  %s3 = inlined_call_operand.vmem [shape: bf16[2,16,32], index: 3, kind: output, shape index: {0}]
  %s4 = inlined_call_operand.vmem [shape: f32[8,32], index: 4, kind: output, shape index: {1}]
  %5 = xla_tuple %s3, %s4
  %s6 = sld [smem:[#allocation0]]
  $region174: #{complex_wn_cell.3} parent=0
    _
  %s8 = ssub.s32 1, %s6
  %s9 = scalar_select 0, %s8, %s6
  $region1: #{complex_wn_cell.3} parent=0
    #allocation3 [shape = 'u8[16384]{0}', space=vmem, size = 0x4000, scoped, tag = 'input window, operand 0']
    #allocation4 [shape = 'u8[16384]{0}', space=vmem, size = 0x4000, scoped, tag = 'input window, operand 1']
    #allocation5 [shape = 'u8[8192]{0}', space=vmem, size = 0x2000, scoped, tag = 'output window, operand 0']
    loop: start=0, step=1, limit=4
    $region2: #{complex_wn_cell.3} parent=1 // loop_pre_header
      _
    $region3: #{complex_wn_cell.3} parent=1 // loop_header
      %s11 = sphi 0, %s15
      %p12 = scmp.ge.s32.totalorder %s11, 4
      %s21 = sphi 0, %s23
      %s24 = sphi 0, %s21
      %s25 = sphi 0, %s24
      %s41 = sphi 0, %s25
      %s53 = sphi 0, %s55
      %s56 = sphi 0, %s53
      %s57 = sphi 0, %s56
      %s73 = sphi 0, %s57
      %s77 = sphi 0, %s77
      %s79 = sphi 0, %s77
      %s80 = sphi 0, %s79
      %s94 = sphi 0, %s80
      %s100 = sphi 0, %s102
      %s103 = sphi 0, %s100
      %s104 = sphi 0, %s103
      %s120 = sphi 0, %s104
      %s124 = sphi 0, %s124
      %s126 = sphi 0, %s124
      %s127 = sphi 0, %s126
      %s141 = sphi 0, %s127
    $region4: #{complex_wn_cell.3} parent=1 // loop_header_branch
      %14 = sbr.rel (%p12) target = $region8
    $region5: #{complex_wn_cell.3} parent=1 // loop_body
      %s16 = ssub.s32 %s11, 1
      %s17 = ssub.s32 %s11, 2
      %s18 = sadd.s32 %s11, 1
      %s19 = ssub.s32 %s11, %s18
      %p20 = scmp.eq.s32.totalorder %s19, 0
      %s22 = sadd.s32 %s21, 1
      %s23 = scalar_select %p20, %s21, %s22
      %p26 = pneg %p20
      %p27 = scmp.eq.s32.totalorder %s11, 1
      %p28 = por %p26, %p27
      %p29 = scmp.ne.s32.totalorder %s21, %s24
      %p30 = scmp.eq.s32.totalorder %s11, 0
      %p31 = por %p29, %p30
      %p32 = scmp.ne.s32.totalorder %s21, %s24
      %p33 = scmp.eq.s32.totalorder %s16, 1
      %p34 = por %p32, %p33
      %p35 = scmp.ne.s32.totalorder %s24, %s25
      %p36 = scmp.eq.s32.totalorder %s16, 0
      %p37 = por %p35, %p36
      %p38 = scmp.ne.s32.totalorder %s24, %s25
      %p39 = scmp.eq.s32.totalorder %s17, 1
      %p40 = por %p38, %p39
      %p42 = scmp.ne.s32.totalorder %s25, %s41
      %p43 = scmp.eq.s32.totalorder %s17, 0
      %p44 = por %p42, %p43
      %s45 = sadd.s32 %s11, 1
      %p46 = scmp.lt.s32.totalorder %s45, 1
      %s47 = scalar_select %p46, %s45, 1
      %s48 = sadd.s32 %s18, 1
      %p49 = scmp.lt.s32.totalorder %s48, 1
      %s50 = scalar_select %p49, %s48, 1
      %s51 = ssub.s32 %s47, %s50
      %p52 = scmp.eq.s32.totalorder %s51, 0
      %s54 = sadd.s32 %s53, 1
      %s55 = scalar_select %p52, %s53, %s54
      %p58 = pneg %p52
      %p59 = scmp.eq.s32.totalorder %s11, 1
      %p60 = por %p58, %p59
      %p61 = scmp.ne.s32.totalorder %s53, %s56
      %p62 = scmp.eq.s32.totalorder %s11, 0
      %p63 = por %p61, %p62
      %p64 = scmp.ne.s32.totalorder %s53, %s56
      %p65 = scmp.eq.s32.totalorder %s16, 1
      %p66 = por %p64, %p65
      %p67 = scmp.ne.s32.totalorder %s56, %s57
      %p68 = scmp.eq.s32.totalorder %s16, 0
      %p69 = por %p67, %p68
      %p70 = scmp.ne.s32.totalorder %s56, %s57
      %p71 = scmp.eq.s32.totalorder %s17, 1
      %p72 = por %p70, %p71
      %p74 = scmp.ne.s32.totalorder %s57, %s73
      %p75 = scmp.eq.s32.totalorder %s17, 0
      %p76 = por %p74, %p75
      %s78 = sadd.s32 %s77, 1
      %p81 = scmp.eq.s32.totalorder %s11, 1
      %p82 = scmp.ne.s32.totalorder %s77, %s79
      %p83 = scmp.eq.s32.totalorder %s11, 0
      %p84 = por %p82, %p83
      %p85 = scmp.ne.s32.totalorder %s77, %s79
      %p86 = scmp.eq.s32.totalorder %s16, 1
      %p87 = por %p85, %p86
      %p88 = scmp.ne.s32.totalorder %s79, %s80
      %p89 = scmp.eq.s32.totalorder %s16, 0
      %p90 = por %p88, %p89
      %p91 = scmp.ne.s32.totalorder %s79, %s80
      %p92 = scmp.eq.s32.totalorder %s17, 1
      %p93 = por %p91, %p92
      %p95 = scmp.ne.s32.totalorder %s80, %s94
      %p96 = scmp.eq.s32.totalorder %s17, 0
      %p97 = por %p95, %p96
      %s98 = ssub.s32 %s11, %s18
      %p99 = scmp.eq.s32.totalorder %s98, 0
      %s101 = sadd.s32 %s100, 1
      %s102 = scalar_select %p99, %s100, %s101
      %p105 = pneg %p99
      %p106 = scmp.eq.s32.totalorder %s11, 1
      %p107 = por %p105, %p106
      %p108 = scmp.ne.s32.totalorder %s100, %s103
      %p109 = scmp.eq.s32.totalorder %s11, 0
      %p110 = por %p108, %p109
      %p111 = scmp.ne.s32.totalorder %s100, %s103
      %p112 = scmp.eq.s32.totalorder %s16, 1
      %p113 = por %p111, %p112
      %p114 = scmp.ne.s32.totalorder %s103, %s104
      %p115 = scmp.eq.s32.totalorder %s16, 0
      %p116 = por %p114, %p115
      %p117 = scmp.ne.s32.totalorder %s103, %s104
      %p118 = scmp.eq.s32.totalorder %s17, 1
      %p119 = por %p117, %p118
      %p121 = scmp.ne.s32.totalorder %s104, %s120
      %p122 = scmp.eq.s32.totalorder %s17, 0
      %p123 = por %p121, %p122
      %s125 = sadd.s32 %s124, 1
      %p128 = scmp.eq.s32.totalorder %s11, 1
      %p129 = scmp.ne.s32.totalorder %s124, %s126
      %p130 = scmp.eq.s32.totalorder %s11, 0
      %p131 = por %p129, %p130
      %p132 = scmp.ne.s32.totalorder %s124, %s126
      %p133 = scmp.eq.s32.totalorder %s16, 1
      %p134 = por %p132, %p133
      %p135 = scmp.ne.s32.totalorder %s126, %s127
      %p136 = scmp.eq.s32.totalorder %s16, 0
      %p137 = por %p135, %p136
      %p138 = scmp.ne.s32.totalorder %s126, %s127
      %p139 = scmp.eq.s32.totalorder %s17, 1
      %p140 = por %p138, %p139
      %p142 = scmp.ne.s32.totalorder %s127, %s141
      %p143 = scmp.eq.s32.totalorder %s17, 0
      %p144 = por %p142, %p143
      %p145 = scmp.le.s32.totalorder 1, %s11
      %p146 = scmp.lt.s32.totalorder %s11, 3
      %p147 = pnand %p145, %p146
      %p148 = pneg %p147
      // Predicated region
      $region9: #{complex_wn_cell.3} parent=5 // pred_check
        _
      $region10: #{complex_wn_cell.3} parent=5 // pred_check_branch
        %150 = sbr.rel (%p147) target = $region12
      $region11: #{complex_wn_cell.3} parent=5 // pred_region
        %s151 = ssub.s32 %s11, 1
        // Predicated region
        $region13: #{complex_wn_cell.3} parent=11 // pred_check
          %p152 = pneg %p90
        $region14: #{complex_wn_cell.3} parent=11 // pred_check_branch
          %154 = sbr.rel (%p152) target = $region16
        $region15: #{complex_wn_cell.3} parent=11 // pred_region
          _
        $region16: #{complex_wn_cell.3} parent=11 // pred_fallthru
          _
      $region12: #{complex_wn_cell.3} parent=5 // pred_fallthru
        _
      %p155 = scmp.lt.s32.totalorder %s11, 2
      // Predicated region
      $region17: #{complex_wn_cell.3} parent=5 // pred_check
        %p156 = pneg %p155
      $region18: #{complex_wn_cell.3} parent=5 // pred_check_branch
        %158 = sbr.rel (%p156) target = $region20
      $region19: #{complex_wn_cell.3} parent=5 // pred_region
        // Predicated region
        $region21: #{complex_wn_cell.3} parent=19 // pred_check
          %p159 = pneg %p31
        $region22: #{complex_wn_cell.3} parent=19 // pred_check_branch
          %161 = sbr.rel (%p159) target = $region24
        $region23: #{complex_wn_cell.3} parent=19 // pred_region
          %s162 = sand.u32 %s21, 1
          %s163 = sand.u32 %s21, 1
          %s164 = smul.addr %s163, 16
          %s165 = scalar_lea.vmem [#allocation3], %s164
          %s166 = smul.addr %s11, 8
          %s167 = scalar_lea.vmem %s0, %s166
          // Predicated region
          $region25: #{complex_wn_cell.3} parent=23 // pred_check
            _
          $region26: #{complex_wn_cell.3} parent=23 // pred_check_branch
            %169 = sbr.rel (0) target = $region28
          $region27: #{complex_wn_cell.3} parent=23 // pred_region
            // Predicated region
            $region29: #{complex_wn_cell.3} parent=27 // pred_check
              _
            $region30: #{complex_wn_cell.3} parent=27 // pred_check_branch
              %171 = sbr.rel (0) target = $region32
            $region31: #{complex_wn_cell.3} parent=27 // pred_region
              // Predicated region
              $region44: #{complex_wn_cell.3} parent=31 // pred_check
                _
              $region45: #{complex_wn_cell.3} parent=31 // pred_check_branch
                %188 = sbr.rel (0) target = $region47
              $region46: #{complex_wn_cell.3} parent=31 // pred_region
                loop: start=0, step=1, limit=1
                $region48: #{complex_wn_cell.3} parent=46 // loop_pre_header
                  _
                $region49: #{complex_wn_cell.3} parent=46 // loop_header
                  %s190 = sphi 0, %s194
                  %p191 = scmp.ge.s32.totalorder %s190, 1
                  %s195 = sphi %s167, %s167
                  %s196 = sphi %s165, %s165
                $region50: #{complex_wn_cell.3} parent=46 // loop_header_branch
                  %193 = sbr.rel (%p191) target = $region54
                $region51: #{complex_wn_cell.3} parent=46 // loop_body
                  %v197 = vld [vmem:[%s195] sm:$0xff]
                  %198 = vst [vmem:[%s196] sm:$0xff] %v197
                  %v199 = vld [vmem:[%s195 + $0x10] sm:$0xff]
                  %200 = vst [vmem:[%s196 + $0x8] sm:$0xff] %v199
                $region52: #{complex_wn_cell.3} parent=46 // loop_footer
                  %s194 = sadd.s32 1, %s190
                $region53: #{complex_wn_cell.3} parent=46 // loop_footer_branch
                  %189 = sbr.rel target = $region49
                $region54: #{complex_wn_cell.3} parent=46 // loop_exit
                  _
              $region47: #{complex_wn_cell.3} parent=31 // pred_fallthru
                _
              // Predicated region
              $region55: #{complex_wn_cell.3} parent=31 // pred_check
                _
              $region56: #{complex_wn_cell.3} parent=31 // pred_check_branch
                %202 = sbr.rel target = $region58
              $region57: #{complex_wn_cell.3} parent=31 // pred_region
                _
              $region58: #{complex_wn_cell.3} parent=31 // pred_fallthru
                _
            $region32: #{complex_wn_cell.3} parent=27 // pred_fallthru
              _
            // Predicated region
            $region33: #{complex_wn_cell.3} parent=27 // pred_check
              _
            $region34: #{complex_wn_cell.3} parent=27 // pred_check_branch
              %173 = sbr.rel target = $region36
            $region35: #{complex_wn_cell.3} parent=27 // pred_region
              loop: start=0, step=1, limit=1
              $region37: #{complex_wn_cell.3} parent=35 // loop_pre_header
                _
              $region38: #{complex_wn_cell.3} parent=35 // loop_header
                %s176 = sphi 0, %s180
                %p177 = scmp.ge.s32.totalorder %s176, 1
                %s181 = sphi %s167, %s167
                %s182 = sphi %s165, %s165
              $region39: #{complex_wn_cell.3} parent=35 // loop_header_branch
                %179 = sbr.rel (%p177) target = $region43
              $region40: #{complex_wn_cell.3} parent=35 // loop_body
                %v183 = vld [vmem:[%s181] sm:$0xff]
                %184 = vst [vmem:[%s182] sm:$0xff] %v183
                %v185 = vld [vmem:[%s181 + $0x10] sm:$0xff]
                %186 = vst [vmem:[%s182 + $0x8] sm:$0xff] %v185
              $region41: #{complex_wn_cell.3} parent=35 // loop_footer
                %s180 = sadd.s32 1, %s176
              $region42: #{complex_wn_cell.3} parent=35 // loop_footer_branch
                %175 = sbr.rel target = $region38
              $region43: #{complex_wn_cell.3} parent=35 // loop_exit
                _
            $region36: #{complex_wn_cell.3} parent=27 // pred_fallthru
              _
          $region28: #{complex_wn_cell.3} parent=23 // pred_fallthru
            _
          %203 = vnop
        $region24: #{complex_wn_cell.3} parent=19 // pred_fallthru
          _
        // Predicated region
        $region59: #{complex_wn_cell.3} parent=19 // pred_check
          %p204 = pneg %p63
        $region60: #{complex_wn_cell.3} parent=19 // pred_check_branch
          %206 = sbr.rel (%p204) target = $region62
        $region61: #{complex_wn_cell.3} parent=19 // pred_region
          %s207 = sand.u32 %s53, 1
          %s208 = sand.u32 %s53, 1
          %s209 = smul.addr %s208, 16
          %s210 = scalar_lea.vmem [#allocation4], %s209
          %s211 = sadd.s32 %s11, 1
          %p212 = scmp.lt.s32.totalorder %s211, 1
          %s213 = scalar_select %p212, %s211, 1
          %s214 = smul.addr %s213, 8
          %s215 = scalar_lea.vmem %s1, %s214
          // Predicated region
          $region63: #{complex_wn_cell.3} parent=61 // pred_check
            _
          $region64: #{complex_wn_cell.3} parent=61 // pred_check_branch
            %217 = sbr.rel (0) target = $region66
          $region65: #{complex_wn_cell.3} parent=61 // pred_region
            // Predicated region
            $region67: #{complex_wn_cell.3} parent=65 // pred_check
              _
            $region68: #{complex_wn_cell.3} parent=65 // pred_check_branch
              %219 = sbr.rel (0) target = $region70
            $region69: #{complex_wn_cell.3} parent=65 // pred_region
              // Predicated region
              $region82: #{complex_wn_cell.3} parent=69 // pred_check
                _
              $region83: #{complex_wn_cell.3} parent=69 // pred_check_branch
                %236 = sbr.rel (0) target = $region85
              $region84: #{complex_wn_cell.3} parent=69 // pred_region
                loop: start=0, step=1, limit=1
                $region86: #{complex_wn_cell.3} parent=84 // loop_pre_header
                  _
                $region87: #{complex_wn_cell.3} parent=84 // loop_header
                  %s238 = sphi 0, %s242
                  %p239 = scmp.ge.s32.totalorder %s238, 1
                  %s243 = sphi %s215, %s215
                  %s244 = sphi %s210, %s210
                $region88: #{complex_wn_cell.3} parent=84 // loop_header_branch
                  %241 = sbr.rel (%p239) target = $region92
                $region89: #{complex_wn_cell.3} parent=84 // loop_body
                  %v245 = vld [vmem:[%s243] sm:$0xff]
                  %246 = vst [vmem:[%s244] sm:$0xff] %v245
                  %v247 = vld [vmem:[%s243 + $0x10] sm:$0xff]
                  %248 = vst [vmem:[%s244 + $0x8] sm:$0xff] %v247
                $region90: #{complex_wn_cell.3} parent=84 // loop_footer
                  %s242 = sadd.s32 1, %s238
                $region91: #{complex_wn_cell.3} parent=84 // loop_footer_branch
                  %237 = sbr.rel target = $region87
                $region92: #{complex_wn_cell.3} parent=84 // loop_exit
                  _
              $region85: #{complex_wn_cell.3} parent=69 // pred_fallthru
                _
              // Predicated region
              $region93: #{complex_wn_cell.3} parent=69 // pred_check
                _
              $region94: #{complex_wn_cell.3} parent=69 // pred_check_branch
                %250 = sbr.rel target = $region96
              $region95: #{complex_wn_cell.3} parent=69 // pred_region
                _
              $region96: #{complex_wn_cell.3} parent=69 // pred_fallthru
                _
            $region70: #{complex_wn_cell.3} parent=65 // pred_fallthru
              _
            // Predicated region
            $region71: #{complex_wn_cell.3} parent=65 // pred_check
              _
            $region72: #{complex_wn_cell.3} parent=65 // pred_check_branch
              %221 = sbr.rel target = $region74
            $region73: #{complex_wn_cell.3} parent=65 // pred_region
              loop: start=0, step=1, limit=1
              $region75: #{complex_wn_cell.3} parent=73 // loop_pre_header
                _
              $region76: #{complex_wn_cell.3} parent=73 // loop_header
                %s224 = sphi 0, %s228
                %p225 = scmp.ge.s32.totalorder %s224, 1
                %s229 = sphi %s215, %s215
                %s230 = sphi %s210, %s210
              $region77: #{complex_wn_cell.3} parent=73 // loop_header_branch
                %227 = sbr.rel (%p225) target = $region81
              $region78: #{complex_wn_cell.3} parent=73 // loop_body
                %v231 = vld [vmem:[%s229] sm:$0xff]
                %232 = vst [vmem:[%s230] sm:$0xff] %v231
                %v233 = vld [vmem:[%s229 + $0x10] sm:$0xff]
                %234 = vst [vmem:[%s230 + $0x8] sm:$0xff] %v233
              $region79: #{complex_wn_cell.3} parent=73 // loop_footer
                %s228 = sadd.s32 1, %s224
              $region80: #{complex_wn_cell.3} parent=73 // loop_footer_branch
                %223 = sbr.rel target = $region76
              $region81: #{complex_wn_cell.3} parent=73 // loop_exit
                _
            $region74: #{complex_wn_cell.3} parent=65 // pred_fallthru
              _
          $region66: #{complex_wn_cell.3} parent=61 // pred_fallthru
            _
          %251 = vnop
        $region62: #{complex_wn_cell.3} parent=19 // pred_fallthru
          _
      $region20: #{complex_wn_cell.3} parent=5 // pred_fallthru
        _
      %p252 = scmp.le.s32.totalorder 1, %s11
      %p253 = scmp.lt.s32.totalorder %s11, 3
      %p254 = pnand %p252, %p253
      %p255 = pneg %p254
      // Predicated region
      $region97: #{complex_wn_cell.3} parent=5 // pred_check
        _
      $region98: #{complex_wn_cell.3} parent=5 // pred_check_branch
        %257 = sbr.rel (%p254) target = $region100
      $region99: #{complex_wn_cell.3} parent=5 // pred_region
        %s258 = ssub.s32 %s11, 1
        %s259 = sand.u32 %s24, 1
        %s260 = sand.u32 %s24, 1
        %s261 = smul.addr %s260, 16
        %s262 = scalar_lea.vmem [#allocation3], %s261
        // Predicated region
        $region101: #{complex_wn_cell.3} parent=99 // pred_check
          %p263 = pneg %p37
        $region102: #{complex_wn_cell.3} parent=99 // pred_check_branch
          %265 = sbr.rel (%p263) target = $region104
        $region103: #{complex_wn_cell.3} parent=99 // pred_region
          _
        $region104: #{complex_wn_cell.3} parent=99 // pred_fallthru
          _
        %s266 = sand.u32 %s56, 1
        %s267 = sand.u32 %s56, 1
        %s268 = smul.addr %s267, 16
        %s269 = scalar_lea.vmem [#allocation4], %s268
        // Predicated region
        $region105: #{complex_wn_cell.3} parent=99 // pred_check
          %p270 = pneg %p69
        $region106: #{complex_wn_cell.3} parent=99 // pred_check_branch
          %272 = sbr.rel (%p270) target = $region108
        $region107: #{complex_wn_cell.3} parent=99 // pred_region
          _
        $region108: #{complex_wn_cell.3} parent=99 // pred_fallthru
          _
        %s273 = sand.u32 %s24, 1
        %s274 = sand.u32 %s24, 1
        %s275 = smul.addr %s274, 16
        %s276 = scalar_lea.vmem [#allocation3], %s275
        %p277 = pneg %p37
        %p278 = pneg %p34
        %s279 = sand.u32 %s56, 1
        %s280 = sand.u32 %s56, 1
        %s281 = smul.addr %s280, 16
        %s282 = scalar_lea.vmem [#allocation4], %s281
        %p283 = pneg %p69
        %p284 = pneg %p66
        %p285 = pneg %p90
        %p286 = pneg %p87
        %p287 = pneg %p116
        %p288 = pneg %p113
        %s289 = sand.u32 %s103, 1
        %s290 = sand.u32 %s103, 1
        %s291 = smul.addr %s290, 8
        %s292 = scalar_lea.vmem [#allocation5], %s291
        %p293 = pneg %p137
        %p294 = pneg %p134
        %s295 = sadd.s32 %s16, 1
        %p296 = scmp.lt.s32.totalorder %s295, 1
        %s297 = scalar_select %p296, %s295, 1
        %v299 = vld [vmem:[%s262] sm:$0xff]
        %v300 = vld [vmem:[%s262 + $0x8] sm:$0xff]
        %v301 = vpack.c.bf16 %v299, %v299
        %v302 = vpack.c.bf16 %v300, %v300
        %v303 = vld [vmem:[%s269] sm:$0x1]
        %v304 = vld [vmem:[%s269 + $0x8] sm:$0x1]
        %v305 = vpack.c.bf16 %v303, %v303
        %v306 = vpack.c.bf16 %v304, %v304
        %v309 = vunpack.c.l.b16 %v301
        %v310 = vunpack.c.l.b16 %v302
        %v311 = vpack.c.b16 %v309, %v309
        %v312 = vpack.c.b16 %v310, %v310
        %v314 = vshrl.u32 %v311, 16
        %v316 = vrot.slane %v314, 7
        %v317 = vshll.u32 %v311, 16
        %v319 = vor.u32 %v316, %v317
        %v320 = vrot.slane %v316, 4
        %v322 = vshrl.u32 %v312, 16
        %v324 = vrot.slane %v322, 7
        %v325 = vshll.u32 %v312, 16
        %v327 = vor.u32 %v324, %v325
        %v328 = vrot.slane %v324, 4
        %vm333 = vcmask 125952
        %vm334 = vsmask.f32 7938
        %vm335 = vmand %vm333, %vm334
        %v336 = vld [vmem:[#allocation2] sm:$0xf]
        %v337 = vsel %vm335, %v319, %v336
        %338 = vst [vmem:[#allocation2] sm:$0xf] %v337
        %vm339 = vcmask 122880
        %vm340 = vsmask.f32 256
        %vm341 = vmand %vm339, %vm340
        %v342 = vld [vmem:[#allocation2 + $0x4] sm:$0x1]
        %v343 = vsel %vm341, %v320, %v342
        %344 = vst [vmem:[#allocation2 + $0x4] sm:$0x1] %v343
        %v345 = vld [vmem:[#allocation2 + $0x8] sm:$0xf]
        %v346 = vsel %vm335, %v327, %v345
        %347 = vst [vmem:[#allocation2 + $0x8] sm:$0xf] %v346
        %v348 = vld [vmem:[#allocation2 + $0xc] sm:$0x1]
        %v349 = vsel %vm341, %v328, %v348
        %350 = vst [vmem:[#allocation2 + $0xc] sm:$0x1] %v349
        %p351 = scmp.eq.s32.totalorder %s16, 0
        // Predicated region
        $region109: #{complex_wn_cell.3} parent=99 // pred_check
          %p352 = pneg %p351
        $region110: #{complex_wn_cell.3} parent=99 // pred_check_branch
          %354 = sbr.rel (%p352) target = $region112
        $region111: #{complex_wn_cell.3} parent=99 // pred_region
          %v355 = vld [vmem:[#allocation2] sm:$0x1]
          %v356 = vsel %vm341, 0, %v355
          %357 = vst [vmem:[#allocation2] sm:$0x1] %v356
          %v358 = vld [vmem:[#allocation2 + $0x8] sm:$0x1]
          %v359 = vsel %vm341, 0, %v358
          %360 = vst [vmem:[#allocation2 + $0x8] sm:$0x1] %v359
        $region112: #{complex_wn_cell.3} parent=99 // pred_fallthru
          _
        %p361 = scmp.eq.s32.totalorder %s16, 1
        %s362 = scalar_select %p361, 1, 0
        %v363 = vstv %s362
        %vm364 = vcmp.eq.s32.totalorder %v363, 1
        %v365 = vsel %vm364, 0, %v305
        %v366 = vsel %vm364, 0, %v306
        %v369 = vunpack.c.l.b16 %v365
        %v370 = vunpack.c.l.b16 %v366
        %v371 = vpack.c.b16 %v369, %v369
        %v372 = vpack.c.b16 %v370, %v370
        %v374 = vshll.u32 %v371, 16
        %v377 = vshll.u32 %v372, 16
        %vm381 = vmand %vm339, %vm334
        %v382 = vld [vmem:[#allocation2 + $0x4] sm:$0x1]
        %v383 = vsel %vm381, %v374, %v382
        %384 = vst [vmem:[#allocation2 + $0x4] sm:$0x1] %v383
        %v385 = vld [vmem:[#allocation2 + $0xc] sm:$0x1]
        %v386 = vsel %vm381, %v377, %v385
        %387 = vst [vmem:[#allocation2 + $0xc] sm:$0x1] %v386
        %v388 = vld [vmem:[#allocation2] sm:$0xf]
        %v389 = vld [vmem:[#allocation2 + $0x8] sm:$0xf]
        %v390 = vld [vmem:[#allocation2 + $0x4] sm:$0x1]
        %v391 = vld [vmem:[#allocation2 + $0xc] sm:$0x1]
        %v392 = vld [vmem:[#allocation2] sm:$0xe]
        %v393 = vld [vmem:[#allocation2 + $0x8] sm:$0xe]
        %v398 = vunpack.c.l.b16 %v388
        %v399 = vunpack.c.l.b16 %v390
        %v400 = vunpack.c.l.b16 %v389
        %v401 = vunpack.c.l.b16 %v391
        %v402 = vpack.c.b16 %v399, %v398
        %v403 = vpack.c.b16 %v401, %v400
        %v405 = vshrl.u32 %v402, 16
        %v407 = vshll.u32 %v402, 16
        %v409 = vrot.slane %v407, 1
        %v410 = vor.u32 %v405, %v409
        %v412 = vshrl.u32 %v403, 16
        %v414 = vshll.u32 %v403, 16
        %v416 = vrot.slane %v414, 1
        %v417 = vor.u32 %v412, %v416
        %418 = vrot.lane.b32.xlu0 %v410, 16
        %v419 = vpop.permute.xlu0 %418
        %420 = vrot.lane.b32.xlu0 %v417, 16
        %v421 = vpop.permute.xlu0 %420
        %v424 = vunpack.c.l.b16 %v392
        %v425 = vunpack.c.l.b16 %v393
        %v426 = vpack.c.b16 %v399, %v424
        %v427 = vpack.c.b16 %v401, %v425
        %v428 = vrot.slane %v426, 1
        %v429 = vrot.slane %v427, 1
        %430 = vrot.lane.b32.xlu0 %v428, 32
        %v431 = vpop.permute.xlu0 %430
        %432 = vrot.lane.b32.xlu0 %v429, 32
        %v433 = vpop.permute.xlu0 %432
        %vm434 = vcmask 130048
        %v437 = vsel %vm434, %v388, %v419
        %v440 = vsel %vm434, %v389, %v421
        %vm441 = vcmask 261120
        %v443 = vsel %vm441, %v437, %v431
        %v445 = vsel %vm441, %v440, %v433
        %v446 = vld [vmem:[%s2] sm:$0xf]
        %v447 = vld [vmem:[%s2 + $0x4] sm:$0xf]
        %v448 = vld [vmem:[%s2 + $0x8] sm:$0xf]
        %v449 = vld [vmem:[%s2 + $0xc] sm:$0xf]
        %v450 = vld [vmem:[%s2 + $0x10] sm:$0xf]
        %v451 = vld [vmem:[%s2 + $0x14] sm:$0xf]
        %v454 = vunpack.c.l.b16 %v443
        %v455 = vunpack.c.l.b16 %v445
        %v456 = vpack.c.b16 %v455, %v454
        %v463 = vunpack.c.l.b16 %v446
        %v464 = vunpack.c.l.b16 %v447
        %v465 = vunpack.c.l.b16 %v448
        %v466 = vunpack.c.l.b16 %v449
        %v467 = vunpack.c.l.b16 %v450
        %v468 = vunpack.c.l.b16 %v451
        %v469 = vpack.c.b16 %v464, %v463
        %v470 = vpack.c.b16 %v466, %v465
        %v471 = vpack.c.b16 %v468, %v467
        %vm475 = vcmask 392192
        %v477 = vsel %vm475, %v456, 0
        %479 = vmatprep.subr.bf16.mxu0 0
        %480 = vmatpush1.bf16.msra.mxu0 %v469
        %481 = vmatprep.subr.bf16.mxu0 0
        %482 = vmatpush1.bf16.msra.mxu0 %v470
        %483 = vmatprep.subr.bf16.mxu0 0
        %484 = vmatpush1.bf16.msra.mxu0 %v471
        %485 = vmatprep.subr.bf16.mxu0 0
        %486 = vmatpush1.bf16.msra.mxu0 0
        %487 = vmatprep.subr.bf16.mxu0 0
        %488 = vmatpush1.bf16.msra.mxu0 0
        %489 = vmatprep.subr.bf16.mxu0 0
        %490 = vmatpush1.bf16.msra.mxu0 0
        %491 = vmatprep.subr.bf16.mxu0 0
        %492 = vmatpush1.bf16.msra.mxu0 0
        %493 = vmatprep.subr.bf16.mxu0 0
        %494 = vmatpush1.bf16.msra.mxu0 0
        %495 = vmatprep.subr.bf16.mxu0 0
        %496 = vmatpush1.bf16.msra.mxu0 0
        %497 = vmatprep.subr.bf16.mxu0 0
        %498 = vmatpush1.bf16.msra.mxu0 0
        %499 = vmatprep.subr.bf16.mxu0 0
        %500 = vmatpush1.bf16.msra.mxu0 0
        %501 = vmatprep.subr.bf16.mxu0 0
        %502 = vmatpush1.bf16.msra.mxu0 0
        %503 = vmatprep.subr.bf16.mxu0 0
        %504 = vmatpush1.bf16.msra.mxu0 0
        %505 = vmatprep.subr.bf16.mxu0 0
        %506 = vmatpush1.bf16.msra.mxu0 0
        %507 = vmatprep.subr.bf16.mxu0 0
        %508 = vmatpush1.bf16.msra.mxu0 0
        %509 = vmatprep.subr.bf16.mxu0 0
        %510 = vmatpush1.bf16.msra.mxu0 0
        %511 = vmatprep.mubr.bf16.mxu0 0
        %512 = vmatmul.mubr.bf16.gmra.mrb[0].mxu0 %v477
        %v513 = vpop.f32.mrb[0].mxu0
        %v514 = vadd.f32 0.0, %v513
        %v515 = vpop.f32.mrb[0].mxu0
        %v516 = vpop.f32.mrb[0].mxu0
        %v517 = vadd.f32 0.0, %v516
        %v518 = vpop.f32.mrb[0].mxu0
        %519 = vdwg.mxu0
        %v520 = vpack.c.bf16 %v514, %v514
        %v521 = vpack.c.bf16 %v517, %v517
        %vm522 = vcmask 257024
        %523 = vst.msk [vmem:[%s292] sm:$0xf] %vm522, %v520
        %524 = vst.msk [vmem:[%s292 + $0x4] sm:$0xf] %vm522, %v521
        %v525 = vsel %vm441, %v514, 0.0
        %v526 = vsel %vm441, %v517, 0.0
        %v527 = vadd.f32 %v525, %v526
        %v528 = vrot.slane %v527, 4
        %v529 = vadd.f32 %v527, %v528
        %v530 = vrot.slane %v529, 2
        %v531 = vadd.f32 %v529, %v530
        %v532 = vrot.slane %v531, 1
        %v533 = vadd.f32 %v531, %v532
        %v534 = vmul.f32 %v514, %v514
        %v535 = vmul.f32 %v517, %v517
        %v536 = vsel %vm441, %v534, 0.0
        %v537 = vsel %vm441, %v535, 0.0
        %v538 = vadd.f32 %v536, %v537
        %v539 = vrot.slane %v538, 4
        %v540 = vadd.f32 %v538, %v539
        %v541 = vrot.slane %v540, 2
        %v542 = vadd.f32 %v540, %v541
        %v543 = vrot.slane %v542, 1
        %v544 = vadd.f32 %v542, %v543
        %547 = vrot.lane.b32.xlu0 %v514, 112
        %v548 = vpop.permute.xlu0 %547
        %549 = vrot.lane.b32.xlu0 %v517, 112
        %v550 = vpop.permute.xlu0 %549
        %v553 = vmul.f32 %v514, %v548
        %v554 = vmul.f32 %v517, %v550
        %v555 = vsel %vm434, %v553, 0.0
        %v556 = vsel %vm434, %v554, 0.0
        %v557 = vadd.f32 %v555, %v556
        %v558 = vrot.slane %v557, 4
        %v559 = vadd.f32 %v557, %v558
        %v560 = vrot.slane %v559, 2
        %v561 = vadd.f32 %v559, %v560
        %v562 = vrot.slane %v561, 1
        %v563 = vadd.f32 %v561, %v562
        %v564 = vsel %vm434, %v563, 0.0
        %v566 = vrot.slane %v564, 6
        %vm568 = vcmask 1040384
        %v569 = vsel %vm568, %v533, %v544
        %vm570 = vcmask 1041408
        %v571 = vsel %vm570, %v569, %v566
        %vm572 = vcmask 1042432
        %v573 = vsel %vm572, %v571, 0.0
        // Predicated region
        $region113: #{complex_wn_cell.3} parent=99 // pred_check
          %p574 = pneg %p351
        $region114: #{complex_wn_cell.3} parent=99 // pred_check_branch
          %576 = sbr.rel (%p574) target = $region116
        $region115: #{complex_wn_cell.3} parent=99 // pred_region
          %577 = vst.msk [vmem:[%s4] sm:$0xff] %vm441, 0.0
        $region116: #{complex_wn_cell.3} parent=99 // pred_fallthru
          _
        %v578 = vld [vmem:[%s4] sm:$0xff]
        %v579 = vadd.f32 %v578, %v573
        %580 = vst.msk [vmem:[%s4] sm:$0xff] %vm441, %v579
        %v581 = vld [vmem:[#allocation2 + $0x4] sm:$0x1]
        %v582 = vld [vmem:[#allocation2 + $0xc] sm:$0x1]
        %v583 = vld [vmem:[#allocation2] sm:$0x1]
        %v584 = vsel %vm341, %v581, %v583
        %585 = vst [vmem:[#allocation2] sm:$0x1] %v584
        %v586 = vld [vmem:[#allocation2 + $0x8] sm:$0x1]
        %v587 = vsel %vm341, %v582, %v586
        %588 = vst [vmem:[#allocation2 + $0x8] sm:$0x1] %v587
        %s589 = sand.u32 %s103, 1
        %s590 = sand.u32 %s103, 1
        %s591 = smul.addr %s590, 8
        %s592 = scalar_lea.vmem [#allocation5], %s591
        // Predicated region
        $region117: #{complex_wn_cell.3} parent=99 // pred_check
          %p593 = pneg %p113
        $region118: #{complex_wn_cell.3} parent=99 // pred_check_branch
          %595 = sbr.rel (%p593) target = $region120
        $region119: #{complex_wn_cell.3} parent=99 // pred_region
          %s596 = smul.addr %s16, 4
          %s597 = scalar_lea.vmem %s3, %s596
          // Predicated region
          $region121: #{complex_wn_cell.3} parent=119 // pred_check
            _
          $region122: #{complex_wn_cell.3} parent=119 // pred_check_branch
            %599 = sbr.rel (0) target = $region124
          $region123: #{complex_wn_cell.3} parent=119 // pred_region
            // Predicated region
            $region125: #{complex_wn_cell.3} parent=123 // pred_check
              _
            $region126: #{complex_wn_cell.3} parent=123 // pred_check_branch
              %601 = sbr.rel target = $region128
            $region127: #{complex_wn_cell.3} parent=123 // pred_region
              // Predicated region
              $region140: #{complex_wn_cell.3} parent=127 // pred_check
                _
              $region141: #{complex_wn_cell.3} parent=127 // pred_check_branch
                %618 = sbr.rel (0) target = $region143
              $region142: #{complex_wn_cell.3} parent=127 // pred_region
                loop: start=0, step=1, limit=1
                $region144: #{complex_wn_cell.3} parent=142 // loop_pre_header
                  _
                $region145: #{complex_wn_cell.3} parent=142 // loop_header
                  %s620 = sphi 0, %s624
                  %p621 = scmp.ge.s32.totalorder %s620, 1
                  %s625 = sphi %s592, %s592
                  %s626 = sphi %s597, %s597
                $region146: #{complex_wn_cell.3} parent=142 // loop_header_branch
                  %623 = sbr.rel (%p621) target = $region150
                $region147: #{complex_wn_cell.3} parent=142 // loop_body
                  _
                $region148: #{complex_wn_cell.3} parent=142 // loop_footer
                  %s624 = sadd.s32 1, %s620
                $region149: #{complex_wn_cell.3} parent=142 // loop_footer_branch
                  %619 = sbr.rel target = $region145
                $region150: #{complex_wn_cell.3} parent=142 // loop_exit
                  _
                loop: start=0, step=1, limit=1
                $region151: #{complex_wn_cell.3} parent=142 // loop_pre_header
                  _
                $region152: #{complex_wn_cell.3} parent=142 // loop_header
                  %s629 = sphi 0, %s633
                  %p630 = scmp.ge.s32.totalorder %s629, 1
                  %s634 = sphi %s592, %s592
                  %s635 = sphi %s597, %s597
                $region153: #{complex_wn_cell.3} parent=142 // loop_header_branch
                  %632 = sbr.rel (%p630) target = $region157
                $region154: #{complex_wn_cell.3} parent=142 // loop_body
                  %v636 = vld [vmem:[%s634] sm:$0xf]
                  %637 = vst [vmem:[%s635] sm:$0xf] %v636
                  %v638 = vld [vmem:[%s634 + $0x4] sm:$0xf]
                  %639 = vst [vmem:[%s635 + $0x8] sm:$0xf] %v638
                $region155: #{complex_wn_cell.3} parent=142 // loop_footer
                  %s633 = sadd.s32 1, %s629
                $region156: #{complex_wn_cell.3} parent=142 // loop_footer_branch
                  %628 = sbr.rel target = $region152
                $region157: #{complex_wn_cell.3} parent=142 // loop_exit
                  _
              $region143: #{complex_wn_cell.3} parent=127 // pred_fallthru
                _
            $region128: #{complex_wn_cell.3} parent=123 // pred_fallthru
              _
            // Predicated region
            $region129: #{complex_wn_cell.3} parent=123 // pred_check
              _
            $region130: #{complex_wn_cell.3} parent=123 // pred_check_branch
              %603 = sbr.rel (0) target = $region132
            $region131: #{complex_wn_cell.3} parent=123 // pred_region
              loop: start=0, step=1, limit=1
              $region133: #{complex_wn_cell.3} parent=131 // loop_pre_header
                _
              $region134: #{complex_wn_cell.3} parent=131 // loop_header
                %s606 = sphi 0, %s610
                %p607 = scmp.ge.s32.totalorder %s606, 1
                %s611 = sphi %s592, %s592
                %s612 = sphi %s597, %s597
              $region135: #{complex_wn_cell.3} parent=131 // loop_header_branch
                %609 = sbr.rel (%p607) target = $region139
              $region136: #{complex_wn_cell.3} parent=131 // loop_body
                %v613 = vld [vmem:[%s611] sm:$0xf]
                %614 = vst [vmem:[%s612] sm:$0xf] %v613
                %v615 = vld [vmem:[%s611 + $0x4] sm:$0xf]
                %616 = vst [vmem:[%s612 + $0x8] sm:$0xf] %v615
              $region137: #{complex_wn_cell.3} parent=131 // loop_footer
                %s610 = sadd.s32 1, %s606
              $region138: #{complex_wn_cell.3} parent=131 // loop_footer_branch
                %605 = sbr.rel target = $region134
              $region139: #{complex_wn_cell.3} parent=131 // loop_exit
                _
            $region132: #{complex_wn_cell.3} parent=123 // pred_fallthru
              _
          $region124: #{complex_wn_cell.3} parent=119 // pred_fallthru
            _
          %640 = vnop
        $region120: #{complex_wn_cell.3} parent=99 // pred_fallthru
          _
        // Predicated region
        $region158: #{complex_wn_cell.3} parent=99 // pred_check
          %p641 = pneg %p134
        $region159: #{complex_wn_cell.3} parent=99 // pred_check_branch
          %643 = sbr.rel (%p641) target = $region161
        $region160: #{complex_wn_cell.3} parent=99 // pred_region
          _
        $region161: #{complex_wn_cell.3} parent=99 // pred_fallthru
          _
        // Predicated region
        $region162: #{complex_wn_cell.3} parent=99 // pred_check
          %p644 = pneg %p134
        $region163: #{complex_wn_cell.3} parent=99 // pred_check_branch
          %646 = sbr.rel (%p644) target = $region165
        $region164: #{complex_wn_cell.3} parent=99 // pred_region
          _
        $region165: #{complex_wn_cell.3} parent=99 // pred_fallthru
          _
      $region100: #{complex_wn_cell.3} parent=5 // pred_fallthru
        _
      %p647 = scmp.le.s32.totalorder 2, %s11
      // Predicated region
      $region166: #{complex_wn_cell.3} parent=5 // pred_check
        %p648 = pneg %p647
      $region167: #{complex_wn_cell.3} parent=5 // pred_check_branch
        %650 = sbr.rel (%p648) target = $region169
      $region168: #{complex_wn_cell.3} parent=5 // pred_region
        %s651 = ssub.s32 %s11, 2
        // Predicated region
        $region170: #{complex_wn_cell.3} parent=168 // pred_check
          %p652 = pneg %p119
        $region171: #{complex_wn_cell.3} parent=168 // pred_check_branch
          %654 = sbr.rel (%p652) target = $region173
        $region172: #{complex_wn_cell.3} parent=168 // pred_region
          %s655 = sand.u32 %s104, 1
          %s656 = sand.u32 %s104, 1
          %s657 = smul.addr %s656, 8
          %s658 = scalar_lea.vmem [#allocation5], %s657
        $region173: #{complex_wn_cell.3} parent=168 // pred_fallthru
          _
      $region169: #{complex_wn_cell.3} parent=5 // pred_fallthru
        _
    $region6: #{complex_wn_cell.3} parent=1 // loop_footer
      %s15 = sadd.s32 1, %s11
    $region7: #{complex_wn_cell.3} parent=1 // loop_footer_branch
      %10 = sbr.rel target = $region3
    $region8: #{complex_wn_cell.3} parent=1 // loop_exit
      _

</llo_original>
